<compile_context>
chip_gen: v6e
topology: v6e:2x2x1
jax: 0.10.0
libtpu: 0.0.40
codegen_flags: <defaults>
</compile_context>

<pallas_src>
import functools

import jax
import jax.numpy as jnp
from jax import lax
from jax.experimental import pallas as pl
from jax.experimental.pallas import tpu as pltpu


def _down_block_kernel(x_ref, w1_ref, w2_ref, t_ref,
                       out_ref, skip_ref, xp1_ref, xp2_ref,
                       *, H, W, Cin, Cmid, Cout, D0, mxu_dtype):
    """One batch element per grid step.

    x_ref    : (1, Cin, H*W)        unpadded input, spatial flattened on lanes
    w1_ref   : (Cmid, 9*Cin)        conv1 weights (BN scale folded), col = k*Cin+c
    w2_ref   : (Cout, 9*Cmid)       conv2 weights (BN scale folded)
    t_ref    : (Cmid+Cout, 1)       stacked folded BN shifts (conv bias included)
    out_ref  : (1, Cout, (H//2)*(W//2))  pooled output (flat)
    skip_ref : (1, Cout, H*W)            skip output (flat, lane dense)
    xp1/xp2  : (C, FL)              persistent padded flat scratch; data at [D0, D0+H*W)
    """
    HW = H * W

    # ---- hoisted loop invariants --------------------------------------------
    # column masks killing horizontal wrap-around of the flat (C, H*W) layout
    col = lax.broadcasted_iota(jnp.int32, (1, HW), 1) % W
    mask_l = (col > 0).astype(jnp.float32)        # tap reads column w-1
    mask_r = (col < W - 1).astype(jnp.float32)    # tap reads column w+1
    t1 = t_ref[0:Cmid]                            # (Cmid, 1)
    t2 = t_ref[Cmid:Cmid + Cout]                  # (Cout, 1)

    # ---- refresh only the zero halo strips the conv taps actually read -------
    xp1_ref[:, pl.ds(D0 - W - 1, W + 1)] = jnp.zeros((Cin, W + 1), jnp.float32)
    xp1_ref[:, pl.ds(D0 + HW, W + 1)] = jnp.zeros((Cin, W + 1), jnp.float32)
    xp2_ref[:, pl.ds(D0 - W - 1, W + 1)] = jnp.zeros((Cmid, W + 1), jnp.float32)
    xp2_ref[:, pl.ds(D0 + HW, W + 1)] = jnp.zeros((Cmid, W + 1), jnp.float32)

    # place the un-padded input into the interior of the padded scratch
    xp1_ref[:, pl.ds(D0, HW)] = x_ref[0]

    def conv3x3(src_ref, w_ref):
        # im2col: 9 shifted (+wrap-masked) whole-image slices stacked into a
        # (9*c_in, HW) slab -> one MXU matmul with K = 9*c_in (f32 accumulate).
        taps = []
        for dh in range(3):
            for dw in range(3):
                start = D0 + (dh - 1) * W + (dw - 1)   # static lane offset
                xs = src_ref[:, pl.ds(start, HW)]      # (c_in, HW)
                if dw == 0:
                    xs = xs * mask_l
                elif dw == 2:
                    xs = xs * mask_r
                taps.append(xs)
        im = jnp.concatenate(taps, axis=0).astype(mxu_dtype)   # (9*c_in, HW)
        return jnp.dot(w_ref[...], im, preferred_element_type=jnp.float32)

    # ---- conv1 (3x3, pad 1, BN scale folded) + shift + ReLU -------------------
    h1 = jnp.maximum(conv3x3(xp1_ref, w1_ref) + t1, 0.0)
    xp2_ref[:, pl.ds(D0, HW)] = h1

    # ---- conv2 + shift + ReLU -> skip (lane-dense store) ----------------------
    skip_v = jnp.maximum(conv3x3(xp2_ref, w2_ref) + t2, 0.0)
    skip_ref[0] = skip_v.astype(skip_ref.dtype)

    # ---- MaxPool2d(2) directly on the register value --------------------------
    hm = jnp.max(skip_v.reshape(Cout, HW // 2, 2), axis=-1)   # horizontal pairs
    rows = hm.reshape(Cout, H // 2, W)                        # [even row | odd row]
    pooled = jnp.maximum(rows[:, :, : W // 2], rows[:, :, W // 2:])
    out_ref[0] = pooled.reshape(Cout, (H // 2) * (W // 2)).astype(out_ref.dtype)


def down_block(x, W1, b1, W2, b2, g1, be1, m1, v1, g2, be2, m2, v2,
               *, eps=1e-5, mxu_dtype=jnp.float32):
    """DownBlock forward (inference-mode BatchNorm, residual=False).

    x: (N, Cin, H, W) float32 NCHW; conv weights in PyTorch OIHW layout.
    Returns (out, skip): out (N, Cout, H//2, W//2), skip (N, Cout, H, W).
    """
    N, Cin, H, W = x.shape
    Cmid = W1.shape[0]
    Cout = W2.shape[0]
    assert W1.shape == (Cmid, Cin, 3, 3) and W2.shape == (Cout, Cmid, 3, 3)
    assert H % 2 == 0 and W % 2 == 0, "MaxPool2d(2) needs even spatial dims"
    HW = H * W

    # ---- host-side parameter folding / repacking ------------------------------
    sc1 = g1 / jnp.sqrt(v1 + eps)               # folded BN scale (per out channel)
    sc2 = g2 / jnp.sqrt(v2 + eps)
    t1 = (b1 - m1) * sc1 + be1                  # folded shift (conv bias included)
    t2 = (b2 - m2) * sc2 + be2
    # OIHW -> (C_out, 9*C_in) with column index k*C_in + c, k = dh*3 + dw,
    # BN scale folded into the rows.
    w1m = (jnp.transpose(W1, (0, 2, 3, 1)).reshape(Cmid, 9 * Cin)
           * sc1[:, None]).astype(mxu_dtype)
    w2m = (jnp.transpose(W2, (0, 2, 3, 1)).reshape(Cout, 9 * Cmid)
           * sc2[:, None]).astype(mxu_dtype)
    t_stack = jnp.concatenate([t1, t2]).reshape(Cmid + Cout, 1).astype(jnp.float32)

    # padded flat scratch geometry: data starts at a lane-aligned offset D0,
    # guard/halo regions live on both sides, total length FL is lane-dense.
    D0 = ((W + 1 + 127) // 128) * 128
    FL = ((D0 + HW + W + 1 + 127) // 128) * 128

    xf = x.reshape(N, Cin, HW)

    kernel = functools.partial(_down_block_kernel, H=H, W=W, Cin=Cin,
                               Cmid=Cmid, Cout=Cout, D0=D0, mxu_dtype=mxu_dtype)

    flops = 2 * N * HW * 9 * (Cmid * Cin + Cout * Cmid)
    bytes_accessed = (4 * (xf.size + N * Cout * HW + N * Cout * (HW // 4)
                           + t_stack.size)
                      + w1m.size * w1m.dtype.itemsize
                      + w2m.size * w2m.dtype.itemsize)

    out_f, skip_f = pl.pallas_call(
        kernel,
        out_shape=(jax.ShapeDtypeStruct((N, Cout, HW // 4), jnp.float32),
                   jax.ShapeDtypeStruct((N, Cout, HW), jnp.float32)),
        grid=(N,),
        in_specs=[
            pl.BlockSpec((1, Cin, HW), lambda n: (n, 0, 0)),
            pl.BlockSpec((Cmid, 9 * Cin), lambda n: (0, 0)),
            pl.BlockSpec((Cout, 9 * Cmid), lambda n: (0, 0)),
            pl.BlockSpec((Cmid + Cout, 1), lambda n: (0, 0)),
        ],
        out_specs=(
            pl.BlockSpec((1, Cout, HW // 4), lambda n: (n, 0, 0)),
            pl.BlockSpec((1, Cout, HW), lambda n: (n, 0, 0)),
        ),
        scratch_shapes=[
            pltpu.VMEM((Cin, FL), jnp.float32),    # padded input scratch
            pltpu.VMEM((Cmid, FL), jnp.float32),   # padded hidden-activation scratch
        ],
        compiler_params=pltpu.CompilerParams(dimension_semantics=("parallel",)),
        cost_estimate=pl.CostEstimate(flops=int(flops), transcendentals=0,
                                      bytes_accessed=int(bytes_accessed)),
    )(xf, w1m, w2m, t_stack)

    out = out_f.reshape(N, Cout, H // 2, W // 2)
    skip = skip_f.reshape(N, Cout, H, W)
    return out, skip


if __name__ == "__main__":
    N, H, W = 2, 16, 16
    Cin, Cout = 4, 8
    Cmid = Cin            # DoubleConv channels = [in, in, out]
    eps = 1e-5

    keys = jax.random.split(jax.random.PRNGKey(0), 13)
    x = jax.random.normal(keys[0], (N, Cin, H, W), jnp.float32)   # NCHW

    # conv params (PyTorch OIHW layout)
    W1 = jax.random.normal(keys[1], (Cmid, Cin, 3, 3), jnp.float32) * 0.2
    b1 = jax.random.normal(keys[2], (Cmid,), jnp.float32) * 0.1
    W2 = jax.random.normal(keys[3], (Cout, Cmid, 3, 3), jnp.float32) * 0.2
    b2 = jax.random.normal(keys[4], (Cout,), jnp.float32) * 0.1

    # BatchNorm params (inference mode)
    g1 = 1.0 + 0.1 * jax.random.normal(keys[5], (Cmid,), jnp.float32)
    be1 = 0.1 * jax.random.normal(keys[6], (Cmid,), jnp.float32)
    m1 = 0.1 * jax.random.normal(keys[7], (Cmid,), jnp.float32)
    v1 = jax.random.uniform(keys[8], (Cmid,), jnp.float32, minval=0.5, maxval=1.5)
    g2 = 1.0 + 0.1 * jax.random.normal(keys[9], (Cout,), jnp.float32)
    be2 = 0.1 * jax.random.normal(keys[10], (Cout,), jnp.float32)
    m2 = 0.1 * jax.random.normal(keys[11], (Cout,), jnp.float32)
    v2 = jax.random.uniform(keys[12], (Cout,), jnp.float32, minval=0.5, maxval=1.5)

    params = (W1, b1, W2, b2, g1, be1, m1, v1, g2, be2, m2, v2)

    # ---- f32 MXU path (tight check) -------------------------------------------
    out, skip = down_block(x, *params, eps=eps, mxu_dtype=jnp.float32)
    out = jax.block_until_ready(out)
    skip = jax.block_until_ready(skip)

    # ---- pure-JAX reference (same math, eval-mode BN, NCHW) -------------------
    def conv(xx, ww, bb):
        return lax.conv_general_dilated(
            xx, ww, (1, 1), "SAME",
            dimension_numbers=("NCHW", "OIHW", "NCHW")) + bb.reshape(1, -1, 1, 1)

    def bn(xx, g, b, m, v):
        sh = (1, -1, 1, 1)
        return ((xx - m.reshape(sh)) / jnp.sqrt(v.reshape(sh) + eps)
                * g.reshape(sh) + b.reshape(sh))

    h1 = jax.nn.relu(bn(conv(x, W1, b1), g1, be1, m1, v1))
    ref_skip = jax.nn.relu(bn(conv(h1, W2, b2), g2, be2, m2, v2))
    ref_out = lax.reduce_window(ref_skip, -jnp.inf, lax.max,
                                (1, 1, 2, 2), (1, 1, 2, 2), "VALID")

    assert out.shape == (N, Cout, H // 2, W // 2)
    assert skip.shape == (N, Cout, H, W)
    assert jnp.allclose(skip, ref_skip, atol=1e-4, rtol=1e-4)
    assert jnp.allclose(out, ref_out, atol=1e-4, rtol=1e-4)

    # ---- bf16 MXU-operand path (v6e/v7x fast path; f32 accumulation) ----------
    out_bf, skip_bf = down_block(x, *params, eps=eps, mxu_dtype=jnp.bfloat16)
    out_bf = jax.block_until_ready(out_bf)
    skip_bf = jax.block_until_ready(skip_bf)
    assert jnp.allclose(skip_bf, ref_skip, atol=3e-1, rtol=1e-1)
    assert jnp.allclose(out_bf, ref_out, atol=3e-1, rtol=1e-1)

    print("KERNEL_OK")
</pallas_src>

<mosaic_0001>
module attributes {stable_mosaic.version = 11 : i64} {
  func.func @_down_block_kernel(%arg0: i32, %arg1: memref<1x4x256xf32, #tpu.memory_space<vmem>>, %arg2: memref<4x36xf32, #tpu.memory_space<vmem>>, %arg3: memref<8x36xf32, #tpu.memory_space<vmem>>, %arg4: memref<12x1xf32, #tpu.memory_space<vmem>>, %arg5: memref<1x8x64xf32, #tpu.memory_space<vmem>>, %arg6: memref<1x8x256xf32, #tpu.memory_space<vmem>>, %arg7: memref<4x512xf32, #tpu.memory_space<vmem>>, %arg8: memref<4x512xf32, #tpu.memory_space<vmem>>) attributes {dimension_semantics = [#tpu.dimension_semantics<parallel>], iteration_bounds = array<i64: 2>, scalar_prefetch = 0 : i64, scratch_operands = 2 : i64, tpu.core_type = #tpu.core_type<tc>, window_params = [{transform_indices = @transform_0, window_bounds = array<i64: 1, 4, 256>}, {pipeline_mode = #tpu.pipeline_mode<synchronous>, transform_indices = @transform_1, window_bounds = array<i64: 4, 36>}, {pipeline_mode = #tpu.pipeline_mode<synchronous>, transform_indices = @transform_2, window_bounds = array<i64: 8, 36>}, {pipeline_mode = #tpu.pipeline_mode<synchronous>, transform_indices = @transform_3, window_bounds = array<i64: 12, 1>}, {transform_indices = @transform_4, window_bounds = array<i64: 1, 8, 64>}, {transform_indices = @transform_5, window_bounds = array<i64: 1, 8, 256>}]} {
    %0 = tpu.iota {dimensions = array<i32: 1>} : vector<1x256xi32>
    %c16_i32 = arith.constant 16 : i32
    %c0_i32 = arith.constant 0 : i32
    %1 = arith.cmpi eq, %c16_i32, %c0_i32 : i32
    %c1_i32 = arith.constant 1 : i32
    %2 = arith.select %1, %c1_i32, %c16_i32 : i32
    %3 = vector.broadcast %2 : i32 to vector<1x256xi32>
    %4 = arith.remsi %0, %3 : vector<1x256xi32>
    %c0_i32_0 = arith.constant 0 : i32
    %5 = vector.broadcast %c0_i32_0 : i32 to vector<1x256xi32>
    %6 = arith.cmpi ne, %4, %5 : vector<1x256xi32>
    %c0_i32_1 = arith.constant 0 : i32
    %7 = vector.broadcast %c0_i32_1 : i32 to vector<1x256xi32>
    %8 = arith.cmpi slt, %4, %7 : vector<1x256xi32>
    %c0_i32_2 = arith.constant 0 : i32
    %9 = arith.cmpi slt, %2, %c0_i32_2 : i32
    %10 = vector.broadcast %9 : i1 to vector<1x256xi1>
    %11 = vector.broadcast %10 : vector<1x256xi1> to vector<1x256xi1>
    %12 = arith.xori %8, %11 : vector<1x256xi1>
    %13 = arith.andi %12, %6 : vector<1x256xi1>
    %14 = vector.broadcast %2 : i32 to vector<1x256xi32>
    %15 = arith.addi %4, %14 : vector<1x256xi32>
    %16 = arith.select %13, %15, %4 : vector<1x256xi1>, vector<1x256xi32>
    %c0_i32_3 = arith.constant 0 : i32
    %17 = vector.broadcast %c0_i32_3 : i32 to vector<1x256xi32>
    %18 = arith.cmpi sgt, %16, %17 : vector<1x256xi32>
    %19 = arith.extui %18 : vector<1x256xi1> to vector<1x256xi32>
    %20 = arith.sitofp %19 : vector<1x256xi32> to vector<1x256xf32>
    %c15_i32 = arith.constant 15 : i32
    %21 = vector.broadcast %c15_i32 : i32 to vector<1x256xi32>
    %22 = arith.cmpi slt, %16, %21 : vector<1x256xi32>
    %23 = arith.extui %22 : vector<1x256xi1> to vector<1x256xi32>
    %24 = arith.sitofp %23 : vector<1x256xi32> to vector<1x256xf32>
    %c0 = arith.constant 0 : index
    %c0_4 = arith.constant 0 : index
    %25 = vector.load %arg4[%c0, %c0_4] : memref<12x1xf32, #tpu.memory_space<vmem>>, vector<4x1xf32>
    %c4 = arith.constant 4 : index
    %c0_5 = arith.constant 0 : index
    %26 = vector.load %arg4[%c4, %c0_5] : memref<12x1xf32, #tpu.memory_space<vmem>>, vector<8x1xf32>
    %cst = arith.constant 0.000000e+00 : f32
    %27 = vector.broadcast %cst : f32 to vector<4x17xf32>
    %c0_6 = arith.constant 0 : index
    %c111 = arith.constant 111 : index
    %28 = vector.load %arg7[%c0_6, %c111] : memref<4x512xf32, #tpu.memory_space<vmem>>, vector<4x17xf32>
    tpu.vector_store %arg7[%c0_6, %c111], %27 {strides = array<i32>} : memref<4x512xf32, #tpu.memory_space<vmem>>, vector<4x17xf32>,
    %cst_7 = arith.constant 0.000000e+00 : f32
    %29 = vector.broadcast %cst_7 : f32 to vector<4x17xf32>
    %c0_8 = arith.constant 0 : index
    %c384 = arith.constant 384 : index
    %30 = vector.load %arg7[%c0_8, %c384] : memref<4x512xf32, #tpu.memory_space<vmem>>, vector<4x17xf32>
    tpu.vector_store %arg7[%c0_8, %c384], %29 {strides = array<i32>} : memref<4x512xf32, #tpu.memory_space<vmem>>, vector<4x17xf32>,
    %cst_9 = arith.constant 0.000000e+00 : f32
    %31 = vector.broadcast %cst_9 : f32 to vector<4x17xf32>
    %c0_10 = arith.constant 0 : index
    %c111_11 = arith.constant 111 : index
    %32 = vector.load %arg8[%c0_10, %c111_11] : memref<4x512xf32, #tpu.memory_space<vmem>>, vector<4x17xf32>
    tpu.vector_store %arg8[%c0_10, %c111_11], %31 {strides = array<i32>} : memref<4x512xf32, #tpu.memory_space<vmem>>, vector<4x17xf32>,
    %cst_12 = arith.constant 0.000000e+00 : f32
    %33 = vector.broadcast %cst_12 : f32 to vector<4x17xf32>
    %c0_13 = arith.constant 0 : index
    %c384_14 = arith.constant 384 : index
    %34 = vector.load %arg8[%c0_13, %c384_14] : memref<4x512xf32, #tpu.memory_space<vmem>>, vector<4x17xf32>
    tpu.vector_store %arg8[%c0_13, %c384_14], %33 {strides = array<i32>} : memref<4x512xf32, #tpu.memory_space<vmem>>, vector<4x17xf32>,
    %c0_15 = arith.constant 0 : index
    %c0_16 = arith.constant 0 : index
    %c0_17 = arith.constant 0 : index
    %35 = vector.load %arg1[%c0_15, %c0_16, %c0_17] : memref<1x4x256xf32, #tpu.memory_space<vmem>>, vector<1x4x256xf32>
    %36 = vector.shape_cast %35 : vector<1x4x256xf32> to vector<4x256xf32>
    %c0_18 = arith.constant 0 : index
    %c128 = arith.constant 128 : index
    %37 = vector.load %arg7[%c0_18, %c128] : memref<4x512xf32, #tpu.memory_space<vmem>>, vector<4x256xf32>
    tpu.vector_store %arg7[%c0_18, %c128], %36 {strides = array<i32>} : memref<4x512xf32, #tpu.memory_space<vmem>>, vector<4x256xf32>,
    %c0_19 = arith.constant 0 : index
    %c111_20 = arith.constant 111 : index
    %38 = vector.load %arg7[%c0_19, %c111_20] : memref<4x512xf32, #tpu.memory_space<vmem>>, vector<4x256xf32>
    %39 = vector.broadcast %20 : vector<1x256xf32> to vector<4x256xf32>
    %40 = arith.mulf %38, %39 : vector<4x256xf32>
    %c0_21 = arith.constant 0 : index
    %c112 = arith.constant 112 : index
    %41 = vector.load %arg7[%c0_21, %c112] : memref<4x512xf32, #tpu.memory_space<vmem>>, vector<4x256xf32>
    %c0_22 = arith.constant 0 : index
    %c113 = arith.constant 113 : index
    %42 = vector.load %arg7[%c0_22, %c113] : memref<4x512xf32, #tpu.memory_space<vmem>>, vector<4x256xf32>
    %43 = vector.broadcast %24 : vector<1x256xf32> to vector<4x256xf32>
    %44 = arith.mulf %42, %43 : vector<4x256xf32>
    %c0_23 = arith.constant 0 : index
    %c127 = arith.constant 127 : index
    %45 = vector.load %arg7[%c0_23, %c127] : memref<4x512xf32, #tpu.memory_space<vmem>>, vector<4x256xf32>
    %46 = vector.broadcast %20 : vector<1x256xf32> to vector<4x256xf32>
    %47 = arith.mulf %45, %46 : vector<4x256xf32>
    %c0_24 = arith.constant 0 : index
    %c128_25 = arith.constant 128 : index
    %48 = vector.load %arg7[%c0_24, %c128_25] : memref<4x512xf32, #tpu.memory_space<vmem>>, vector<4x256xf32>
    %c0_26 = arith.constant 0 : index
    %c129 = arith.constant 129 : index
    %49 = vector.load %arg7[%c0_26, %c129] : memref<4x512xf32, #tpu.memory_space<vmem>>, vector<4x256xf32>
    %50 = vector.broadcast %24 : vector<1x256xf32> to vector<4x256xf32>
    %51 = arith.mulf %49, %50 : vector<4x256xf32>
    %c0_27 = arith.constant 0 : index
    %c143 = arith.constant 143 : index
    %52 = vector.load %arg7[%c0_27, %c143] : memref<4x512xf32, #tpu.memory_space<vmem>>, vector<4x256xf32>
    %53 = vector.broadcast %20 : vector<1x256xf32> to vector<4x256xf32>
    %54 = arith.mulf %52, %53 : vector<4x256xf32>
    %c0_28 = arith.constant 0 : index
    %c144 = arith.constant 144 : index
    %55 = vector.load %arg7[%c0_28, %c144] : memref<4x512xf32, #tpu.memory_space<vmem>>, vector<4x256xf32>
    %c0_29 = arith.constant 0 : index
    %c145 = arith.constant 145 : index
    %56 = vector.load %arg7[%c0_29, %c145] : memref<4x512xf32, #tpu.memory_space<vmem>>, vector<4x256xf32>
    %57 = vector.broadcast %24 : vector<1x256xf32> to vector<4x256xf32>
    %58 = arith.mulf %56, %57 : vector<4x256xf32>
    %59 = tpu.concatenate %40, %41, %44, %47, %48, %51, %54, %55, %58 in 0 : vector<4x256xf32>, vector<4x256xf32>, vector<4x256xf32>, vector<4x256xf32>, vector<4x256xf32>, vector<4x256xf32>, vector<4x256xf32>, vector<4x256xf32>, vector<4x256xf32> -> vector<36x256xf32>
    %c0_30 = arith.constant 0 : index
    %c0_31 = arith.constant 0 : index
    %60 = vector.load %arg2[%c0_30, %c0_31] : memref<4x36xf32, #tpu.memory_space<vmem>>, vector<4x36xf32>
    %cst_32 = arith.constant dense<0.000000e+00> : vector<4x256xf32>
    %61 = tpu.matmul %60, %59, %cst_32 {dimension_numbers = #tpu.dot_dimension_numbers<[1], [0], [0], [1], [0, 0, 1, 1], [], []>} : vector<4x36xf32>, vector<36x256xf32>, vector<4x256xf32> -> vector<4x256xf32>
    %62 = vector.broadcast %25 : vector<4x1xf32> to vector<4x256xf32>
    %63 = arith.addf %61, %62 : vector<4x256xf32>
    %cst_33 = arith.constant 0.000000e+00 : f32
    %64 = vector.broadcast %cst_33 : f32 to vector<4x256xf32>
    %65 = arith.maximumf %63, %64 : vector<4x256xf32>
    %c0_34 = arith.constant 0 : index
    %c128_35 = arith.constant 128 : index
    %66 = vector.load %arg8[%c0_34, %c128_35] : memref<4x512xf32, #tpu.memory_space<vmem>>, vector<4x256xf32>
    tpu.vector_store %arg8[%c0_34, %c128_35], %65 {strides = array<i32>} : memref<4x512xf32, #tpu.memory_space<vmem>>, vector<4x256xf32>,
    %c0_36 = arith.constant 0 : index
    %c111_37 = arith.constant 111 : index
    %67 = vector.load %arg8[%c0_36, %c111_37] : memref<4x512xf32, #tpu.memory_space<vmem>>, vector<4x256xf32>
    %68 = vector.broadcast %20 : vector<1x256xf32> to vector<4x256xf32>
    %69 = arith.mulf %67, %68 : vector<4x256xf32>
    %c0_38 = arith.constant 0 : index
    %c112_39 = arith.constant 112 : index
    %70 = vector.load %arg8[%c0_38, %c112_39] : memref<4x512xf32, #tpu.memory_space<vmem>>, vector<4x256xf32>
    %c0_40 = arith.constant 0 : index
    %c113_41 = arith.constant 113 : index
    %71 = vector.load %arg8[%c0_40, %c113_41] : memref<4x512xf32, #tpu.memory_space<vmem>>, vector<4x256xf32>
    %72 = vector.broadcast %24 : vector<1x256xf32> to vector<4x256xf32>
    %73 = arith.mulf %71, %72 : vector<4x256xf32>
    %c0_42 = arith.constant 0 : index
    %c127_43 = arith.constant 127 : index
    %74 = vector.load %arg8[%c0_42, %c127_43] : memref<4x512xf32, #tpu.memory_space<vmem>>, vector<4x256xf32>
    %75 = vector.broadcast %20 : vector<1x256xf32> to vector<4x256xf32>
    %76 = arith.mulf %74, %75 : vector<4x256xf32>
    %c0_44 = arith.constant 0 : index
    %c128_45 = arith.constant 128 : index
    %77 = vector.load %arg8[%c0_44, %c128_45] : memref<4x512xf32, #tpu.memory_space<vmem>>, vector<4x256xf32>
    %c0_46 = arith.constant 0 : index
    %c129_47 = arith.constant 129 : index
    %78 = vector.load %arg8[%c0_46, %c129_47] : memref<4x512xf32, #tpu.memory_space<vmem>>, vector<4x256xf32>
    %79 = vector.broadcast %24 : vector<1x256xf32> to vector<4x256xf32>
    %80 = arith.mulf %78, %79 : vector<4x256xf32>
    %c0_48 = arith.constant 0 : index
    %c143_49 = arith.constant 143 : index
    %81 = vector.load %arg8[%c0_48, %c143_49] : memref<4x512xf32, #tpu.memory_space<vmem>>, vector<4x256xf32>
    %82 = vector.broadcast %20 : vector<1x256xf32> to vector<4x256xf32>
    %83 = arith.mulf %81, %82 : vector<4x256xf32>
    %c0_50 = arith.constant 0 : index
    %c144_51 = arith.constant 144 : index
    %84 = vector.load %arg8[%c0_50, %c144_51] : memref<4x512xf32, #tpu.memory_space<vmem>>, vector<4x256xf32>
    %c0_52 = arith.constant 0 : index
    %c145_53 = arith.constant 145 : index
    %85 = vector.load %arg8[%c0_52, %c145_53] : memref<4x512xf32, #tpu.memory_space<vmem>>, vector<4x256xf32>
    %86 = vector.broadcast %24 : vector<1x256xf32> to vector<4x256xf32>
    %87 = arith.mulf %85, %86 : vector<4x256xf32>
    %88 = tpu.concatenate %69, %70, %73, %76, %77, %80, %83, %84, %87 in 0 : vector<4x256xf32>, vector<4x256xf32>, vector<4x256xf32>, vector<4x256xf32>, vector<4x256xf32>, vector<4x256xf32>, vector<4x256xf32>, vector<4x256xf32>, vector<4x256xf32> -> vector<36x256xf32>
    %c0_54 = arith.constant 0 : index
    %c0_55 = arith.constant 0 : index
    %89 = vector.load %arg3[%c0_54, %c0_55] : memref<8x36xf32, #tpu.memory_space<vmem>>, vector<8x36xf32>
    %cst_56 = arith.constant dense<0.000000e+00> : vector<8x256xf32>
    %90 = tpu.matmul %89, %88, %cst_56 {dimension_numbers = #tpu.dot_dimension_numbers<[1], [0], [0], [1], [0, 0, 1, 1], [], []>} : vector<8x36xf32>, vector<36x256xf32>, vector<8x256xf32> -> vector<8x256xf32>
    %91 = vector.broadcast %26 : vector<8x1xf32> to vector<8x256xf32>
    %92 = arith.addf %90, %91 : vector<8x256xf32>
    %cst_57 = arith.constant 0.000000e+00 : f32
    %93 = vector.broadcast %cst_57 : f32 to vector<8x256xf32>
    %94 = arith.maximumf %92, %93 : vector<8x256xf32>
    %c0_58 = arith.constant 0 : index
    %c0_59 = arith.constant 0 : index
    %c0_60 = arith.constant 0 : index
    %95 = vector.load %arg6[%c0_58, %c0_59, %c0_60] : memref<1x8x256xf32, #tpu.memory_space<vmem>>, vector<1x8x256xf32>
    %96 = vector.shape_cast %95 : vector<1x8x256xf32> to vector<8x256xf32>
    %97 = vector.shape_cast %94 : vector<8x256xf32> to vector<1x8x256xf32>
    tpu.vector_store %arg6[%c0_58, %c0_59, %c0_60], %97 {strides = array<i32>} : memref<1x8x256xf32, #tpu.memory_space<vmem>>, vector<1x8x256xf32>,
    %98 = vector.shape_cast %94 : vector<8x256xf32> to vector<8x128x2xf32>
    %cst_61 = arith.constant dense<0xFF800000> : vector<8x128xf32>
    %99 = vector.multi_reduction <maximumf>, %98, %cst_61 [2] : vector<8x128x2xf32> to vector<8x128xf32>
    %100 = vector.shape_cast %99 : vector<8x128xf32> to vector<8x8x16xf32>
    %101 = vector.extract_strided_slice %100 {offsets = [0, 0, 0], sizes = [8, 8, 8], strides = [1, 1, 1]} : vector<8x8x16xf32> to vector<8x8x8xf32>
    %102 = vector.extract_strided_slice %100 {offsets = [0, 0, 8], sizes = [8, 8, 8], strides = [1, 1, 1]} : vector<8x8x16xf32> to vector<8x8x8xf32>
    %103 = arith.maximumf %101, %102 : vector<8x8x8xf32>
    %104 = vector.shape_cast %103 : vector<8x8x8xf32> to vector<8x64xf32>
    %c0_62 = arith.constant 0 : index
    %c0_63 = arith.constant 0 : index
    %c0_64 = arith.constant 0 : index
    %105 = vector.load %arg5[%c0_62, %c0_63, %c0_64] : memref<1x8x64xf32, #tpu.memory_space<vmem>>, vector<1x8x64xf32>
    %106 = vector.shape_cast %105 : vector<1x8x64xf32> to vector<8x64xf32>
    %107 = vector.shape_cast %104 : vector<8x64xf32> to vector<1x8x64xf32>
    tpu.vector_store %arg5[%c0_62, %c0_63, %c0_64], %107 {strides = array<i32>} : memref<1x8x64xf32, #tpu.memory_space<vmem>>, vector<1x8x64xf32>,
    return
  }
  func.func @transform_0(%arg0: i32) -> (i32, i32, i32) {
    %c0_i32 = arith.constant 0 : i32
    %c0_i32_0 = arith.constant 0 : i32
    %c0_i32_1 = arith.constant 0 : i32
    return %arg0, %c0_i32, %c0_i32_0 : i32, i32, i32
  }
  func.func @transform_1(%arg0: i32) -> (i32, i32) {
    %c0_i32 = arith.constant 0 : i32
    %c0_i32_0 = arith.constant 0 : i32
    %c0_i32_1 = arith.constant 0 : i32
    return %c0_i32, %c0_i32_0 : i32, i32
  }
  func.func @transform_2(%arg0: i32) -> (i32, i32) {
    %c0_i32 = arith.constant 0 : i32
    %c0_i32_0 = arith.constant 0 : i32
    %c0_i32_1 = arith.constant 0 : i32
    return %c0_i32, %c0_i32_0 : i32, i32
  }
  func.func @transform_3(%arg0: i32) -> (i32, i32) {
    %c0_i32 = arith.constant 0 : i32
    %c0_i32_0 = arith.constant 0 : i32
    %c0_i32_1 = arith.constant 0 : i32
    return %c0_i32, %c0_i32_0 : i32, i32
  }
  func.func @transform_4(%arg0: i32) -> (i32, i32, i32) {
    %c0_i32 = arith.constant 0 : i32
    %c0_i32_0 = arith.constant 0 : i32
    %c0_i32_1 = arith.constant 0 : i32
    return %arg0, %c0_i32, %c0_i32_0 : i32, i32, i32
  }
  func.func @transform_5(%arg0: i32) -> (i32, i32, i32) {
    %c0_i32 = arith.constant 0 : i32
    %c0_i32_0 = arith.constant 0 : i32
    %c0_i32_1 = arith.constant 0 : i32
    return %arg0, %c0_i32, %c0_i32_0 : i32, i32, i32
  }
}

</mosaic_0001>

<llo_original>
// kernel: tpu_custom_call.1
$region0: #{tpu_custom_call.1}
  #allocation0 [shape = 'u32[]', space=smem, size = 0x4, offset = 0x4, fixed_abs, tag = 'smem constant byte address 0x4 - core index']
  #allocation1 [shape = 'u32[144,128]{1,0:T(1,128)}', space=vmem, size = 0x12000, scoped, tag = 'internal scratch']
  #allocation2 [shape = 'f32[4,512]{1,0:T(4,128)}', space=vmem, size = 0x2000, scoped, tag = 'scratch operand']
  #allocation3 [shape = 'f32[4,512]{1,0:T(4,128)}', space=vmem, size = 0x2000, scoped, tag = 'scratch operand']
  %s0 = inlined_call_operand.vmem [shape: f32[2,4,256], index: 0, kind: input, shape index: {}]
  %s1 = inlined_call_operand.hbm [shape: f32[4,36], index: 1, kind: input, shape index: {}]
  %s2 = inlined_call_operand.hbm [shape: f32[8,36], index: 2, kind: input, shape index: {}]
  %s3 = inlined_call_operand.vmem [shape: f32[12,1], index: 3, kind: input, shape index: {}]
  %s4 = inlined_call_operand.hbm [shape: f32[2,8,64], index: 4, kind: output, shape index: {0}]
  %s5 = inlined_call_operand.hbm [shape: f32[2,8,256], index: 5, kind: output, shape index: {1}]
  %6 = xla_tuple %s4, %s5
  %s7 = sld [smem:[#allocation0]]
  $region65: #{tpu_custom_call.1} parent=0
    _
  %s9 = ssub.s32 1, %s7
  %s10 = scalar_select 0, %s9, %s7
  $region1: #{tpu_custom_call.1} parent=0
    #allocation4 [shape = 'u8[2048]{0}', space=vmem, size = 0x800, scoped, tag = 'input window, operand 1, single buffered']
    #allocation5 [shape = 's32[2]{0}', space=sflag, size = 0x8, scoped, tag = 'scoped memory for tpu_custom_call.1']
    #allocation6 [shape = 's32[2]{0}', space=sflag, size = 0x8, scoped, tag = 'scoped memory for tpu_custom_call.1']
    #allocation7 [shape = 'u8[4096]{0}', space=vmem, size = 0x1000, scoped, tag = 'input window, operand 2, single buffered']
    #allocation8 [shape = 's32[1]{0}', space=sflag, size = 0x4, scoped, tag = 'scoped memory for tpu_custom_call.1']
    #allocation9 [shape = 'u8[8192]{0}', space=vmem, size = 0x2000, scoped, tag = 'output window, operand 0']
    #allocation10 [shape = 'u8[16384]{0}', space=vmem, size = 0x4000, scoped, tag = 'output window, operand 1']
    #allocation11 [shape = 's32[2]{0}', space=sflag, size = 0x8, scoped, tag = 'scoped memory for tpu_custom_call.1']
    %11 = vsyncpa [#allocation5], 0
    %12 = vsyncpa [#allocation8], 0
    %13 = vsyncpa [#allocation6], 0
    %s14 = scalar_lea.sflag [#allocation6], 1
    %15 = vsyncpa %s14, 0
    %16 = vsyncpa [#allocation11], 0
    %s17 = scalar_lea.sflag [#allocation11], 1
    %18 = vsyncpa %s17, 0
    loop: start=0, step=1, limit=4
    $region2: #{tpu_custom_call.1} parent=1 // loop_pre_header
      _
    $region3: #{tpu_custom_call.1} parent=1 // loop_header
      %s20 = sphi 0, %s24
      %p21 = scmp.ge.s32.totalorder %s20, 4
      %s30 = sphi 0, %s32
      %s33 = sphi 0, %s30
      %s34 = sphi 0, %s33
      %s50 = sphi 0, %s34
      %s54 = sphi 0, %s54
      %s56 = sphi 0, %s54
      %s57 = sphi 0, %s56
      %s71 = sphi 0, %s57
      %s75 = sphi 0, %s75
      %s77 = sphi 0, %s75
      %s78 = sphi 0, %s77
      %s92 = sphi 0, %s78
      %s96 = sphi 0, %s96
      %s98 = sphi 0, %s96
      %s99 = sphi 0, %s98
      %s113 = sphi 0, %s99
      %s119 = sphi 0, %s121
      %s122 = sphi 0, %s119
      %s123 = sphi 0, %s122
      %s139 = sphi 0, %s123
      %s145 = sphi 0, %s147
      %s148 = sphi 0, %s145
      %s149 = sphi 0, %s148
      %s165 = sphi 0, %s149
    $region4: #{tpu_custom_call.1} parent=1 // loop_header_branch
      %23 = sbr.rel (%p21) target = $region8
    $region5: #{tpu_custom_call.1} parent=1 // loop_body
      %s25 = ssub.s32 %s20, 1
      %s26 = ssub.s32 %s20, 2
      %s27 = sadd.s32 %s20, 1
      %s28 = ssub.s32 %s20, %s27
      %p29 = scmp.eq.s32.totalorder %s28, 0
      %s31 = sadd.s32 %s30, 1
      %s32 = scalar_select %p29, %s30, %s31
      %p35 = pneg %p29
      %p36 = scmp.eq.s32.totalorder %s20, 1
      %p37 = por %p35, %p36
      %p38 = scmp.ne.s32.totalorder %s30, %s33
      %p39 = scmp.eq.s32.totalorder %s20, 0
      %p40 = por %p38, %p39
      %p41 = scmp.ne.s32.totalorder %s30, %s33
      %p42 = scmp.eq.s32.totalorder %s25, 1
      %p43 = por %p41, %p42
      %p44 = scmp.ne.s32.totalorder %s33, %s34
      %p45 = scmp.eq.s32.totalorder %s25, 0
      %p46 = por %p44, %p45
      %p47 = scmp.ne.s32.totalorder %s33, %s34
      %p48 = scmp.eq.s32.totalorder %s26, 1
      %p49 = por %p47, %p48
      %p51 = scmp.ne.s32.totalorder %s34, %s50
      %p52 = scmp.eq.s32.totalorder %s26, 0
      %p53 = por %p51, %p52
      %s55 = sadd.s32 %s54, 1
      %p58 = scmp.eq.s32.totalorder %s20, 1
      %p59 = scmp.ne.s32.totalorder %s54, %s56
      %p60 = scmp.eq.s32.totalorder %s20, 0
      %p61 = por %p59, %p60
      %p62 = scmp.ne.s32.totalorder %s54, %s56
      %p63 = scmp.eq.s32.totalorder %s25, 1
      %p64 = por %p62, %p63
      %p65 = scmp.ne.s32.totalorder %s56, %s57
      %p66 = scmp.eq.s32.totalorder %s25, 0
      %p67 = por %p65, %p66
      %p68 = scmp.ne.s32.totalorder %s56, %s57
      %p69 = scmp.eq.s32.totalorder %s26, 1
      %p70 = por %p68, %p69
      %p72 = scmp.ne.s32.totalorder %s57, %s71
      %p73 = scmp.eq.s32.totalorder %s26, 0
      %p74 = por %p72, %p73
      %s76 = sadd.s32 %s75, 1
      %p79 = scmp.eq.s32.totalorder %s20, 1
      %p80 = scmp.ne.s32.totalorder %s75, %s77
      %p81 = scmp.eq.s32.totalorder %s20, 0
      %p82 = por %p80, %p81
      %p83 = scmp.ne.s32.totalorder %s75, %s77
      %p84 = scmp.eq.s32.totalorder %s25, 1
      %p85 = por %p83, %p84
      %p86 = scmp.ne.s32.totalorder %s77, %s78
      %p87 = scmp.eq.s32.totalorder %s25, 0
      %p88 = por %p86, %p87
      %p89 = scmp.ne.s32.totalorder %s77, %s78
      %p90 = scmp.eq.s32.totalorder %s26, 1
      %p91 = por %p89, %p90
      %p93 = scmp.ne.s32.totalorder %s78, %s92
      %p94 = scmp.eq.s32.totalorder %s26, 0
      %p95 = por %p93, %p94
      %s97 = sadd.s32 %s96, 1
      %p100 = scmp.eq.s32.totalorder %s20, 1
      %p101 = scmp.ne.s32.totalorder %s96, %s98
      %p102 = scmp.eq.s32.totalorder %s20, 0
      %p103 = por %p101, %p102
      %p104 = scmp.ne.s32.totalorder %s96, %s98
      %p105 = scmp.eq.s32.totalorder %s25, 1
      %p106 = por %p104, %p105
      %p107 = scmp.ne.s32.totalorder %s98, %s99
      %p108 = scmp.eq.s32.totalorder %s25, 0
      %p109 = por %p107, %p108
      %p110 = scmp.ne.s32.totalorder %s98, %s99
      %p111 = scmp.eq.s32.totalorder %s26, 1
      %p112 = por %p110, %p111
      %p114 = scmp.ne.s32.totalorder %s99, %s113
      %p115 = scmp.eq.s32.totalorder %s26, 0
      %p116 = por %p114, %p115
      %s117 = ssub.s32 %s20, %s27
      %p118 = scmp.eq.s32.totalorder %s117, 0
      %s120 = sadd.s32 %s119, 1
      %s121 = scalar_select %p118, %s119, %s120
      %p124 = pneg %p118
      %p125 = scmp.eq.s32.totalorder %s20, 1
      %p126 = por %p124, %p125
      %p127 = scmp.ne.s32.totalorder %s119, %s122
      %p128 = scmp.eq.s32.totalorder %s20, 0
      %p129 = por %p127, %p128
      %p130 = scmp.ne.s32.totalorder %s119, %s122
      %p131 = scmp.eq.s32.totalorder %s25, 1
      %p132 = por %p130, %p131
      %p133 = scmp.ne.s32.totalorder %s122, %s123
      %p134 = scmp.eq.s32.totalorder %s25, 0
      %p135 = por %p133, %p134
      %p136 = scmp.ne.s32.totalorder %s122, %s123
      %p137 = scmp.eq.s32.totalorder %s26, 1
      %p138 = por %p136, %p137
      %p140 = scmp.ne.s32.totalorder %s123, %s139
      %p141 = scmp.eq.s32.totalorder %s26, 0
      %p142 = por %p140, %p141
      %s143 = ssub.s32 %s20, %s27
      %p144 = scmp.eq.s32.totalorder %s143, 0
      %s146 = sadd.s32 %s145, 1
      %s147 = scalar_select %p144, %s145, %s146
      %p150 = pneg %p144
      %p151 = scmp.eq.s32.totalorder %s20, 1
      %p152 = por %p150, %p151
      %p153 = scmp.ne.s32.totalorder %s145, %s148
      %p154 = scmp.eq.s32.totalorder %s20, 0
      %p155 = por %p153, %p154
      %p156 = scmp.ne.s32.totalorder %s145, %s148
      %p157 = scmp.eq.s32.totalorder %s25, 1
      %p158 = por %p156, %p157
      %p159 = scmp.ne.s32.totalorder %s148, %s149
      %p160 = scmp.eq.s32.totalorder %s25, 0
      %p161 = por %p159, %p160
      %p162 = scmp.ne.s32.totalorder %s148, %s149
      %p163 = scmp.eq.s32.totalorder %s26, 1
      %p164 = por %p162, %p163
      %p166 = scmp.ne.s32.totalorder %s149, %s165
      %p167 = scmp.eq.s32.totalorder %s26, 0
      %p168 = por %p166, %p167
      %p169 = scmp.le.s32.totalorder 1, %s20
      %p170 = scmp.lt.s32.totalorder %s20, 3
      %p171 = pnand %p169, %p170
      %p172 = pneg %p171
      // Predicated region
      $region9: #{tpu_custom_call.1} parent=5 // pred_check
        _
      $region10: #{tpu_custom_call.1} parent=5 // pred_check_branch
        %174 = sbr.rel (%p171) target = $region12
      $region11: #{tpu_custom_call.1} parent=5 // pred_region
        %s175 = ssub.s32 %s20, 1
        // Predicated region
        $region13: #{tpu_custom_call.1} parent=11 // pred_check
          %p176 = pneg %p67
        $region14: #{tpu_custom_call.1} parent=11 // pred_check_branch
          %178 = sbr.rel (%p176) target = $region16
        $region15: #{tpu_custom_call.1} parent=11 // pred_region
          %s180 = ssub.s32 64, 64
          %181 = vsyncadd [#allocation5], %s180
          %s183 = sshll.u32 [#allocation4], 4
          %s184 = int_to_ptr.vmem [resolvable:$true] %s183
          %186 = dma.hbm_to_vmem [thread:$0]  %s1, 64, %s184, [#allocation5]
        $region16: #{tpu_custom_call.1} parent=11 // pred_fallthru
          _
        // Predicated region
        $region17: #{tpu_custom_call.1} parent=11 // pred_check
          %p187 = pneg %p88
        $region18: #{tpu_custom_call.1} parent=11 // pred_check_branch
          %189 = sbr.rel (%p187) target = $region20
        $region19: #{tpu_custom_call.1} parent=11 // pred_region
          %s191 = ssub.s32 128, 128
          %192 = vsyncadd [#allocation8], %s191
          %s194 = sshll.u32 [#allocation7], 4
          %s195 = int_to_ptr.vmem [resolvable:$true] %s194
          %197 = dma.hbm_to_vmem [thread:$0]  %s2, 128, %s195, [#allocation8]
        $region20: #{tpu_custom_call.1} parent=11 // pred_fallthru
          _
        // Predicated region
        $region21: #{tpu_custom_call.1} parent=11 // pred_check
          %p198 = pneg %p109
        $region22: #{tpu_custom_call.1} parent=11 // pred_check_branch
          %200 = sbr.rel (%p198) target = $region24
        $region23: #{tpu_custom_call.1} parent=11 // pred_region
          _
        $region24: #{tpu_custom_call.1} parent=11 // pred_fallthru
          _
      $region12: #{tpu_custom_call.1} parent=5 // pred_fallthru
        _
      %p201 = scmp.lt.s32.totalorder %s20, 2
      // Predicated region
      $region25: #{tpu_custom_call.1} parent=5 // pred_check
        %p202 = pneg %p201
      $region26: #{tpu_custom_call.1} parent=5 // pred_check_branch
        %204 = sbr.rel (%p202) target = $region28
      $region27: #{tpu_custom_call.1} parent=5 // pred_region
        // Predicated region
        $region29: #{tpu_custom_call.1} parent=27 // pred_check
          %p205 = pneg %p40
        $region30: #{tpu_custom_call.1} parent=27 // pred_check_branch
          %207 = sbr.rel (%p205) target = $region32
        $region31: #{tpu_custom_call.1} parent=27 // pred_region
          %p208 = scmp.lt.s32.totalorder %s20, 1
          %s209 = scalar_select %p208, %s20, 1
          %s210 = smul.addr %s209, 2
          %s211 = smul.addr %s210, 4
          %s212 = scalar_lea.vmem %s0, %s211
        $region32: #{tpu_custom_call.1} parent=27 // pred_fallthru
          _
      $region28: #{tpu_custom_call.1} parent=5 // pred_fallthru
        _
      %p213 = scmp.le.s32.totalorder 1, %s20
      %p214 = scmp.lt.s32.totalorder %s20, 3
      %p215 = pnand %p213, %p214
      %p216 = pneg %p215
      // Predicated region
      $region33: #{tpu_custom_call.1} parent=5 // pred_check
        _
      $region34: #{tpu_custom_call.1} parent=5 // pred_check_branch
        %218 = sbr.rel (%p215) target = $region36
      $region35: #{tpu_custom_call.1} parent=5 // pred_region
        %s219 = ssub.s32 %s20, 1
        // Predicated region
        $region37: #{tpu_custom_call.1} parent=35 // pred_check
          %p220 = pneg %p67
        $region38: #{tpu_custom_call.1} parent=35 // pred_check_branch
          %222 = sbr.rel (%p220) target = $region40
        $region39: #{tpu_custom_call.1} parent=35 // pred_region
          %223 = dma.done [#allocation5], 64
        $region40: #{tpu_custom_call.1} parent=35 // pred_fallthru
          _
        // Predicated region
        $region41: #{tpu_custom_call.1} parent=35 // pred_check
          %p224 = pneg %p88
        $region42: #{tpu_custom_call.1} parent=35 // pred_check_branch
          %226 = sbr.rel (%p224) target = $region44
        $region43: #{tpu_custom_call.1} parent=35 // pred_region
          %227 = dma.done [#allocation8], 128
        $region44: #{tpu_custom_call.1} parent=35 // pred_fallthru
          _
        %p228 = scmp.lt.s32.totalorder %s25, 1
        %s229 = scalar_select %p228, %s25, 1
        %s230 = smul.addr %s229, 2
        %s231 = smul.addr %s230, 4
        %s232 = scalar_lea.vmem %s0, %s231
        %p233 = pneg %p46
        %p234 = pneg %p43
        %p235 = pneg %p67
        %p236 = pneg %p64
        %p237 = pneg %p88
        %p238 = pneg %p85
        %p239 = pneg %p109
        %p240 = pneg %p106
        %p241 = pneg %p135
        %p242 = pneg %p132
        %s243 = sand.u32 %s122, 1
        %s244 = scalar_lea.sflag [#allocation6], %s243
        %s245 = sand.u32 %s122, 1
        %s246 = smul.addr %s245, 8
        %s247 = scalar_lea.vmem [#allocation9], %s246
        %p248 = pneg %p161
        %p249 = pneg %p158
        %s250 = sand.u32 %s148, 1
        %s251 = scalar_lea.sflag [#allocation11], %s250
        %s252 = sand.u32 %s148, 1
        %s253 = smul.addr %s252, 16
        %s254 = scalar_lea.vmem [#allocation10], %s253
        %p255 = scmp.lt.s32.totalorder %s25, 1
        %s256 = scalar_select %p255, %s25, 1
        %s257 = smul.addr %s256, 2
        %s258 = smul.addr %s257, 4
        %s259 = scalar_lea.vmem %s0, %s258
        %v260 = vlaneseq
        %v261 = vand.u32 %v260, 127
        %v262 = vadd.s32 %v261, 128
        %vm263 = vcmp.lt.s32.totalorder %v261, 0
        %v264 = vsub.s32 0, %v261
        %v265 = vsel %vm263, %v264, %v261
        %v266 = vshrl.u32 %v265, 4
        %v267 = vand.u32 %v265, 15
        %v268 = vsub.s32 0, %v267
        %v269 = vsel %vm263, %v268, %v267
        %vm270 = vcmp.lt.s32.totalorder %v262, 0
        %v271 = vsub.s32 0, %v262
        %v272 = vsel %vm270, %v271, %v262
        %v273 = vshrl.u32 %v272, 4
        %v274 = vand.u32 %v272, 15
        %v275 = vsub.s32 0, %v274
        %v276 = vsel %vm270, %v275, %v274
        %vm277 = vcmp.ne.s32.totalorder %v269, 0
        %vm278 = vcmp.ne.s32.totalorder %v276, 0
        %vm279 = vcmp.lt.s32.totalorder %v269, 0
        %vm280 = vcmp.lt.s32.totalorder %v276, 0
        %vm281 = vmand %vm279, %vm277
        %vm282 = vmand %vm280, %vm278
        %v283 = vadd.s32 %v269, 16
        %v284 = vadd.s32 %v276, 16
        %v285 = vsel %vm281, %v283, %v269
        %v286 = vsel %vm282, %v284, %v276
        %vm287 = vcmp.gt.s32.totalorder %v285, 0
        %vm288 = vcmp.gt.s32.totalorder %v286, 0
        %v289 = vsel %vm287, 1, 0
        %v290 = vsel %vm288, 1, 0
        %v291 = vcvt.s32.f32 %v289
        %v292 = vcvt.s32.f32 %v290
        %vm293 = vcmp.lt.s32.totalorder %v285, 15
        %vm294 = vcmp.lt.s32.totalorder %v286, 15
        %v295 = vsel %vm293, 1, 0
        %v296 = vsel %vm294, 1, 0
        %v297 = vcvt.s32.f32 %v295
        %v298 = vcvt.s32.f32 %v296
        %v299 = vld [vmem:[%s3] sm:$0xf]
        %v300 = vld [vmem:[%s3 + $0x4] sm:$0xff]
        %vm301 = vcmask 1044344
        %302 = vst.msk [vmem:[#allocation2] sm:$0xf] %vm301, 0.0
        %vm303 = vcmask 134144
        %304 = vst.msk [vmem:[#allocation2 + $0xc] sm:$0xf] %vm303, 0.0
        %305 = vst.msk [vmem:[#allocation3] sm:$0xf] %vm301, 0.0
        %306 = vst.msk [vmem:[#allocation3 + $0xc] sm:$0xf] %vm303, 0.0
        %v307 = vld [vmem:[%s259] sm:$0xff]
        %308 = vst [vmem:[#allocation2 + $0x4] sm:$0xff] %v307
        %v309 = vld [vmem:[#allocation2] sm:$0xff]
        %v310 = vld [vmem:[#allocation2 + $0x8] sm:$0xf]
        %v313 = vcombine.low %v291, %v292
        %314 = vrot.lane.b32.xlu0 %v313, 111
        %v315 = vpop.permute.xlu0 %314
        %v316 = vrot.slane %v315, 4
        %vm317 = vcmask 908288
        %v318 = vsel %vm317, %v316, %v315
        %v321 = vmul.f32 %v309, %v318
        %v322 = vmul.f32 %v310, %v316
        %v325 = vcombine.low %v297, %v298
        %326 = vrot.lane.b32.xlu0 %v325, 113
        %v327 = vpop.permute.xlu0 %326
        %v328 = vrot.slane %v327, 4
        %vm329 = vcmask 924672
        %v330 = vsel %vm329, %v328, %v327
        %v333 = vmul.f32 %v309, %v330
        %v334 = vmul.f32 %v310, %v328
        %335 = vrot.lane.b32.xlu0 %v313, 127
        %v336 = vpop.permute.xlu0 %335
        %v337 = vrot.slane %v336, 4
        %vm338 = vcmask 1039360
        %v339 = vsel %vm338, %v337, %v336
        %v342 = vmul.f32 %v309, %v339
        %v343 = vmul.f32 %v310, %v337
        %v344 = vld [vmem:[#allocation2 + $0x4] sm:$0xff]
        %v345 = vld [vmem:[#allocation2 + $0x4] sm:$0xff]
        %v346 = vld [vmem:[#allocation2 + $0xc] sm:$0xf]
        %347 = vrot.lane.b32.xlu0 %v325, 1
        %v348 = vpop.permute.xlu0 %347
        %v349 = vrot.slane %v348, 4
        %vm350 = vcmask 7168
        %v351 = vsel %vm350, %v349, %v348
        %v354 = vmul.f32 %v345, %v351
        %v355 = vmul.f32 %v346, %v349
        %356 = vrot.lane.b32.xlu0 %v313, 15
        %v357 = vpop.permute.xlu0 %356
        %v358 = vrot.slane %v357, 4
        %vm359 = vcmask 121856
        %v360 = vsel %vm359, %v358, %v357
        %v363 = vmul.f32 %v345, %v360
        %v364 = vmul.f32 %v346, %v358
        %365 = vrot.lane.b32.xlu0 %v325, 17
        %v366 = vpop.permute.xlu0 %365
        %v367 = vrot.slane %v366, 4
        %vm368 = vcmask 138240
        %v369 = vsel %vm368, %v367, %v366
        %v372 = vmul.f32 %v345, %v369
        %v373 = vmul.f32 %v346, %v367
        %v375 = vcombine.high %v321, %v321
        %v379 = vcombine.low %v309, %v309
        %v380 = vcombine.low %v310, %v310
        %381 = vrot.lane.b32.xlu0 %v379, 127
        %v382 = vpop.permute.xlu0 %381
        %383 = vrot.lane.b32.xlu0 %v309, 127
        %v384 = vpop.permute.xlu0 %383
        %385 = vrot.lane.b32.xlu0 %v380, 127
        %v386 = vpop.permute.xlu0 %385
        %v387 = vsel %vm338, %v382, %v384
        %v388 = vsel %vm338, %v384, %v386
        %v394 = vcombine.high %v333, %v333
        %395 = vrot.lane.b32.xlu0 %v333, 126
        %v396 = vpop.permute.xlu0 %395
        %397 = vrot.lane.b32.xlu0 %v394, 126
        %v398 = vpop.permute.xlu0 %397
        %399 = vrot.lane.b32.xlu0 %v334, 126
        %v400 = vpop.permute.xlu0 %399
        %vm401 = vcmask 1031168
        %v402 = vsel %vm401, %v396, %v398
        %v403 = vsel %vm401, %v398, %v400
        %v409 = vcombine.low %v342, %v342
        %v410 = vcombine.low %v343, %v343
        %411 = vrot.lane.b32.xlu0 %v409, 112
        %v412 = vpop.permute.xlu0 %411
        %413 = vrot.lane.b32.xlu0 %v342, 112
        %v414 = vpop.permute.xlu0 %413
        %415 = vrot.lane.b32.xlu0 %v410, 112
        %v416 = vpop.permute.xlu0 %415
        %vm417 = vcmask 916480
        %v418 = vsel %vm417, %v412, %v414
        %v419 = vsel %vm417, %v414, %v416
        %v424 = vcombine.high %v344, %v344
        %425 = vrot.lane.b32.xlu0 %v344, 111
        %v426 = vpop.permute.xlu0 %425
        %427 = vrot.lane.b32.xlu0 %v424, 111
        %v428 = vpop.permute.xlu0 %427
        %v429 = vsel %vm317, %v426, %v428
        %v435 = vcombine.low %v354, %v354
        %v436 = vcombine.low %v355, %v355
        %437 = vrot.lane.b32.xlu0 %v435, 110
        %v438 = vpop.permute.xlu0 %437
        %439 = vrot.lane.b32.xlu0 %v354, 110
        %v440 = vpop.permute.xlu0 %439
        %441 = vrot.lane.b32.xlu0 %v436, 110
        %v442 = vpop.permute.xlu0 %441
        %vm443 = vcmask 900096
        %v444 = vsel %vm443, %v438, %v440
        %v445 = vsel %vm443, %v440, %v442
        %v451 = vcombine.high %v363, %v363
        %452 = vrot.lane.b32.xlu0 %v363, 96
        %v453 = vpop.permute.xlu0 %452
        %454 = vrot.lane.b32.xlu0 %v451, 96
        %v455 = vpop.permute.xlu0 %454
        %456 = vrot.lane.b32.xlu0 %v364, 96
        %v457 = vpop.permute.xlu0 %456
        %vm458 = vcmask 785408
        %v459 = vsel %vm458, %v453, %v455
        %v460 = vsel %vm458, %v455, %v457
        %v466 = vcombine.low %v345, %v345
        %v467 = vcombine.low %v346, %v346
        %468 = vrot.lane.b32.xlu0 %v466, 95
        %v469 = vpop.permute.xlu0 %468
        %470 = vrot.lane.b32.xlu0 %v345, 95
        %v471 = vpop.permute.xlu0 %470
        %472 = vrot.lane.b32.xlu0 %v467, 95
        %v473 = vpop.permute.xlu0 %472
        %vm474 = vcmask 777216
        %v475 = vsel %vm474, %v469, %v471
        %v476 = vsel %vm474, %v471, %v473
        %v482 = vcombine.high %v372, %v372
        %483 = vrot.lane.b32.xlu0 %v372, 94
        %v484 = vpop.permute.xlu0 %483
        %485 = vrot.lane.b32.xlu0 %v482, 94
        %v486 = vpop.permute.xlu0 %485
        %487 = vrot.lane.b32.xlu0 %v373, 94
        %v488 = vpop.permute.xlu0 %487
        %vm489 = vcmask 769024
        %v490 = vsel %vm489, %v484, %v486
        %v491 = vsel %vm489, %v486, %v488
        %vm492 = vcmask 1043456
        %v493 = vsel %vm492, %v321, %v387
        %v494 = vsel %vm492, %v375, %v388
        %v495 = vsel %vm492, %v322, %v386
        %v496 = vsel %vm492, %v402, %v418
        %v497 = vsel %vm492, %v403, %v419
        %v498 = vsel %vm492, %v400, %v416
        %v499 = vsel %vm492, %v426, %v438
        %v500 = vsel %vm492, %v429, %v444
        %v501 = vsel %vm492, %v428, %v445
        %v502 = vsel %vm492, %v453, %v469
        %v503 = vsel %vm492, %v459, %v475
        %v504 = vsel %vm492, %v460, %v476
        %v505 = vld [vmem:[#allocation4] sm:$0xf]
        %507 = vset.pattern.permute.xlu0 0
        %508 = vperm.xlu0 %507, %v299
        %v509 = vpop.permute.xlu0 %508
        %523 = vrot.lane.b32.xlu0 %v493, 17
        %v524 = vpop.permute.xlu0 %523
        %525 = vrot.lane.b32.xlu0 %v494, 17
        %v526 = vpop.permute.xlu0 %525
        %527 = vrot.lane.b32.xlu0 %v495, 17
        %v528 = vpop.permute.xlu0 %527
        %529 = vrot.lane.b32.xlu0 %v496, 17
        %v530 = vpop.permute.xlu0 %529
        %531 = vrot.lane.b32.xlu0 %v497, 17
        %v532 = vpop.permute.xlu0 %531
        %533 = vrot.lane.b32.xlu0 %v498, 17
        %v534 = vpop.permute.xlu0 %533
        %535 = vrot.lane.b32.xlu0 %v499, 17
        %v536 = vpop.permute.xlu0 %535
        %537 = vrot.lane.b32.xlu0 %v500, 17
        %v538 = vpop.permute.xlu0 %537
        %539 = vrot.lane.b32.xlu0 %v501, 17
        %v540 = vpop.permute.xlu0 %539
        %541 = vrot.lane.b32.xlu0 %v502, 17
        %v542 = vpop.permute.xlu0 %541
        %543 = vrot.lane.b32.xlu0 %v503, 17
        %v544 = vpop.permute.xlu0 %543
        %545 = vrot.lane.b32.xlu0 %v504, 17
        %v546 = vpop.permute.xlu0 %545
        %547 = vrot.lane.b32.xlu0 %v484, 17
        %v548 = vpop.permute.xlu0 %547
        %549 = vrot.lane.b32.xlu0 %v490, 17
        %v550 = vpop.permute.xlu0 %549
        %551 = vrot.lane.b32.xlu0 %v491, 17
        %v552 = vpop.permute.xlu0 %551
        %v553 = vsel %vm368, %v524, %v526
        %v554 = vsel %vm368, %v526, %v528
        %v555 = vsel %vm368, %v530, %v532
        %v556 = vsel %vm368, %v532, %v534
        %v557 = vsel %vm368, %v536, %v538
        %v558 = vsel %vm368, %v538, %v540
        %v559 = vsel %vm368, %v542, %v544
        %v560 = vsel %vm368, %v544, %v546
        %v561 = vsel %vm368, %v548, %v550
        %v562 = vsel %vm368, %v550, %v552
        %vm571 = vcmask 293888
        %v573 = vsel %vm571, %v505, 0
        %v575 = vsel %vm492, %v561, 0
        %v577 = vsel %vm492, %v562, 0
        %579 = vmatprep.subr.mxu0 0.0
        %580 = vmatpush1.msra.mxu0 0.0
        %581 = vmatprep.subr.mxu0 0.0
        %582 = vmatpush1.msra.mxu0 0.0
        %583 = vmatprep.subr.mxu0 0.0
        %584 = vmatpush1.msra.mxu0 0.0
        %585 = vmatprep.subr.mxu0 0.0
        %586 = vmatpush1.msra.mxu0 0.0
        %587 = vmatprep.subr.mxu0 0.0
        %588 = vmatpush1.msra.mxu0 0.0
        %589 = vmatprep.subr.mxu0 0.0
        %590 = vmatpush1.msra.mxu0 0.0
        %591 = vmatprep.subr.mxu0 0.0
        %592 = vmatpush1.msra.mxu0 0.0
        %593 = vmatprep.subr.mxu0 0.0
        %594 = vmatpush1.msra.mxu0 0.0
        %595 = vmatprep.subr.mxu0 0.0
        %596 = vmatpush1.msra.mxu0 0.0
        %597 = vmatprep.subr.mxu0 0.0
        %598 = vmatpush1.msra.mxu0 0.0
        %599 = vmatprep.subr.mxu0 0.0
        %600 = vmatpush1.msra.mxu0 0.0
        %601 = vmatprep.subr.mxu0 %v577
        %602 = vmatpush1.msra.mxu0 %v575
        %603 = vmatprep.subr.mxu0 %v560
        %604 = vmatpush1.msra.mxu0 %v559
        %605 = vmatprep.subr.mxu0 %v558
        %606 = vmatpush1.msra.mxu0 %v557
        %607 = vmatprep.subr.mxu0 %v556
        %608 = vmatpush1.msra.mxu0 %v555
        %609 = vmatprep.subr.mxu0 %v554
        %610 = vmatpush1.msra.mxu0 %v553
        %611 = vmatprep.subr.mxu0 0.0
        %612 = vmatpush2.msra.mxu0 0.0
        %613 = vmatprep.subr.mxu0 0.0
        %614 = vmatpush2.msra.mxu0 0.0
        %615 = vmatprep.subr.mxu0 0.0
        %616 = vmatpush2.msra.mxu0 0.0
        %617 = vmatprep.subr.mxu0 0.0
        %618 = vmatpush2.msra.mxu0 0.0
        %619 = vmatprep.subr.mxu0 0.0
        %620 = vmatpush2.msra.mxu0 0.0
        %621 = vmatprep.subr.mxu0 0.0
        %622 = vmatpush2.msra.mxu0 0.0
        %623 = vmatprep.subr.mxu0 0.0
        %624 = vmatpush2.msra.mxu0 0.0
        %625 = vmatprep.subr.mxu0 0.0
        %626 = vmatpush2.msra.mxu0 0.0
        %627 = vmatprep.subr.mxu0 0.0
        %628 = vmatpush2.msra.mxu0 0.0
        %629 = vmatprep.subr.mxu0 0.0
        %630 = vmatpush2.msra.mxu0 0.0
        %631 = vmatprep.subr.mxu0 0.0
        %632 = vmatpush2.msra.mxu0 0.0
        %633 = vmatprep.subr.mxu0 0.0
        %634 = vmatpush2.msra.mxu0 0.0
        %635 = vmatprep.subr.mxu0 0.0
        %636 = vmatpush2.msra.mxu0 0.0
        %637 = vmatprep.subr.mxu0 0.0
        %638 = vmatpush2.msra.mxu0 0.0
        %639 = vmatprep.subr.mxu0 0.0
        %640 = vmatpush2.msra.mxu0 0.0
        %641 = vmatprep.subr.mxu0 0.0
        %642 = vmatpush2.msra.mxu0 0.0
        %643 = vmatprep.mubr.f32.mxu0 0.0
        %644 = vmatmul.mubr.f32.gmra.mxu0 %v573
        %v645 = vpop.f32.mrf.mxu0
        %v646 = vadd.f32 %v509, %v645
        %v647 = vpop.f32.mrf.mxu0
        %v648 = vadd.f32 %v509, %v647
        %649 = vdwg.mxu0
        %v650 = vmax.f32 %v646, 0.0
        %v651 = vmax.f32 %v648, 0.0
        %v654 = vcombine.low %v650, %v651
        %656 = vst [vmem:[#allocation3 + $0x4] sm:$0xff] %v654
        %v657 = vld [vmem:[#allocation3] sm:$0xff]
        %v658 = vld [vmem:[#allocation3 + $0x8] sm:$0xf]
        %v659 = vmul.f32 %v657, %v318
        %v660 = vmul.f32 %v658, %v316
        %v661 = vmul.f32 %v657, %v330
        %v662 = vmul.f32 %v658, %v328
        %v663 = vmul.f32 %v657, %v339
        %v664 = vmul.f32 %v658, %v337
        %v665 = vld [vmem:[#allocation3 + $0x4] sm:$0xff]
        %v666 = vld [vmem:[#allocation3 + $0x4] sm:$0xff]
        %v667 = vld [vmem:[#allocation3 + $0xc] sm:$0xf]
        %v668 = vmul.f32 %v666, %v351
        %v669 = vmul.f32 %v667, %v349
        %v670 = vmul.f32 %v666, %v360
        %v671 = vmul.f32 %v667, %v358
        %v672 = vmul.f32 %v666, %v369
        %v673 = vmul.f32 %v667, %v367
        %v675 = vcombine.high %v659, %v659
        %v679 = vcombine.low %v657, %v657
        %v680 = vcombine.low %v658, %v658
        %681 = vrot.lane.b32.xlu0 %v679, 127
        %v682 = vpop.permute.xlu0 %681
        %683 = vrot.lane.b32.xlu0 %v657, 127
        %v684 = vpop.permute.xlu0 %683
        %685 = vrot.lane.b32.xlu0 %v680, 127
        %v686 = vpop.permute.xlu0 %685
        %v687 = vsel %vm338, %v682, %v684
        %v688 = vsel %vm338, %v684, %v686
        %v694 = vcombine.high %v661, %v661
        %695 = vrot.lane.b32.xlu0 %v661, 126
        %v696 = vpop.permute.xlu0 %695
        %697 = vrot.lane.b32.xlu0 %v694, 126
        %v698 = vpop.permute.xlu0 %697
        %699 = vrot.lane.b32.xlu0 %v662, 126
        %v700 = vpop.permute.xlu0 %699
        %v701 = vsel %vm401, %v696, %v698
        %v702 = vsel %vm401, %v698, %v700
        %v708 = vcombine.low %v663, %v663
        %v709 = vcombine.low %v664, %v664
        %710 = vrot.lane.b32.xlu0 %v708, 112
        %v711 = vpop.permute.xlu0 %710
        %712 = vrot.lane.b32.xlu0 %v663, 112
        %v713 = vpop.permute.xlu0 %712
        %714 = vrot.lane.b32.xlu0 %v709, 112
        %v715 = vpop.permute.xlu0 %714
        %v716 = vsel %vm417, %v711, %v713
        %v717 = vsel %vm417, %v713, %v715
        %v722 = vcombine.high %v665, %v665
        %723 = vrot.lane.b32.xlu0 %v665, 111
        %v724 = vpop.permute.xlu0 %723
        %725 = vrot.lane.b32.xlu0 %v722, 111
        %v726 = vpop.permute.xlu0 %725
        %v727 = vsel %vm317, %v724, %v726
        %v733 = vcombine.low %v668, %v668
        %v734 = vcombine.low %v669, %v669
        %735 = vrot.lane.b32.xlu0 %v733, 110
        %v736 = vpop.permute.xlu0 %735
        %737 = vrot.lane.b32.xlu0 %v668, 110
        %v738 = vpop.permute.xlu0 %737
        %739 = vrot.lane.b32.xlu0 %v734, 110
        %v740 = vpop.permute.xlu0 %739
        %v741 = vsel %vm443, %v736, %v738
        %v742 = vsel %vm443, %v738, %v740
        %v748 = vcombine.high %v670, %v670
        %749 = vrot.lane.b32.xlu0 %v670, 96
        %v750 = vpop.permute.xlu0 %749
        %751 = vrot.lane.b32.xlu0 %v748, 96
        %v752 = vpop.permute.xlu0 %751
        %753 = vrot.lane.b32.xlu0 %v671, 96
        %v754 = vpop.permute.xlu0 %753
        %v755 = vsel %vm458, %v750, %v752
        %v756 = vsel %vm458, %v752, %v754
        %v762 = vcombine.low %v666, %v666
        %v763 = vcombine.low %v667, %v667
        %764 = vrot.lane.b32.xlu0 %v762, 95
        %v765 = vpop.permute.xlu0 %764
        %766 = vrot.lane.b32.xlu0 %v666, 95
        %v767 = vpop.permute.xlu0 %766
        %768 = vrot.lane.b32.xlu0 %v763, 95
        %v769 = vpop.permute.xlu0 %768
        %v770 = vsel %vm474, %v765, %v767
        %v771 = vsel %vm474, %v767, %v769
        %v777 = vcombine.high %v672, %v672
        %778 = vrot.lane.b32.xlu0 %v672, 94
        %v779 = vpop.permute.xlu0 %778
        %780 = vrot.lane.b32.xlu0 %v777, 94
        %v781 = vpop.permute.xlu0 %780
        %782 = vrot.lane.b32.xlu0 %v673, 94
        %v783 = vpop.permute.xlu0 %782
        %v784 = vsel %vm489, %v779, %v781
        %v785 = vsel %vm489, %v781, %v783
        %v786 = vsel %vm492, %v659, %v687
        %v787 = vsel %vm492, %v675, %v688
        %v788 = vsel %vm492, %v660, %v686
        %v789 = vsel %vm492, %v701, %v716
        %v790 = vsel %vm492, %v702, %v717
        %v791 = vsel %vm492, %v700, %v715
        %v792 = vsel %vm492, %v724, %v736
        %v793 = vsel %vm492, %v727, %v741
        %v794 = vsel %vm492, %v726, %v742
        %v795 = vsel %vm492, %v750, %v765
        %v796 = vsel %vm492, %v755, %v770
        %v797 = vsel %vm492, %v756, %v771
        %v798 = vld [vmem:[#allocation7] sm:$0xff]
        %800 = vset.pattern.permute.xlu0 0
        %801 = vperm.xlu0 %800, %v300
        %v802 = vpop.permute.xlu0 %801
        %816 = vrot.lane.b32.xlu0 %v786, 17
        %v817 = vpop.permute.xlu0 %816
        %818 = vrot.lane.b32.xlu0 %v787, 17
        %v819 = vpop.permute.xlu0 %818
        %820 = vrot.lane.b32.xlu0 %v788, 17
        %v821 = vpop.permute.xlu0 %820
        %822 = vrot.lane.b32.xlu0 %v789, 17
        %v823 = vpop.permute.xlu0 %822
        %824 = vrot.lane.b32.xlu0 %v790, 17
        %v825 = vpop.permute.xlu0 %824
        %826 = vrot.lane.b32.xlu0 %v791, 17
        %v827 = vpop.permute.xlu0 %826
        %828 = vrot.lane.b32.xlu0 %v792, 17
        %v829 = vpop.permute.xlu0 %828
        %830 = vrot.lane.b32.xlu0 %v793, 17
        %v831 = vpop.permute.xlu0 %830
        %832 = vrot.lane.b32.xlu0 %v794, 17
        %v833 = vpop.permute.xlu0 %832
        %834 = vrot.lane.b32.xlu0 %v795, 17
        %v835 = vpop.permute.xlu0 %834
        %836 = vrot.lane.b32.xlu0 %v796, 17
        %v837 = vpop.permute.xlu0 %836
        %838 = vrot.lane.b32.xlu0 %v797, 17
        %v839 = vpop.permute.xlu0 %838
        %840 = vrot.lane.b32.xlu0 %v779, 17
        %v841 = vpop.permute.xlu0 %840
        %842 = vrot.lane.b32.xlu0 %v784, 17
        %v843 = vpop.permute.xlu0 %842
        %844 = vrot.lane.b32.xlu0 %v785, 17
        %v845 = vpop.permute.xlu0 %844
        %v846 = vsel %vm368, %v817, %v819
        %v847 = vsel %vm368, %v819, %v821
        %v848 = vsel %vm368, %v823, %v825
        %v849 = vsel %vm368, %v825, %v827
        %v850 = vsel %vm368, %v829, %v831
        %v851 = vsel %vm368, %v831, %v833
        %v852 = vsel %vm368, %v835, %v837
        %v853 = vsel %vm368, %v837, %v839
        %v854 = vsel %vm368, %v841, %v843
        %v855 = vsel %vm368, %v843, %v845
        %v865 = vsel %vm571, %v798, 0
        %v867 = vsel %vm492, %v854, 0
        %v869 = vsel %vm492, %v855, 0
        %871 = vmatprep.subr.mxu0 0.0
        %872 = vmatpush1.msra.mxu0 0.0
        %873 = vmatprep.subr.mxu0 0.0
        %874 = vmatpush1.msra.mxu0 0.0
        %875 = vmatprep.subr.mxu0 0.0
        %876 = vmatpush1.msra.mxu0 0.0
        %877 = vmatprep.subr.mxu0 0.0
        %878 = vmatpush1.msra.mxu0 0.0
        %879 = vmatprep.subr.mxu0 0.0
        %880 = vmatpush1.msra.mxu0 0.0
        %881 = vmatprep.subr.mxu0 0.0
        %882 = vmatpush1.msra.mxu0 0.0
        %883 = vmatprep.subr.mxu0 0.0
        %884 = vmatpush1.msra.mxu0 0.0
        %885 = vmatprep.subr.mxu0 0.0
        %886 = vmatpush1.msra.mxu0 0.0
        %887 = vmatprep.subr.mxu0 0.0
        %888 = vmatpush1.msra.mxu0 0.0
        %889 = vmatprep.subr.mxu0 0.0
        %890 = vmatpush1.msra.mxu0 0.0
        %891 = vmatprep.subr.mxu0 0.0
        %892 = vmatpush1.msra.mxu0 0.0
        %893 = vmatprep.subr.mxu0 %v869
        %894 = vmatpush1.msra.mxu0 %v867
        %895 = vmatprep.subr.mxu0 %v853
        %896 = vmatpush1.msra.mxu0 %v852
        %897 = vmatprep.subr.mxu0 %v851
        %898 = vmatpush1.msra.mxu0 %v850
        %899 = vmatprep.subr.mxu0 %v849
        %900 = vmatpush1.msra.mxu0 %v848
        %901 = vmatprep.subr.mxu0 %v847
        %902 = vmatpush1.msra.mxu0 %v846
        %903 = vmatprep.subr.mxu0 0.0
        %904 = vmatpush2.msra.mxu0 0.0
        %905 = vmatprep.subr.mxu0 0.0
        %906 = vmatpush2.msra.mxu0 0.0
        %907 = vmatprep.subr.mxu0 0.0
        %908 = vmatpush2.msra.mxu0 0.0
        %909 = vmatprep.subr.mxu0 0.0
        %910 = vmatpush2.msra.mxu0 0.0
        %911 = vmatprep.subr.mxu0 0.0
        %912 = vmatpush2.msra.mxu0 0.0
        %913 = vmatprep.subr.mxu0 0.0
        %914 = vmatpush2.msra.mxu0 0.0
        %915 = vmatprep.subr.mxu0 0.0
        %916 = vmatpush2.msra.mxu0 0.0
        %917 = vmatprep.subr.mxu0 0.0
        %918 = vmatpush2.msra.mxu0 0.0
        %919 = vmatprep.subr.mxu0 0.0
        %920 = vmatpush2.msra.mxu0 0.0
        %921 = vmatprep.subr.mxu0 0.0
        %922 = vmatpush2.msra.mxu0 0.0
        %923 = vmatprep.subr.mxu0 0.0
        %924 = vmatpush2.msra.mxu0 0.0
        %925 = vmatprep.subr.mxu0 0.0
        %926 = vmatpush2.msra.mxu0 0.0
        %927 = vmatprep.subr.mxu0 0.0
        %928 = vmatpush2.msra.mxu0 0.0
        %929 = vmatprep.subr.mxu0 0.0
        %930 = vmatpush2.msra.mxu0 0.0
        %931 = vmatprep.subr.mxu0 0.0
        %932 = vmatpush2.msra.mxu0 0.0
        %933 = vmatprep.subr.mxu0 0.0
        %934 = vmatpush2.msra.mxu0 0.0
        %935 = vmatprep.mubr.f32.mxu0 0.0
        %936 = vmatmul.mubr.f32.gmra.mxu0 %v865
        %v937 = vpop.f32.mrf.mxu0
        %v938 = vadd.f32 %v802, %v937
        %v939 = vpop.f32.mrf.mxu0
        %v940 = vadd.f32 %v802, %v939
        %941 = vdwg.mxu0
        %v942 = vmax.f32 %v938, 0.0
        %v943 = vmax.f32 %v940, 0.0
        %944 = vst [vmem:[%s254] sm:$0xff] %v942
        %945 = vst [vmem:[%s254 + $0x8] sm:$0xff] %v943
        %947 = vrot.lane.b32.xlu0 %v942, 126
        %v948 = vpop.permute.xlu0 %947
        %950 = vrot.lane.b32.xlu0 %v942, 124
        %v951 = vpop.permute.xlu0 %950
        %953 = vrot.lane.b32.xlu0 %v942, 122
        %v954 = vpop.permute.xlu0 %953
        %956 = vrot.lane.b32.xlu0 %v942, 120
        %v957 = vpop.permute.xlu0 %956
        %959 = vrot.lane.b32.xlu0 %v942, 118
        %v960 = vpop.permute.xlu0 %959
        %962 = vrot.lane.b32.xlu0 %v942, 116
        %v963 = vpop.permute.xlu0 %962
        %965 = vrot.lane.b32.xlu0 %v942, 114
        %v966 = vpop.permute.xlu0 %965
        %968 = vrot.lane.b32.xlu0 %v942, 112
        %v969 = vpop.permute.xlu0 %968
        %971 = vrot.lane.b32.xlu0 %v942, 110
        %v972 = vpop.permute.xlu0 %971
        %974 = vrot.lane.b32.xlu0 %v942, 108
        %v975 = vpop.permute.xlu0 %974
        %977 = vrot.lane.b32.xlu0 %v942, 106
        %v978 = vpop.permute.xlu0 %977
        %980 = vrot.lane.b32.xlu0 %v942, 104
        %v981 = vpop.permute.xlu0 %980
        %983 = vrot.lane.b32.xlu0 %v942, 102
        %v984 = vpop.permute.xlu0 %983
        %986 = vrot.lane.b32.xlu0 %v942, 100
        %v987 = vpop.permute.xlu0 %986
        %989 = vrot.lane.b32.xlu0 %v942, 98
        %v990 = vpop.permute.xlu0 %989
        %992 = vrot.lane.b32.xlu0 %v942, 96
        %v993 = vpop.permute.xlu0 %992
        %995 = vrot.lane.b32.xlu0 %v942, 94
        %v996 = vpop.permute.xlu0 %995
        %998 = vrot.lane.b32.xlu0 %v942, 92
        %v999 = vpop.permute.xlu0 %998
        %1001 = vrot.lane.b32.xlu0 %v942, 90
        %v1002 = vpop.permute.xlu0 %1001
        %1004 = vrot.lane.b32.xlu0 %v942, 88
        %v1005 = vpop.permute.xlu0 %1004
        %1007 = vrot.lane.b32.xlu0 %v942, 86
        %v1008 = vpop.permute.xlu0 %1007
        %1010 = vrot.lane.b32.xlu0 %v942, 84
        %v1011 = vpop.permute.xlu0 %1010
        %1013 = vrot.lane.b32.xlu0 %v942, 82
        %v1014 = vpop.permute.xlu0 %1013
        %1016 = vrot.lane.b32.xlu0 %v942, 80
        %v1017 = vpop.permute.xlu0 %1016
        %1019 = vrot.lane.b32.xlu0 %v942, 78
        %v1020 = vpop.permute.xlu0 %1019
        %1022 = vrot.lane.b32.xlu0 %v942, 76
        %v1023 = vpop.permute.xlu0 %1022
        %1025 = vrot.lane.b32.xlu0 %v942, 74
        %v1026 = vpop.permute.xlu0 %1025
        %1028 = vrot.lane.b32.xlu0 %v942, 72
        %v1029 = vpop.permute.xlu0 %1028
        %1031 = vrot.lane.b32.xlu0 %v942, 70
        %v1032 = vpop.permute.xlu0 %1031
        %1034 = vrot.lane.b32.xlu0 %v942, 68
        %v1035 = vpop.permute.xlu0 %1034
        %1037 = vrot.lane.b32.xlu0 %v942, 66
        %v1038 = vpop.permute.xlu0 %1037
        %1040 = vrot.lane.b32.xlu0 %v942, 64
        %v1041 = vpop.permute.xlu0 %1040
        %1043 = vrot.lane.b32.xlu0 %v942, 62
        %v1044 = vpop.permute.xlu0 %1043
        %1046 = vrot.lane.b32.xlu0 %v942, 60
        %v1047 = vpop.permute.xlu0 %1046
        %1049 = vrot.lane.b32.xlu0 %v942, 58
        %v1050 = vpop.permute.xlu0 %1049
        %1052 = vrot.lane.b32.xlu0 %v942, 56
        %v1053 = vpop.permute.xlu0 %1052
        %1055 = vrot.lane.b32.xlu0 %v942, 54
        %v1056 = vpop.permute.xlu0 %1055
        %1058 = vrot.lane.b32.xlu0 %v942, 52
        %v1059 = vpop.permute.xlu0 %1058
        %1061 = vrot.lane.b32.xlu0 %v942, 50
        %v1062 = vpop.permute.xlu0 %1061
        %1064 = vrot.lane.b32.xlu0 %v942, 48
        %v1065 = vpop.permute.xlu0 %1064
        %1067 = vrot.lane.b32.xlu0 %v942, 46
        %v1068 = vpop.permute.xlu0 %1067
        %1070 = vrot.lane.b32.xlu0 %v942, 44
        %v1071 = vpop.permute.xlu0 %1070
        %1073 = vrot.lane.b32.xlu0 %v942, 42
        %v1074 = vpop.permute.xlu0 %1073
        %1076 = vrot.lane.b32.xlu0 %v942, 40
        %v1077 = vpop.permute.xlu0 %1076
        %1079 = vrot.lane.b32.xlu0 %v942, 38
        %v1080 = vpop.permute.xlu0 %1079
        %1082 = vrot.lane.b32.xlu0 %v942, 36
        %v1083 = vpop.permute.xlu0 %1082
        %1085 = vrot.lane.b32.xlu0 %v942, 34
        %v1086 = vpop.permute.xlu0 %1085
        %1088 = vrot.lane.b32.xlu0 %v942, 32
        %v1089 = vpop.permute.xlu0 %1088
        %1091 = vrot.lane.b32.xlu0 %v942, 30
        %v1092 = vpop.permute.xlu0 %1091
        %1094 = vrot.lane.b32.xlu0 %v942, 28
        %v1095 = vpop.permute.xlu0 %1094
        %1097 = vrot.lane.b32.xlu0 %v942, 26
        %v1098 = vpop.permute.xlu0 %1097
        %1100 = vrot.lane.b32.xlu0 %v942, 24
        %v1101 = vpop.permute.xlu0 %1100
        %1103 = vrot.lane.b32.xlu0 %v942, 22
        %v1104 = vpop.permute.xlu0 %1103
        %1106 = vrot.lane.b32.xlu0 %v942, 20
        %v1107 = vpop.permute.xlu0 %1106
        %1109 = vrot.lane.b32.xlu0 %v942, 18
        %v1110 = vpop.permute.xlu0 %1109
        %1112 = vrot.lane.b32.xlu0 %v942, 16
        %v1113 = vpop.permute.xlu0 %1112
        %1115 = vrot.lane.b32.xlu0 %v942, 14
        %v1116 = vpop.permute.xlu0 %1115
        %1118 = vrot.lane.b32.xlu0 %v942, 12
        %v1119 = vpop.permute.xlu0 %1118
        %1121 = vrot.lane.b32.xlu0 %v942, 10
        %v1122 = vpop.permute.xlu0 %1121
        %1124 = vrot.lane.b32.xlu0 %v942, 8
        %v1125 = vpop.permute.xlu0 %1124
        %1127 = vrot.lane.b32.xlu0 %v942, 6
        %v1128 = vpop.permute.xlu0 %1127
        %1130 = vrot.lane.b32.xlu0 %v942, 4
        %v1131 = vpop.permute.xlu0 %1130
        %1133 = vrot.lane.b32.xlu0 %v942, 2
        %v1134 = vpop.permute.xlu0 %1133
        %1137 = vrot.lane.b32.xlu0 %v943, 126
        %v1138 = vpop.permute.xlu0 %1137
        %1140 = vrot.lane.b32.xlu0 %v943, 124
        %v1141 = vpop.permute.xlu0 %1140
        %1143 = vrot.lane.b32.xlu0 %v943, 122
        %v1144 = vpop.permute.xlu0 %1143
        %1146 = vrot.lane.b32.xlu0 %v943, 120
        %v1147 = vpop.permute.xlu0 %1146
        %1149 = vrot.lane.b32.xlu0 %v943, 118
        %v1150 = vpop.permute.xlu0 %1149
        %1152 = vrot.lane.b32.xlu0 %v943, 116
        %v1153 = vpop.permute.xlu0 %1152
        %1155 = vrot.lane.b32.xlu0 %v943, 114
        %v1156 = vpop.permute.xlu0 %1155
        %1158 = vrot.lane.b32.xlu0 %v943, 112
        %v1159 = vpop.permute.xlu0 %1158
        %1161 = vrot.lane.b32.xlu0 %v943, 110
        %v1162 = vpop.permute.xlu0 %1161
        %1164 = vrot.lane.b32.xlu0 %v943, 108
        %v1165 = vpop.permute.xlu0 %1164
        %1167 = vrot.lane.b32.xlu0 %v943, 106
        %v1168 = vpop.permute.xlu0 %1167
        %1170 = vrot.lane.b32.xlu0 %v943, 104
        %v1171 = vpop.permute.xlu0 %1170
        %1173 = vrot.lane.b32.xlu0 %v943, 102
        %v1174 = vpop.permute.xlu0 %1173
        %1176 = vrot.lane.b32.xlu0 %v943, 100
        %v1177 = vpop.permute.xlu0 %1176
        %1179 = vrot.lane.b32.xlu0 %v943, 98
        %v1180 = vpop.permute.xlu0 %1179
        %1182 = vrot.lane.b32.xlu0 %v943, 96
        %v1183 = vpop.permute.xlu0 %1182
        %1185 = vrot.lane.b32.xlu0 %v943, 94
        %v1186 = vpop.permute.xlu0 %1185
        %1188 = vrot.lane.b32.xlu0 %v943, 92
        %v1189 = vpop.permute.xlu0 %1188
        %1191 = vrot.lane.b32.xlu0 %v943, 90
        %v1192 = vpop.permute.xlu0 %1191
        %1194 = vrot.lane.b32.xlu0 %v943, 88
        %v1195 = vpop.permute.xlu0 %1194
        %1197 = vrot.lane.b32.xlu0 %v943, 86
        %v1198 = vpop.permute.xlu0 %1197
        %1200 = vrot.lane.b32.xlu0 %v943, 84
        %v1201 = vpop.permute.xlu0 %1200
        %1203 = vrot.lane.b32.xlu0 %v943, 82
        %v1204 = vpop.permute.xlu0 %1203
        %1206 = vrot.lane.b32.xlu0 %v943, 80
        %v1207 = vpop.permute.xlu0 %1206
        %1209 = vrot.lane.b32.xlu0 %v943, 78
        %v1210 = vpop.permute.xlu0 %1209
        %1212 = vrot.lane.b32.xlu0 %v943, 76
        %v1213 = vpop.permute.xlu0 %1212
        %1215 = vrot.lane.b32.xlu0 %v943, 74
        %v1216 = vpop.permute.xlu0 %1215
        %1218 = vrot.lane.b32.xlu0 %v943, 72
        %v1219 = vpop.permute.xlu0 %1218
        %1221 = vrot.lane.b32.xlu0 %v943, 70
        %v1222 = vpop.permute.xlu0 %1221
        %1224 = vrot.lane.b32.xlu0 %v943, 68
        %v1225 = vpop.permute.xlu0 %1224
        %1227 = vrot.lane.b32.xlu0 %v943, 66
        %v1228 = vpop.permute.xlu0 %1227
        %1230 = vrot.lane.b32.xlu0 %v943, 64
        %v1231 = vpop.permute.xlu0 %1230
        %1233 = vrot.lane.b32.xlu0 %v943, 62
        %v1234 = vpop.permute.xlu0 %1233
        %1236 = vrot.lane.b32.xlu0 %v943, 60
        %v1237 = vpop.permute.xlu0 %1236
        %1239 = vrot.lane.b32.xlu0 %v943, 58
        %v1240 = vpop.permute.xlu0 %1239
        %1242 = vrot.lane.b32.xlu0 %v943, 56
        %v1243 = vpop.permute.xlu0 %1242
        %1245 = vrot.lane.b32.xlu0 %v943, 54
        %v1246 = vpop.permute.xlu0 %1245
        %1248 = vrot.lane.b32.xlu0 %v943, 52
        %v1249 = vpop.permute.xlu0 %1248
        %1251 = vrot.lane.b32.xlu0 %v943, 50
        %v1252 = vpop.permute.xlu0 %1251
        %1254 = vrot.lane.b32.xlu0 %v943, 48
        %v1255 = vpop.permute.xlu0 %1254
        %1257 = vrot.lane.b32.xlu0 %v943, 46
        %v1258 = vpop.permute.xlu0 %1257
        %1260 = vrot.lane.b32.xlu0 %v943, 44
        %v1261 = vpop.permute.xlu0 %1260
        %1263 = vrot.lane.b32.xlu0 %v943, 42
        %v1264 = vpop.permute.xlu0 %1263
        %1266 = vrot.lane.b32.xlu0 %v943, 40
        %v1267 = vpop.permute.xlu0 %1266
        %1269 = vrot.lane.b32.xlu0 %v943, 38
        %v1270 = vpop.permute.xlu0 %1269
        %1272 = vrot.lane.b32.xlu0 %v943, 36
        %v1273 = vpop.permute.xlu0 %1272
        %1275 = vrot.lane.b32.xlu0 %v943, 34
        %v1276 = vpop.permute.xlu0 %1275
        %1278 = vrot.lane.b32.xlu0 %v943, 32
        %v1279 = vpop.permute.xlu0 %1278
        %1281 = vrot.lane.b32.xlu0 %v943, 30
        %v1282 = vpop.permute.xlu0 %1281
        %1284 = vrot.lane.b32.xlu0 %v943, 28
        %v1285 = vpop.permute.xlu0 %1284
        %1287 = vrot.lane.b32.xlu0 %v943, 26
        %v1288 = vpop.permute.xlu0 %1287
        %1290 = vrot.lane.b32.xlu0 %v943, 24
        %v1291 = vpop.permute.xlu0 %1290
        %1293 = vrot.lane.b32.xlu0 %v943, 22
        %v1294 = vpop.permute.xlu0 %1293
        %1296 = vrot.lane.b32.xlu0 %v943, 20
        %v1297 = vpop.permute.xlu0 %1296
        %1299 = vrot.lane.b32.xlu0 %v943, 18
        %v1300 = vpop.permute.xlu0 %1299
        %1302 = vrot.lane.b32.xlu0 %v943, 16
        %v1303 = vpop.permute.xlu0 %1302
        %1305 = vrot.lane.b32.xlu0 %v943, 14
        %v1306 = vpop.permute.xlu0 %1305
        %1308 = vrot.lane.b32.xlu0 %v943, 12
        %v1309 = vpop.permute.xlu0 %1308
        %1311 = vrot.lane.b32.xlu0 %v943, 10
        %v1312 = vpop.permute.xlu0 %1311
        %1314 = vrot.lane.b32.xlu0 %v943, 8
        %v1315 = vpop.permute.xlu0 %1314
        %1317 = vrot.lane.b32.xlu0 %v943, 6
        %v1318 = vpop.permute.xlu0 %1317
        %1320 = vrot.lane.b32.xlu0 %v943, 4
        %v1321 = vpop.permute.xlu0 %1320
        %1323 = vrot.lane.b32.xlu0 %v943, 2
        %v1324 = vpop.permute.xlu0 %1323
        %v1326 = vcombine.low %v942, %v951
        %v1327 = vcombine.high %v942, %v951
        %v1329 = vunpack.c.l.s4 1983009808
        %v1330 = vunpack.c.0.s8 %v1329
        %v1331 = vlaneseq
        %v1332 = vshrl.u32 %v1331, 7
        %v1333 = vsub.s32 %v1330, %v1332
        %v1334 = vrot.slane %v1326, %v1333
        %v1336 = vunpack.c.l.s4 1983009808
        %v1337 = vunpack.c.0.s8 %v1336
        %v1338 = vlaneseq
        %v1339 = vshrl.u32 %v1338, 7
        %v1340 = vsub.s32 %v1337, %v1339
        %v1341 = vrot.slane %v1327, %v1340
        %v1342 = vcombine.low %v948, %v954
        %v1343 = vcombine.high %v948, %v954
        %v1345 = vunpack.c.l.s4 1983009808
        %v1346 = vunpack.c.0.s8 %v1345
        %v1347 = vlaneseq
        %v1348 = vshrl.u32 %v1347, 7
        %v1349 = vsub.s32 %v1346, %v1348
        %v1350 = vrot.slane %v1342, %v1349
        %v1352 = vunpack.c.l.s4 1983009808
        %v1353 = vunpack.c.0.s8 %v1352
        %v1354 = vlaneseq
        %v1355 = vshrl.u32 %v1354, 7
        %v1356 = vsub.s32 %v1353, %v1355
        %v1357 = vrot.slane %v1343, %v1356
        %v1358 = vcombine.low %v957, %v963
        %v1359 = vcombine.high %v957, %v963
        %v1361 = vunpack.c.l.s4 1983009808
        %v1362 = vunpack.c.0.s8 %v1361
        %v1363 = vlaneseq
        %v1364 = vshrl.u32 %v1363, 7
        %v1365 = vsub.s32 %v1362, %v1364
        %v1366 = vrot.slane %v1358, %v1365
        %v1368 = vunpack.c.l.s4 1983009808
        %v1369 = vunpack.c.0.s8 %v1368
        %v1370 = vlaneseq
        %v1371 = vshrl.u32 %v1370, 7
        %v1372 = vsub.s32 %v1369, %v1371
        %v1373 = vrot.slane %v1359, %v1372
        %v1374 = vcombine.low %v960, %v966
        %v1375 = vcombine.high %v960, %v966
        %v1377 = vunpack.c.l.s4 1983009808
        %v1378 = vunpack.c.0.s8 %v1377
        %v1379 = vlaneseq
        %v1380 = vshrl.u32 %v1379, 7
        %v1381 = vsub.s32 %v1378, %v1380
        %v1382 = vrot.slane %v1374, %v1381
        %v1384 = vunpack.c.l.s4 1983009808
        %v1385 = vunpack.c.0.s8 %v1384
        %v1386 = vlaneseq
        %v1387 = vshrl.u32 %v1386, 7
        %v1388 = vsub.s32 %v1385, %v1387
        %v1389 = vrot.slane %v1375, %v1388
        %v1390 = vcombine.low %v1334, %v1350
        %v1391 = vcombine.high %v1334, %v1350
        %v1393 = vunpack.c.l.s4 1934713408
        %v1394 = vunpack.c.0.s8 %v1393
        %v1395 = vlaneseq
        %v1396 = vshrl.u32 %v1395, 7
        %v1397 = vsub.s32 %v1394, %v1396
        %v1398 = vrot.slane %v1390, %v1397
        %v1400 = vunpack.c.l.s4 1934713408
        %v1401 = vunpack.c.0.s8 %v1400
        %v1402 = vlaneseq
        %v1403 = vshrl.u32 %v1402, 7
        %v1404 = vsub.s32 %v1401, %v1403
        %v1405 = vrot.slane %v1391, %v1404
        %v1406 = vcombine.low %v1341, %v1357
        %v1407 = vcombine.high %v1341, %v1357
        %v1409 = vunpack.c.l.s4 1934713408
        %v1410 = vunpack.c.0.s8 %v1409
        %v1411 = vlaneseq
        %v1412 = vshrl.u32 %v1411, 7
        %v1413 = vsub.s32 %v1410, %v1412
        %v1414 = vrot.slane %v1406, %v1413
        %v1416 = vunpack.c.l.s4 1934713408
        %v1417 = vunpack.c.0.s8 %v1416
        %v1418 = vlaneseq
        %v1419 = vshrl.u32 %v1418, 7
        %v1420 = vsub.s32 %v1417, %v1419
        %v1421 = vrot.slane %v1407, %v1420
        %v1422 = vcombine.low %v1366, %v1382
        %v1423 = vcombine.high %v1366, %v1382
        %v1425 = vunpack.c.l.s4 1934713408
        %v1426 = vunpack.c.0.s8 %v1425
        %v1427 = vlaneseq
        %v1428 = vshrl.u32 %v1427, 7
        %v1429 = vsub.s32 %v1426, %v1428
        %v1430 = vrot.slane %v1422, %v1429
        %v1432 = vunpack.c.l.s4 1934713408
        %v1433 = vunpack.c.0.s8 %v1432
        %v1434 = vlaneseq
        %v1435 = vshrl.u32 %v1434, 7
        %v1436 = vsub.s32 %v1433, %v1435
        %v1437 = vrot.slane %v1423, %v1436
        %v1438 = vcombine.low %v1373, %v1389
        %v1439 = vcombine.high %v1373, %v1389
        %v1441 = vunpack.c.l.s4 1934713408
        %v1442 = vunpack.c.0.s8 %v1441
        %v1443 = vlaneseq
        %v1444 = vshrl.u32 %v1443, 7
        %v1445 = vsub.s32 %v1442, %v1444
        %v1446 = vrot.slane %v1438, %v1445
        %v1448 = vunpack.c.l.s4 1934713408
        %v1449 = vunpack.c.0.s8 %v1448
        %v1450 = vlaneseq
        %v1451 = vshrl.u32 %v1450, 7
        %v1452 = vsub.s32 %v1449, %v1451
        %v1453 = vrot.slane %v1439, %v1452
        %v1454 = vcombine.low %v1398, %v1430
        %v1455 = vcombine.high %v1398, %v1430
        %v1456 = vcombine.low %v1405, %v1437
        %v1457 = vcombine.high %v1405, %v1437
        %v1458 = vcombine.low %v1414, %v1446
        %v1459 = vcombine.high %v1414, %v1446
        %v1460 = vcombine.low %v1421, %v1453
        %v1461 = vcombine.high %v1421, %v1453
        %v1462 = vcombine.low %v969, %v975
        %v1463 = vcombine.high %v969, %v975
        %v1465 = vunpack.c.l.s4 1983009808
        %v1466 = vunpack.c.0.s8 %v1465
        %v1467 = vlaneseq
        %v1468 = vshrl.u32 %v1467, 7
        %v1469 = vsub.s32 %v1466, %v1468
        %v1470 = vrot.slane %v1462, %v1469
        %v1472 = vunpack.c.l.s4 1983009808
        %v1473 = vunpack.c.0.s8 %v1472
        %v1474 = vlaneseq
        %v1475 = vshrl.u32 %v1474, 7
        %v1476 = vsub.s32 %v1473, %v1475
        %v1477 = vrot.slane %v1463, %v1476
        %v1478 = vcombine.low %v972, %v978
        %v1479 = vcombine.high %v972, %v978
        %v1481 = vunpack.c.l.s4 1983009808
        %v1482 = vunpack.c.0.s8 %v1481
        %v1483 = vlaneseq
        %v1484 = vshrl.u32 %v1483, 7
        %v1485 = vsub.s32 %v1482, %v1484
        %v1486 = vrot.slane %v1478, %v1485
        %v1488 = vunpack.c.l.s4 1983009808
        %v1489 = vunpack.c.0.s8 %v1488
        %v1490 = vlaneseq
        %v1491 = vshrl.u32 %v1490, 7
        %v1492 = vsub.s32 %v1489, %v1491
        %v1493 = vrot.slane %v1479, %v1492
        %v1494 = vcombine.low %v981, %v987
        %v1495 = vcombine.high %v981, %v987
        %v1497 = vunpack.c.l.s4 1983009808
        %v1498 = vunpack.c.0.s8 %v1497
        %v1499 = vlaneseq
        %v1500 = vshrl.u32 %v1499, 7
        %v1501 = vsub.s32 %v1498, %v1500
        %v1502 = vrot.slane %v1494, %v1501
        %v1504 = vunpack.c.l.s4 1983009808
        %v1505 = vunpack.c.0.s8 %v1504
        %v1506 = vlaneseq
        %v1507 = vshrl.u32 %v1506, 7
        %v1508 = vsub.s32 %v1505, %v1507
        %v1509 = vrot.slane %v1495, %v1508
        %v1510 = vcombine.low %v984, %v990
        %v1511 = vcombine.high %v984, %v990
        %v1513 = vunpack.c.l.s4 1983009808
        %v1514 = vunpack.c.0.s8 %v1513
        %v1515 = vlaneseq
        %v1516 = vshrl.u32 %v1515, 7
        %v1517 = vsub.s32 %v1514, %v1516
        %v1518 = vrot.slane %v1510, %v1517
        %v1520 = vunpack.c.l.s4 1983009808
        %v1521 = vunpack.c.0.s8 %v1520
        %v1522 = vlaneseq
        %v1523 = vshrl.u32 %v1522, 7
        %v1524 = vsub.s32 %v1521, %v1523
        %v1525 = vrot.slane %v1511, %v1524
        %v1526 = vcombine.low %v1470, %v1486
        %v1527 = vcombine.high %v1470, %v1486
        %v1529 = vunpack.c.l.s4 1934713408
        %v1530 = vunpack.c.0.s8 %v1529
        %v1531 = vlaneseq
        %v1532 = vshrl.u32 %v1531, 7
        %v1533 = vsub.s32 %v1530, %v1532
        %v1534 = vrot.slane %v1526, %v1533
        %v1536 = vunpack.c.l.s4 1934713408
        %v1537 = vunpack.c.0.s8 %v1536
        %v1538 = vlaneseq
        %v1539 = vshrl.u32 %v1538, 7
        %v1540 = vsub.s32 %v1537, %v1539
        %v1541 = vrot.slane %v1527, %v1540
        %v1542 = vcombine.low %v1477, %v1493
        %v1543 = vcombine.high %v1477, %v1493
        %v1545 = vunpack.c.l.s4 1934713408
        %v1546 = vunpack.c.0.s8 %v1545
        %v1547 = vlaneseq
        %v1548 = vshrl.u32 %v1547, 7
        %v1549 = vsub.s32 %v1546, %v1548
        %v1550 = vrot.slane %v1542, %v1549
        %v1552 = vunpack.c.l.s4 1934713408
        %v1553 = vunpack.c.0.s8 %v1552
        %v1554 = vlaneseq
        %v1555 = vshrl.u32 %v1554, 7
        %v1556 = vsub.s32 %v1553, %v1555
        %v1557 = vrot.slane %v1543, %v1556
        %v1558 = vcombine.low %v1502, %v1518
        %v1559 = vcombine.high %v1502, %v1518
        %v1561 = vunpack.c.l.s4 1934713408
        %v1562 = vunpack.c.0.s8 %v1561
        %v1563 = vlaneseq
        %v1564 = vshrl.u32 %v1563, 7
        %v1565 = vsub.s32 %v1562, %v1564
        %v1566 = vrot.slane %v1558, %v1565
        %v1568 = vunpack.c.l.s4 1934713408
        %v1569 = vunpack.c.0.s8 %v1568
        %v1570 = vlaneseq
        %v1571 = vshrl.u32 %v1570, 7
        %v1572 = vsub.s32 %v1569, %v1571
        %v1573 = vrot.slane %v1559, %v1572
        %v1574 = vcombine.low %v1509, %v1525
        %v1575 = vcombine.high %v1509, %v1525
        %v1577 = vunpack.c.l.s4 1934713408
        %v1578 = vunpack.c.0.s8 %v1577
        %v1579 = vlaneseq
        %v1580 = vshrl.u32 %v1579, 7
        %v1581 = vsub.s32 %v1578, %v1580
        %v1582 = vrot.slane %v1574, %v1581
        %v1584 = vunpack.c.l.s4 1934713408
        %v1585 = vunpack.c.0.s8 %v1584
        %v1586 = vlaneseq
        %v1587 = vshrl.u32 %v1586, 7
        %v1588 = vsub.s32 %v1585, %v1587
        %v1589 = vrot.slane %v1575, %v1588
        %v1590 = vcombine.low %v1534, %v1566
        %v1591 = vcombine.high %v1534, %v1566
        %v1592 = vcombine.low %v1541, %v1573
        %v1593 = vcombine.high %v1541, %v1573
        %v1594 = vcombine.low %v1550, %v1582
        %v1595 = vcombine.high %v1550, %v1582
        %v1596 = vcombine.low %v1557, %v1589
        %v1597 = vcombine.high %v1557, %v1589
        %v1598 = vcombine.low %v993, %v999
        %v1599 = vcombine.high %v993, %v999
        %v1601 = vunpack.c.l.s4 1983009808
        %v1602 = vunpack.c.0.s8 %v1601
        %v1603 = vlaneseq
        %v1604 = vshrl.u32 %v1603, 7
        %v1605 = vsub.s32 %v1602, %v1604
        %v1606 = vrot.slane %v1598, %v1605
        %v1608 = vunpack.c.l.s4 1983009808
        %v1609 = vunpack.c.0.s8 %v1608
        %v1610 = vlaneseq
        %v1611 = vshrl.u32 %v1610, 7
        %v1612 = vsub.s32 %v1609, %v1611
        %v1613 = vrot.slane %v1599, %v1612
        %v1614 = vcombine.low %v996, %v1002
        %v1615 = vcombine.high %v996, %v1002
        %v1617 = vunpack.c.l.s4 1983009808
        %v1618 = vunpack.c.0.s8 %v1617
        %v1619 = vlaneseq
        %v1620 = vshrl.u32 %v1619, 7
        %v1621 = vsub.s32 %v1618, %v1620
        %v1622 = vrot.slane %v1614, %v1621
        %v1624 = vunpack.c.l.s4 1983009808
        %v1625 = vunpack.c.0.s8 %v1624
        %v1626 = vlaneseq
        %v1627 = vshrl.u32 %v1626, 7
        %v1628 = vsub.s32 %v1625, %v1627
        %v1629 = vrot.slane %v1615, %v1628
        %v1630 = vcombine.low %v1005, %v1011
        %v1631 = vcombine.high %v1005, %v1011
        %v1633 = vunpack.c.l.s4 1983009808
        %v1634 = vunpack.c.0.s8 %v1633
        %v1635 = vlaneseq
        %v1636 = vshrl.u32 %v1635, 7
        %v1637 = vsub.s32 %v1634, %v1636
        %v1638 = vrot.slane %v1630, %v1637
        %v1640 = vunpack.c.l.s4 1983009808
        %v1641 = vunpack.c.0.s8 %v1640
        %v1642 = vlaneseq
        %v1643 = vshrl.u32 %v1642, 7
        %v1644 = vsub.s32 %v1641, %v1643
        %v1645 = vrot.slane %v1631, %v1644
        %v1646 = vcombine.low %v1008, %v1014
        %v1647 = vcombine.high %v1008, %v1014
        %v1649 = vunpack.c.l.s4 1983009808
        %v1650 = vunpack.c.0.s8 %v1649
        %v1651 = vlaneseq
        %v1652 = vshrl.u32 %v1651, 7
        %v1653 = vsub.s32 %v1650, %v1652
        %v1654 = vrot.slane %v1646, %v1653
        %v1656 = vunpack.c.l.s4 1983009808
        %v1657 = vunpack.c.0.s8 %v1656
        %v1658 = vlaneseq
        %v1659 = vshrl.u32 %v1658, 7
        %v1660 = vsub.s32 %v1657, %v1659
        %v1661 = vrot.slane %v1647, %v1660
        %v1662 = vcombine.low %v1606, %v1622
        %v1663 = vcombine.high %v1606, %v1622
        %v1665 = vunpack.c.l.s4 1934713408
        %v1666 = vunpack.c.0.s8 %v1665
        %v1667 = vlaneseq
        %v1668 = vshrl.u32 %v1667, 7
        %v1669 = vsub.s32 %v1666, %v1668
        %v1670 = vrot.slane %v1662, %v1669
        %v1672 = vunpack.c.l.s4 1934713408
        %v1673 = vunpack.c.0.s8 %v1672
        %v1674 = vlaneseq
        %v1675 = vshrl.u32 %v1674, 7
        %v1676 = vsub.s32 %v1673, %v1675
        %v1677 = vrot.slane %v1663, %v1676
        %v1678 = vcombine.low %v1613, %v1629
        %v1679 = vcombine.high %v1613, %v1629
        %v1681 = vunpack.c.l.s4 1934713408
        %v1682 = vunpack.c.0.s8 %v1681
        %v1683 = vlaneseq
        %v1684 = vshrl.u32 %v1683, 7
        %v1685 = vsub.s32 %v1682, %v1684
        %v1686 = vrot.slane %v1678, %v1685
        %v1688 = vunpack.c.l.s4 1934713408
        %v1689 = vunpack.c.0.s8 %v1688
        %v1690 = vlaneseq
        %v1691 = vshrl.u32 %v1690, 7
        %v1692 = vsub.s32 %v1689, %v1691
        %v1693 = vrot.slane %v1679, %v1692
        %v1694 = vcombine.low %v1638, %v1654
        %v1695 = vcombine.high %v1638, %v1654
        %v1697 = vunpack.c.l.s4 1934713408
        %v1698 = vunpack.c.0.s8 %v1697
        %v1699 = vlaneseq
        %v1700 = vshrl.u32 %v1699, 7
        %v1701 = vsub.s32 %v1698, %v1700
        %v1702 = vrot.slane %v1694, %v1701
        %v1704 = vunpack.c.l.s4 1934713408
        %v1705 = vunpack.c.0.s8 %v1704
        %v1706 = vlaneseq
        %v1707 = vshrl.u32 %v1706, 7
        %v1708 = vsub.s32 %v1705, %v1707
        %v1709 = vrot.slane %v1695, %v1708
        %v1710 = vcombine.low %v1645, %v1661
        %v1711 = vcombine.high %v1645, %v1661
        %v1713 = vunpack.c.l.s4 1934713408
        %v1714 = vunpack.c.0.s8 %v1713
        %v1715 = vlaneseq
        %v1716 = vshrl.u32 %v1715, 7
        %v1717 = vsub.s32 %v1714, %v1716
        %v1718 = vrot.slane %v1710, %v1717
        %v1720 = vunpack.c.l.s4 1934713408
        %v1721 = vunpack.c.0.s8 %v1720
        %v1722 = vlaneseq
        %v1723 = vshrl.u32 %v1722, 7
        %v1724 = vsub.s32 %v1721, %v1723
        %v1725 = vrot.slane %v1711, %v1724
        %v1726 = vcombine.low %v1670, %v1702
        %v1727 = vcombine.high %v1670, %v1702
        %v1728 = vcombine.low %v1677, %v1709
        %v1729 = vcombine.high %v1677, %v1709
        %v1730 = vcombine.low %v1686, %v1718
        %v1731 = vcombine.high %v1686, %v1718
        %v1732 = vcombine.low %v1693, %v1725
        %v1733 = vcombine.high %v1693, %v1725
        %v1734 = vcombine.low %v1017, %v1023
        %v1735 = vcombine.high %v1017, %v1023
        %v1737 = vunpack.c.l.s4 1983009808
        %v1738 = vunpack.c.0.s8 %v1737
        %v1739 = vlaneseq
        %v1740 = vshrl.u32 %v1739, 7
        %v1741 = vsub.s32 %v1738, %v1740
        %v1742 = vrot.slane %v1734, %v1741
        %v1744 = vunpack.c.l.s4 1983009808
        %v1745 = vunpack.c.0.s8 %v1744
        %v1746 = vlaneseq
        %v1747 = vshrl.u32 %v1746, 7
        %v1748 = vsub.s32 %v1745, %v1747
        %v1749 = vrot.slane %v1735, %v1748
        %v1750 = vcombine.low %v1020, %v1026
        %v1751 = vcombine.high %v1020, %v1026
        %v1753 = vunpack.c.l.s4 1983009808
        %v1754 = vunpack.c.0.s8 %v1753
        %v1755 = vlaneseq
        %v1756 = vshrl.u32 %v1755, 7
        %v1757 = vsub.s32 %v1754, %v1756
        %v1758 = vrot.slane %v1750, %v1757
        %v1760 = vunpack.c.l.s4 1983009808
        %v1761 = vunpack.c.0.s8 %v1760
        %v1762 = vlaneseq
        %v1763 = vshrl.u32 %v1762, 7
        %v1764 = vsub.s32 %v1761, %v1763
        %v1765 = vrot.slane %v1751, %v1764
        %v1766 = vcombine.low %v1029, %v1035
        %v1767 = vcombine.high %v1029, %v1035
        %v1769 = vunpack.c.l.s4 1983009808
        %v1770 = vunpack.c.0.s8 %v1769
        %v1771 = vlaneseq
        %v1772 = vshrl.u32 %v1771, 7
        %v1773 = vsub.s32 %v1770, %v1772
        %v1774 = vrot.slane %v1766, %v1773
        %v1776 = vunpack.c.l.s4 1983009808
        %v1777 = vunpack.c.0.s8 %v1776
        %v1778 = vlaneseq
        %v1779 = vshrl.u32 %v1778, 7
        %v1780 = vsub.s32 %v1777, %v1779
        %v1781 = vrot.slane %v1767, %v1780
        %v1782 = vcombine.low %v1032, %v1038
        %v1783 = vcombine.high %v1032, %v1038
        %v1785 = vunpack.c.l.s4 1983009808
        %v1786 = vunpack.c.0.s8 %v1785
        %v1787 = vlaneseq
        %v1788 = vshrl.u32 %v1787, 7
        %v1789 = vsub.s32 %v1786, %v1788
        %v1790 = vrot.slane %v1782, %v1789
        %v1792 = vunpack.c.l.s4 1983009808
        %v1793 = vunpack.c.0.s8 %v1792
        %v1794 = vlaneseq
        %v1795 = vshrl.u32 %v1794, 7
        %v1796 = vsub.s32 %v1793, %v1795
        %v1797 = vrot.slane %v1783, %v1796
        %v1798 = vcombine.low %v1742, %v1758
        %v1799 = vcombine.high %v1742, %v1758
        %v1801 = vunpack.c.l.s4 1934713408
        %v1802 = vunpack.c.0.s8 %v1801
        %v1803 = vlaneseq
        %v1804 = vshrl.u32 %v1803, 7
        %v1805 = vsub.s32 %v1802, %v1804
        %v1806 = vrot.slane %v1798, %v1805
        %v1808 = vunpack.c.l.s4 1934713408
        %v1809 = vunpack.c.0.s8 %v1808
        %v1810 = vlaneseq
        %v1811 = vshrl.u32 %v1810, 7
        %v1812 = vsub.s32 %v1809, %v1811
        %v1813 = vrot.slane %v1799, %v1812
        %v1814 = vcombine.low %v1749, %v1765
        %v1815 = vcombine.high %v1749, %v1765
        %v1817 = vunpack.c.l.s4 1934713408
        %v1818 = vunpack.c.0.s8 %v1817
        %v1819 = vlaneseq
        %v1820 = vshrl.u32 %v1819, 7
        %v1821 = vsub.s32 %v1818, %v1820
        %v1822 = vrot.slane %v1814, %v1821
        %v1824 = vunpack.c.l.s4 1934713408
        %v1825 = vunpack.c.0.s8 %v1824
        %v1826 = vlaneseq
        %v1827 = vshrl.u32 %v1826, 7
        %v1828 = vsub.s32 %v1825, %v1827
        %v1829 = vrot.slane %v1815, %v1828
        %v1830 = vcombine.low %v1774, %v1790
        %v1831 = vcombine.high %v1774, %v1790
        %v1833 = vunpack.c.l.s4 1934713408
        %v1834 = vunpack.c.0.s8 %v1833
        %v1835 = vlaneseq
        %v1836 = vshrl.u32 %v1835, 7
        %v1837 = vsub.s32 %v1834, %v1836
        %v1838 = vrot.slane %v1830, %v1837
        %v1840 = vunpack.c.l.s4 1934713408
        %v1841 = vunpack.c.0.s8 %v1840
        %v1842 = vlaneseq
        %v1843 = vshrl.u32 %v1842, 7
        %v1844 = vsub.s32 %v1841, %v1843
        %v1845 = vrot.slane %v1831, %v1844
        %v1846 = vcombine.low %v1781, %v1797
        %v1847 = vcombine.high %v1781, %v1797
        %v1849 = vunpack.c.l.s4 1934713408
        %v1850 = vunpack.c.0.s8 %v1849
        %v1851 = vlaneseq
        %v1852 = vshrl.u32 %v1851, 7
        %v1853 = vsub.s32 %v1850, %v1852
        %v1854 = vrot.slane %v1846, %v1853
        %v1856 = vunpack.c.l.s4 1934713408
        %v1857 = vunpack.c.0.s8 %v1856
        %v1858 = vlaneseq
        %v1859 = vshrl.u32 %v1858, 7
        %v1860 = vsub.s32 %v1857, %v1859
        %v1861 = vrot.slane %v1847, %v1860
        %v1862 = vcombine.low %v1806, %v1838
        %v1863 = vcombine.high %v1806, %v1838
        %v1864 = vcombine.low %v1813, %v1845
        %v1865 = vcombine.high %v1813, %v1845
        %v1866 = vcombine.low %v1822, %v1854
        %v1867 = vcombine.high %v1822, %v1854
        %v1868 = vcombine.low %v1829, %v1861
        %v1869 = vcombine.high %v1829, %v1861
        %v1870 = vcombine.low %v1041, %v1047
        %v1871 = vcombine.high %v1041, %v1047
        %v1873 = vunpack.c.l.s4 1983009808
        %v1874 = vunpack.c.0.s8 %v1873
        %v1875 = vlaneseq
        %v1876 = vshrl.u32 %v1875, 7
        %v1877 = vsub.s32 %v1874, %v1876
        %v1878 = vrot.slane %v1870, %v1877
        %v1880 = vunpack.c.l.s4 1983009808
        %v1881 = vunpack.c.0.s8 %v1880
        %v1882 = vlaneseq
        %v1883 = vshrl.u32 %v1882, 7
        %v1884 = vsub.s32 %v1881, %v1883
        %v1885 = vrot.slane %v1871, %v1884
        %v1886 = vcombine.low %v1044, %v1050
        %v1887 = vcombine.high %v1044, %v1050
        %v1889 = vunpack.c.l.s4 1983009808
        %v1890 = vunpack.c.0.s8 %v1889
        %v1891 = vlaneseq
        %v1892 = vshrl.u32 %v1891, 7
        %v1893 = vsub.s32 %v1890, %v1892
        %v1894 = vrot.slane %v1886, %v1893
        %v1896 = vunpack.c.l.s4 1983009808
        %v1897 = vunpack.c.0.s8 %v1896
        %v1898 = vlaneseq
        %v1899 = vshrl.u32 %v1898, 7
        %v1900 = vsub.s32 %v1897, %v1899
        %v1901 = vrot.slane %v1887, %v1900
        %v1902 = vcombine.low %v1053, %v1059
        %v1903 = vcombine.high %v1053, %v1059
        %v1905 = vunpack.c.l.s4 1983009808
        %v1906 = vunpack.c.0.s8 %v1905
        %v1907 = vlaneseq
        %v1908 = vshrl.u32 %v1907, 7
        %v1909 = vsub.s32 %v1906, %v1908
        %v1910 = vrot.slane %v1902, %v1909
        %v1912 = vunpack.c.l.s4 1983009808
        %v1913 = vunpack.c.0.s8 %v1912
        %v1914 = vlaneseq
        %v1915 = vshrl.u32 %v1914, 7
        %v1916 = vsub.s32 %v1913, %v1915
        %v1917 = vrot.slane %v1903, %v1916
        %v1918 = vcombine.low %v1056, %v1062
        %v1919 = vcombine.high %v1056, %v1062
        %v1921 = vunpack.c.l.s4 1983009808
        %v1922 = vunpack.c.0.s8 %v1921
        %v1923 = vlaneseq
        %v1924 = vshrl.u32 %v1923, 7
        %v1925 = vsub.s32 %v1922, %v1924
        %v1926 = vrot.slane %v1918, %v1925
        %v1928 = vunpack.c.l.s4 1983009808
        %v1929 = vunpack.c.0.s8 %v1928
        %v1930 = vlaneseq
        %v1931 = vshrl.u32 %v1930, 7
        %v1932 = vsub.s32 %v1929, %v1931
        %v1933 = vrot.slane %v1919, %v1932
        %v1934 = vcombine.low %v1878, %v1894
        %v1935 = vcombine.high %v1878, %v1894
        %v1937 = vunpack.c.l.s4 1934713408
        %v1938 = vunpack.c.0.s8 %v1937
        %v1939 = vlaneseq
        %v1940 = vshrl.u32 %v1939, 7
        %v1941 = vsub.s32 %v1938, %v1940
        %v1942 = vrot.slane %v1934, %v1941
        %v1944 = vunpack.c.l.s4 1934713408
        %v1945 = vunpack.c.0.s8 %v1944
        %v1946 = vlaneseq
        %v1947 = vshrl.u32 %v1946, 7
        %v1948 = vsub.s32 %v1945, %v1947
        %v1949 = vrot.slane %v1935, %v1948
        %v1950 = vcombine.low %v1885, %v1901
        %v1951 = vcombine.high %v1885, %v1901
        %v1953 = vunpack.c.l.s4 1934713408
        %v1954 = vunpack.c.0.s8 %v1953
        %v1955 = vlaneseq
        %v1956 = vshrl.u32 %v1955, 7
        %v1957 = vsub.s32 %v1954, %v1956
        %v1958 = vrot.slane %v1950, %v1957
        %v1960 = vunpack.c.l.s4 1934713408
        %v1961 = vunpack.c.0.s8 %v1960
        %v1962 = vlaneseq
        %v1963 = vshrl.u32 %v1962, 7
        %v1964 = vsub.s32 %v1961, %v1963
        %v1965 = vrot.slane %v1951, %v1964
        %v1966 = vcombine.low %v1910, %v1926
        %v1967 = vcombine.high %v1910, %v1926
        %v1969 = vunpack.c.l.s4 1934713408
        %v1970 = vunpack.c.0.s8 %v1969
        %v1971 = vlaneseq
        %v1972 = vshrl.u32 %v1971, 7
        %v1973 = vsub.s32 %v1970, %v1972
        %v1974 = vrot.slane %v1966, %v1973
        %v1976 = vunpack.c.l.s4 1934713408
        %v1977 = vunpack.c.0.s8 %v1976
        %v1978 = vlaneseq
        %v1979 = vshrl.u32 %v1978, 7
        %v1980 = vsub.s32 %v1977, %v1979
        %v1981 = vrot.slane %v1967, %v1980
        %v1982 = vcombine.low %v1917, %v1933
        %v1983 = vcombine.high %v1917, %v1933
        %v1985 = vunpack.c.l.s4 1934713408
        %v1986 = vunpack.c.0.s8 %v1985
        %v1987 = vlaneseq
        %v1988 = vshrl.u32 %v1987, 7
        %v1989 = vsub.s32 %v1986, %v1988
        %v1990 = vrot.slane %v1982, %v1989
        %v1992 = vunpack.c.l.s4 1934713408
        %v1993 = vunpack.c.0.s8 %v1992
        %v1994 = vlaneseq
        %v1995 = vshrl.u32 %v1994, 7
        %v1996 = vsub.s32 %v1993, %v1995
        %v1997 = vrot.slane %v1983, %v1996
        %v1998 = vcombine.low %v1942, %v1974
        %v1999 = vcombine.high %v1942, %v1974
        %v2000 = vcombine.low %v1949, %v1981
        %v2001 = vcombine.high %v1949, %v1981
        %v2002 = vcombine.low %v1958, %v1990
        %v2003 = vcombine.high %v1958, %v1990
        %v2004 = vcombine.low %v1965, %v1997
        %v2005 = vcombine.high %v1965, %v1997
        %v2006 = vcombine.low %v1065, %v1071
        %v2007 = vcombine.high %v1065, %v1071
        %v2009 = vunpack.c.l.s4 1983009808
        %v2010 = vunpack.c.0.s8 %v2009
        %v2011 = vlaneseq
        %v2012 = vshrl.u32 %v2011, 7
        %v2013 = vsub.s32 %v2010, %v2012
        %v2014 = vrot.slane %v2006, %v2013
        %v2016 = vunpack.c.l.s4 1983009808
        %v2017 = vunpack.c.0.s8 %v2016
        %v2018 = vlaneseq
        %v2019 = vshrl.u32 %v2018, 7
        %v2020 = vsub.s32 %v2017, %v2019
        %v2021 = vrot.slane %v2007, %v2020
        %v2022 = vcombine.low %v1068, %v1074
        %v2023 = vcombine.high %v1068, %v1074
        %v2025 = vunpack.c.l.s4 1983009808
        %v2026 = vunpack.c.0.s8 %v2025
        %v2027 = vlaneseq
        %v2028 = vshrl.u32 %v2027, 7
        %v2029 = vsub.s32 %v2026, %v2028
        %v2030 = vrot.slane %v2022, %v2029
        %v2032 = vunpack.c.l.s4 1983009808
        %v2033 = vunpack.c.0.s8 %v2032
        %v2034 = vlaneseq
        %v2035 = vshrl.u32 %v2034, 7
        %v2036 = vsub.s32 %v2033, %v2035
        %v2037 = vrot.slane %v2023, %v2036
        %v2038 = vcombine.low %v1077, %v1083
        %v2039 = vcombine.high %v1077, %v1083
        %v2041 = vunpack.c.l.s4 1983009808
        %v2042 = vunpack.c.0.s8 %v2041
        %v2043 = vlaneseq
        %v2044 = vshrl.u32 %v2043, 7
        %v2045 = vsub.s32 %v2042, %v2044
        %v2046 = vrot.slane %v2038, %v2045
        %v2048 = vunpack.c.l.s4 1983009808
        %v2049 = vunpack.c.0.s8 %v2048
        %v2050 = vlaneseq
        %v2051 = vshrl.u32 %v2050, 7
        %v2052 = vsub.s32 %v2049, %v2051
        %v2053 = vrot.slane %v2039, %v2052
        %v2054 = vcombine.low %v1080, %v1086
        %v2055 = vcombine.high %v1080, %v1086
        %v2057 = vunpack.c.l.s4 1983009808
        %v2058 = vunpack.c.0.s8 %v2057
        %v2059 = vlaneseq
        %v2060 = vshrl.u32 %v2059, 7
        %v2061 = vsub.s32 %v2058, %v2060
        %v2062 = vrot.slane %v2054, %v2061
        %v2064 = vunpack.c.l.s4 1983009808
        %v2065 = vunpack.c.0.s8 %v2064
        %v2066 = vlaneseq
        %v2067 = vshrl.u32 %v2066, 7
        %v2068 = vsub.s32 %v2065, %v2067
        %v2069 = vrot.slane %v2055, %v2068
        %v2070 = vcombine.low %v2014, %v2030
        %v2071 = vcombine.high %v2014, %v2030
        %v2073 = vunpack.c.l.s4 1934713408
        %v2074 = vunpack.c.0.s8 %v2073
        %v2075 = vlaneseq
        %v2076 = vshrl.u32 %v2075, 7
        %v2077 = vsub.s32 %v2074, %v2076
        %v2078 = vrot.slane %v2070, %v2077
        %v2080 = vunpack.c.l.s4 1934713408
        %v2081 = vunpack.c.0.s8 %v2080
        %v2082 = vlaneseq
        %v2083 = vshrl.u32 %v2082, 7
        %v2084 = vsub.s32 %v2081, %v2083
        %v2085 = vrot.slane %v2071, %v2084
        %v2086 = vcombine.low %v2021, %v2037
        %v2087 = vcombine.high %v2021, %v2037
        %v2089 = vunpack.c.l.s4 1934713408
        %v2090 = vunpack.c.0.s8 %v2089
        %v2091 = vlaneseq
        %v2092 = vshrl.u32 %v2091, 7
        %v2093 = vsub.s32 %v2090, %v2092
        %v2094 = vrot.slane %v2086, %v2093
        %v2096 = vunpack.c.l.s4 1934713408
        %v2097 = vunpack.c.0.s8 %v2096
        %v2098 = vlaneseq
        %v2099 = vshrl.u32 %v2098, 7
        %v2100 = vsub.s32 %v2097, %v2099
        %v2101 = vrot.slane %v2087, %v2100
        %v2102 = vcombine.low %v2046, %v2062
        %v2103 = vcombine.high %v2046, %v2062
        %v2105 = vunpack.c.l.s4 1934713408
        %v2106 = vunpack.c.0.s8 %v2105
        %v2107 = vlaneseq
        %v2108 = vshrl.u32 %v2107, 7
        %v2109 = vsub.s32 %v2106, %v2108
        %v2110 = vrot.slane %v2102, %v2109
        %v2112 = vunpack.c.l.s4 1934713408
        %v2113 = vunpack.c.0.s8 %v2112
        %v2114 = vlaneseq
        %v2115 = vshrl.u32 %v2114, 7
        %v2116 = vsub.s32 %v2113, %v2115
        %v2117 = vrot.slane %v2103, %v2116
        %v2118 = vcombine.low %v2053, %v2069
        %v2119 = vcombine.high %v2053, %v2069
        %v2121 = vunpack.c.l.s4 1934713408
        %v2122 = vunpack.c.0.s8 %v2121
        %v2123 = vlaneseq
        %v2124 = vshrl.u32 %v2123, 7
        %v2125 = vsub.s32 %v2122, %v2124
        %v2126 = vrot.slane %v2118, %v2125
        %v2128 = vunpack.c.l.s4 1934713408
        %v2129 = vunpack.c.0.s8 %v2128
        %v2130 = vlaneseq
        %v2131 = vshrl.u32 %v2130, 7
        %v2132 = vsub.s32 %v2129, %v2131
        %v2133 = vrot.slane %v2119, %v2132
        %v2134 = vcombine.low %v2078, %v2110
        %v2135 = vcombine.high %v2078, %v2110
        %v2136 = vcombine.low %v2085, %v2117
        %v2137 = vcombine.high %v2085, %v2117
        %v2138 = vcombine.low %v2094, %v2126
        %v2139 = vcombine.high %v2094, %v2126
        %v2140 = vcombine.low %v2101, %v2133
        %v2141 = vcombine.high %v2101, %v2133
        %v2142 = vcombine.low %v1089, %v1095
        %v2143 = vcombine.high %v1089, %v1095
        %v2145 = vunpack.c.l.s4 1983009808
        %v2146 = vunpack.c.0.s8 %v2145
        %v2147 = vlaneseq
        %v2148 = vshrl.u32 %v2147, 7
        %v2149 = vsub.s32 %v2146, %v2148
        %v2150 = vrot.slane %v2142, %v2149
        %v2152 = vunpack.c.l.s4 1983009808
        %v2153 = vunpack.c.0.s8 %v2152
        %v2154 = vlaneseq
        %v2155 = vshrl.u32 %v2154, 7
        %v2156 = vsub.s32 %v2153, %v2155
        %v2157 = vrot.slane %v2143, %v2156
        %v2158 = vcombine.low %v1092, %v1098
        %v2159 = vcombine.high %v1092, %v1098
        %v2161 = vunpack.c.l.s4 1983009808
        %v2162 = vunpack.c.0.s8 %v2161
        %v2163 = vlaneseq
        %v2164 = vshrl.u32 %v2163, 7
        %v2165 = vsub.s32 %v2162, %v2164
        %v2166 = vrot.slane %v2158, %v2165
        %v2168 = vunpack.c.l.s4 1983009808
        %v2169 = vunpack.c.0.s8 %v2168
        %v2170 = vlaneseq
        %v2171 = vshrl.u32 %v2170, 7
        %v2172 = vsub.s32 %v2169, %v2171
        %v2173 = vrot.slane %v2159, %v2172
        %v2174 = vcombine.low %v1101, %v1107
        %v2175 = vcombine.high %v1101, %v1107
        %v2177 = vunpack.c.l.s4 1983009808
        %v2178 = vunpack.c.0.s8 %v2177
        %v2179 = vlaneseq
        %v2180 = vshrl.u32 %v2179, 7
        %v2181 = vsub.s32 %v2178, %v2180
        %v2182 = vrot.slane %v2174, %v2181
        %v2184 = vunpack.c.l.s4 1983009808
        %v2185 = vunpack.c.0.s8 %v2184
        %v2186 = vlaneseq
        %v2187 = vshrl.u32 %v2186, 7
        %v2188 = vsub.s32 %v2185, %v2187
        %v2189 = vrot.slane %v2175, %v2188
        %v2190 = vcombine.low %v1104, %v1110
        %v2191 = vcombine.high %v1104, %v1110
        %v2193 = vunpack.c.l.s4 1983009808
        %v2194 = vunpack.c.0.s8 %v2193
        %v2195 = vlaneseq
        %v2196 = vshrl.u32 %v2195, 7
        %v2197 = vsub.s32 %v2194, %v2196
        %v2198 = vrot.slane %v2190, %v2197
        %v2200 = vunpack.c.l.s4 1983009808
        %v2201 = vunpack.c.0.s8 %v2200
        %v2202 = vlaneseq
        %v2203 = vshrl.u32 %v2202, 7
        %v2204 = vsub.s32 %v2201, %v2203
        %v2205 = vrot.slane %v2191, %v2204
        %v2206 = vcombine.low %v2150, %v2166
        %v2207 = vcombine.high %v2150, %v2166
        %v2209 = vunpack.c.l.s4 1934713408
        %v2210 = vunpack.c.0.s8 %v2209
        %v2211 = vlaneseq
        %v2212 = vshrl.u32 %v2211, 7
        %v2213 = vsub.s32 %v2210, %v2212
        %v2214 = vrot.slane %v2206, %v2213
        %v2216 = vunpack.c.l.s4 1934713408
        %v2217 = vunpack.c.0.s8 %v2216
        %v2218 = vlaneseq
        %v2219 = vshrl.u32 %v2218, 7
        %v2220 = vsub.s32 %v2217, %v2219
        %v2221 = vrot.slane %v2207, %v2220
        %v2222 = vcombine.low %v2157, %v2173
        %v2223 = vcombine.high %v2157, %v2173
        %v2225 = vunpack.c.l.s4 1934713408
        %v2226 = vunpack.c.0.s8 %v2225
        %v2227 = vlaneseq
        %v2228 = vshrl.u32 %v2227, 7
        %v2229 = vsub.s32 %v2226, %v2228
        %v2230 = vrot.slane %v2222, %v2229
        %v2232 = vunpack.c.l.s4 1934713408
        %v2233 = vunpack.c.0.s8 %v2232
        %v2234 = vlaneseq
        %v2235 = vshrl.u32 %v2234, 7
        %v2236 = vsub.s32 %v2233, %v2235
        %v2237 = vrot.slane %v2223, %v2236
        %v2238 = vcombine.low %v2182, %v2198
        %v2239 = vcombine.high %v2182, %v2198
        %v2241 = vunpack.c.l.s4 1934713408
        %v2242 = vunpack.c.0.s8 %v2241
        %v2243 = vlaneseq
        %v2244 = vshrl.u32 %v2243, 7
        %v2245 = vsub.s32 %v2242, %v2244
        %v2246 = vrot.slane %v2238, %v2245
        %v2248 = vunpack.c.l.s4 1934713408
        %v2249 = vunpack.c.0.s8 %v2248
        %v2250 = vlaneseq
        %v2251 = vshrl.u32 %v2250, 7
        %v2252 = vsub.s32 %v2249, %v2251
        %v2253 = vrot.slane %v2239, %v2252
        %v2254 = vcombine.low %v2189, %v2205
        %v2255 = vcombine.high %v2189, %v2205
        %v2257 = vunpack.c.l.s4 1934713408
        %v2258 = vunpack.c.0.s8 %v2257
        %v2259 = vlaneseq
        %v2260 = vshrl.u32 %v2259, 7
        %v2261 = vsub.s32 %v2258, %v2260
        %v2262 = vrot.slane %v2254, %v2261
        %v2264 = vunpack.c.l.s4 1934713408
        %v2265 = vunpack.c.0.s8 %v2264
        %v2266 = vlaneseq
        %v2267 = vshrl.u32 %v2266, 7
        %v2268 = vsub.s32 %v2265, %v2267
        %v2269 = vrot.slane %v2255, %v2268
        %v2270 = vcombine.low %v2214, %v2246
        %v2271 = vcombine.high %v2214, %v2246
        %v2272 = vcombine.low %v2221, %v2253
        %v2273 = vcombine.high %v2221, %v2253
        %v2274 = vcombine.low %v2230, %v2262
        %v2275 = vcombine.high %v2230, %v2262
        %v2276 = vcombine.low %v2237, %v2269
        %v2277 = vcombine.high %v2237, %v2269
        %v2278 = vcombine.low %v1113, %v1119
        %v2279 = vcombine.high %v1113, %v1119
        %v2281 = vunpack.c.l.s4 1983009808
        %v2282 = vunpack.c.0.s8 %v2281
        %v2283 = vlaneseq
        %v2284 = vshrl.u32 %v2283, 7
        %v2285 = vsub.s32 %v2282, %v2284
        %v2286 = vrot.slane %v2278, %v2285
        %v2288 = vunpack.c.l.s4 1983009808
        %v2289 = vunpack.c.0.s8 %v2288
        %v2290 = vlaneseq
        %v2291 = vshrl.u32 %v2290, 7
        %v2292 = vsub.s32 %v2289, %v2291
        %v2293 = vrot.slane %v2279, %v2292
        %v2294 = vcombine.low %v1116, %v1122
        %v2295 = vcombine.high %v1116, %v1122
        %v2297 = vunpack.c.l.s4 1983009808
        %v2298 = vunpack.c.0.s8 %v2297
        %v2299 = vlaneseq
        %v2300 = vshrl.u32 %v2299, 7
        %v2301 = vsub.s32 %v2298, %v2300
        %v2302 = vrot.slane %v2294, %v2301
        %v2304 = vunpack.c.l.s4 1983009808
        %v2305 = vunpack.c.0.s8 %v2304
        %v2306 = vlaneseq
        %v2307 = vshrl.u32 %v2306, 7
        %v2308 = vsub.s32 %v2305, %v2307
        %v2309 = vrot.slane %v2295, %v2308
        %v2310 = vcombine.low %v1125, %v1131
        %v2311 = vcombine.high %v1125, %v1131
        %v2313 = vunpack.c.l.s4 1983009808
        %v2314 = vunpack.c.0.s8 %v2313
        %v2315 = vlaneseq
        %v2316 = vshrl.u32 %v2315, 7
        %v2317 = vsub.s32 %v2314, %v2316
        %v2318 = vrot.slane %v2310, %v2317
        %v2320 = vunpack.c.l.s4 1983009808
        %v2321 = vunpack.c.0.s8 %v2320
        %v2322 = vlaneseq
        %v2323 = vshrl.u32 %v2322, 7
        %v2324 = vsub.s32 %v2321, %v2323
        %v2325 = vrot.slane %v2311, %v2324
        %v2326 = vcombine.low %v1128, %v1134
        %v2327 = vcombine.high %v1128, %v1134
        %v2329 = vunpack.c.l.s4 1983009808
        %v2330 = vunpack.c.0.s8 %v2329
        %v2331 = vlaneseq
        %v2332 = vshrl.u32 %v2331, 7
        %v2333 = vsub.s32 %v2330, %v2332
        %v2334 = vrot.slane %v2326, %v2333
        %v2336 = vunpack.c.l.s4 1983009808
        %v2337 = vunpack.c.0.s8 %v2336
        %v2338 = vlaneseq
        %v2339 = vshrl.u32 %v2338, 7
        %v2340 = vsub.s32 %v2337, %v2339
        %v2341 = vrot.slane %v2327, %v2340
        %v2342 = vcombine.low %v2286, %v2302
        %v2343 = vcombine.high %v2286, %v2302
        %v2345 = vunpack.c.l.s4 1934713408
        %v2346 = vunpack.c.0.s8 %v2345
        %v2347 = vlaneseq
        %v2348 = vshrl.u32 %v2347, 7
        %v2349 = vsub.s32 %v2346, %v2348
        %v2350 = vrot.slane %v2342, %v2349
        %v2352 = vunpack.c.l.s4 1934713408
        %v2353 = vunpack.c.0.s8 %v2352
        %v2354 = vlaneseq
        %v2355 = vshrl.u32 %v2354, 7
        %v2356 = vsub.s32 %v2353, %v2355
        %v2357 = vrot.slane %v2343, %v2356
        %v2358 = vcombine.low %v2293, %v2309
        %v2359 = vcombine.high %v2293, %v2309
        %v2361 = vunpack.c.l.s4 1934713408
        %v2362 = vunpack.c.0.s8 %v2361
        %v2363 = vlaneseq
        %v2364 = vshrl.u32 %v2363, 7
        %v2365 = vsub.s32 %v2362, %v2364
        %v2366 = vrot.slane %v2358, %v2365
        %v2368 = vunpack.c.l.s4 1934713408
        %v2369 = vunpack.c.0.s8 %v2368
        %v2370 = vlaneseq
        %v2371 = vshrl.u32 %v2370, 7
        %v2372 = vsub.s32 %v2369, %v2371
        %v2373 = vrot.slane %v2359, %v2372
        %v2374 = vcombine.low %v2318, %v2334
        %v2375 = vcombine.high %v2318, %v2334
        %v2377 = vunpack.c.l.s4 1934713408
        %v2378 = vunpack.c.0.s8 %v2377
        %v2379 = vlaneseq
        %v2380 = vshrl.u32 %v2379, 7
        %v2381 = vsub.s32 %v2378, %v2380
        %v2382 = vrot.slane %v2374, %v2381
        %v2384 = vunpack.c.l.s4 1934713408
        %v2385 = vunpack.c.0.s8 %v2384
        %v2386 = vlaneseq
        %v2387 = vshrl.u32 %v2386, 7
        %v2388 = vsub.s32 %v2385, %v2387
        %v2389 = vrot.slane %v2375, %v2388
        %v2390 = vcombine.low %v2325, %v2341
        %v2391 = vcombine.high %v2325, %v2341
        %v2393 = vunpack.c.l.s4 1934713408
        %v2394 = vunpack.c.0.s8 %v2393
        %v2395 = vlaneseq
        %v2396 = vshrl.u32 %v2395, 7
        %v2397 = vsub.s32 %v2394, %v2396
        %v2398 = vrot.slane %v2390, %v2397
        %v2400 = vunpack.c.l.s4 1934713408
        %v2401 = vunpack.c.0.s8 %v2400
        %v2402 = vlaneseq
        %v2403 = vshrl.u32 %v2402, 7
        %v2404 = vsub.s32 %v2401, %v2403
        %v2405 = vrot.slane %v2391, %v2404
        %v2406 = vcombine.low %v2350, %v2382
        %v2407 = vcombine.high %v2350, %v2382
        %v2408 = vcombine.low %v2357, %v2389
        %v2409 = vcombine.high %v2357, %v2389
        %v2410 = vcombine.low %v2366, %v2398
        %v2411 = vcombine.high %v2366, %v2398
        %v2412 = vcombine.low %v2373, %v2405
        %v2413 = vcombine.high %v2373, %v2405
        %v2414 = vcombine.low %v943, %v1141
        %v2415 = vcombine.high %v943, %v1141
        %v2417 = vunpack.c.l.s4 1983009808
        %v2418 = vunpack.c.0.s8 %v2417
        %v2419 = vlaneseq
        %v2420 = vshrl.u32 %v2419, 7
        %v2421 = vsub.s32 %v2418, %v2420
        %v2422 = vrot.slane %v2414, %v2421
        %v2424 = vunpack.c.l.s4 1983009808
        %v2425 = vunpack.c.0.s8 %v2424
        %v2426 = vlaneseq
        %v2427 = vshrl.u32 %v2426, 7
        %v2428 = vsub.s32 %v2425, %v2427
        %v2429 = vrot.slane %v2415, %v2428
        %v2430 = vcombine.low %v1138, %v1144
        %v2431 = vcombine.high %v1138, %v1144
        %v2433 = vunpack.c.l.s4 1983009808
        %v2434 = vunpack.c.0.s8 %v2433
        %v2435 = vlaneseq
        %v2436 = vshrl.u32 %v2435, 7
        %v2437 = vsub.s32 %v2434, %v2436
        %v2438 = vrot.slane %v2430, %v2437
        %v2440 = vunpack.c.l.s4 1983009808
        %v2441 = vunpack.c.0.s8 %v2440
        %v2442 = vlaneseq
        %v2443 = vshrl.u32 %v2442, 7
        %v2444 = vsub.s32 %v2441, %v2443
        %v2445 = vrot.slane %v2431, %v2444
        %v2446 = vcombine.low %v1147, %v1153
        %v2447 = vcombine.high %v1147, %v1153
        %v2449 = vunpack.c.l.s4 1983009808
        %v2450 = vunpack.c.0.s8 %v2449
        %v2451 = vlaneseq
        %v2452 = vshrl.u32 %v2451, 7
        %v2453 = vsub.s32 %v2450, %v2452
        %v2454 = vrot.slane %v2446, %v2453
        %v2456 = vunpack.c.l.s4 1983009808
        %v2457 = vunpack.c.0.s8 %v2456
        %v2458 = vlaneseq
        %v2459 = vshrl.u32 %v2458, 7
        %v2460 = vsub.s32 %v2457, %v2459
        %v2461 = vrot.slane %v2447, %v2460
        %v2462 = vcombine.low %v1150, %v1156
        %v2463 = vcombine.high %v1150, %v1156
        %v2465 = vunpack.c.l.s4 1983009808
        %v2466 = vunpack.c.0.s8 %v2465
        %v2467 = vlaneseq
        %v2468 = vshrl.u32 %v2467, 7
        %v2469 = vsub.s32 %v2466, %v2468
        %v2470 = vrot.slane %v2462, %v2469
        %v2472 = vunpack.c.l.s4 1983009808
        %v2473 = vunpack.c.0.s8 %v2472
        %v2474 = vlaneseq
        %v2475 = vshrl.u32 %v2474, 7
        %v2476 = vsub.s32 %v2473, %v2475
        %v2477 = vrot.slane %v2463, %v2476
        %v2478 = vcombine.low %v2422, %v2438
        %v2479 = vcombine.high %v2422, %v2438
        %v2481 = vunpack.c.l.s4 1934713408
        %v2482 = vunpack.c.0.s8 %v2481
        %v2483 = vlaneseq
        %v2484 = vshrl.u32 %v2483, 7
        %v2485 = vsub.s32 %v2482, %v2484
        %v2486 = vrot.slane %v2478, %v2485
        %v2488 = vunpack.c.l.s4 1934713408
        %v2489 = vunpack.c.0.s8 %v2488
        %v2490 = vlaneseq
        %v2491 = vshrl.u32 %v2490, 7
        %v2492 = vsub.s32 %v2489, %v2491
        %v2493 = vrot.slane %v2479, %v2492
        %v2494 = vcombine.low %v2429, %v2445
        %v2495 = vcombine.high %v2429, %v2445
        %v2497 = vunpack.c.l.s4 1934713408
        %v2498 = vunpack.c.0.s8 %v2497
        %v2499 = vlaneseq
        %v2500 = vshrl.u32 %v2499, 7
        %v2501 = vsub.s32 %v2498, %v2500
        %v2502 = vrot.slane %v2494, %v2501
        %v2504 = vunpack.c.l.s4 1934713408
        %v2505 = vunpack.c.0.s8 %v2504
        %v2506 = vlaneseq
        %v2507 = vshrl.u32 %v2506, 7
        %v2508 = vsub.s32 %v2505, %v2507
        %v2509 = vrot.slane %v2495, %v2508
        %v2510 = vcombine.low %v2454, %v2470
        %v2511 = vcombine.high %v2454, %v2470
        %v2513 = vunpack.c.l.s4 1934713408
        %v2514 = vunpack.c.0.s8 %v2513
        %v2515 = vlaneseq
        %v2516 = vshrl.u32 %v2515, 7
        %v2517 = vsub.s32 %v2514, %v2516
        %v2518 = vrot.slane %v2510, %v2517
        %v2520 = vunpack.c.l.s4 1934713408
        %v2521 = vunpack.c.0.s8 %v2520
        %v2522 = vlaneseq
        %v2523 = vshrl.u32 %v2522, 7
        %v2524 = vsub.s32 %v2521, %v2523
        %v2525 = vrot.slane %v2511, %v2524
        %v2526 = vcombine.low %v2461, %v2477
        %v2527 = vcombine.high %v2461, %v2477
        %v2529 = vunpack.c.l.s4 1934713408
        %v2530 = vunpack.c.0.s8 %v2529
        %v2531 = vlaneseq
        %v2532 = vshrl.u32 %v2531, 7
        %v2533 = vsub.s32 %v2530, %v2532
        %v2534 = vrot.slane %v2526, %v2533
        %v2536 = vunpack.c.l.s4 1934713408
        %v2537 = vunpack.c.0.s8 %v2536
        %v2538 = vlaneseq
        %v2539 = vshrl.u32 %v2538, 7
        %v2540 = vsub.s32 %v2537, %v2539
        %v2541 = vrot.slane %v2527, %v2540
        %v2542 = vcombine.low %v2486, %v2518
        %v2543 = vcombine.high %v2486, %v2518
        %v2544 = vcombine.low %v2493, %v2525
        %v2545 = vcombine.high %v2493, %v2525
        %v2546 = vcombine.low %v2502, %v2534
        %v2547 = vcombine.high %v2502, %v2534
        %v2548 = vcombine.low %v2509, %v2541
        %v2549 = vcombine.high %v2509, %v2541
        %v2550 = vcombine.low %v1159, %v1165
        %v2551 = vcombine.high %v1159, %v1165
        %v2553 = vunpack.c.l.s4 1983009808
        %v2554 = vunpack.c.0.s8 %v2553
        %v2555 = vlaneseq
        %v2556 = vshrl.u32 %v2555, 7
        %v2557 = vsub.s32 %v2554, %v2556
        %v2558 = vrot.slane %v2550, %v2557
        %v2560 = vunpack.c.l.s4 1983009808
        %v2561 = vunpack.c.0.s8 %v2560
        %v2562 = vlaneseq
        %v2563 = vshrl.u32 %v2562, 7
        %v2564 = vsub.s32 %v2561, %v2563
        %v2565 = vrot.slane %v2551, %v2564
        %v2566 = vcombine.low %v1162, %v1168
        %v2567 = vcombine.high %v1162, %v1168
        %v2569 = vunpack.c.l.s4 1983009808
        %v2570 = vunpack.c.0.s8 %v2569
        %v2571 = vlaneseq
        %v2572 = vshrl.u32 %v2571, 7
        %v2573 = vsub.s32 %v2570, %v2572
        %v2574 = vrot.slane %v2566, %v2573
        %v2576 = vunpack.c.l.s4 1983009808
        %v2577 = vunpack.c.0.s8 %v2576
        %v2578 = vlaneseq
        %v2579 = vshrl.u32 %v2578, 7
        %v2580 = vsub.s32 %v2577, %v2579
        %v2581 = vrot.slane %v2567, %v2580
        %v2582 = vcombine.low %v1171, %v1177
        %v2583 = vcombine.high %v1171, %v1177
        %v2585 = vunpack.c.l.s4 1983009808
        %v2586 = vunpack.c.0.s8 %v2585
        %v2587 = vlaneseq
        %v2588 = vshrl.u32 %v2587, 7
        %v2589 = vsub.s32 %v2586, %v2588
        %v2590 = vrot.slane %v2582, %v2589
        %v2592 = vunpack.c.l.s4 1983009808
        %v2593 = vunpack.c.0.s8 %v2592
        %v2594 = vlaneseq
        %v2595 = vshrl.u32 %v2594, 7
        %v2596 = vsub.s32 %v2593, %v2595
        %v2597 = vrot.slane %v2583, %v2596
        %v2598 = vcombine.low %v1174, %v1180
        %v2599 = vcombine.high %v1174, %v1180
        %v2601 = vunpack.c.l.s4 1983009808
        %v2602 = vunpack.c.0.s8 %v2601
        %v2603 = vlaneseq
        %v2604 = vshrl.u32 %v2603, 7
        %v2605 = vsub.s32 %v2602, %v2604
        %v2606 = vrot.slane %v2598, %v2605
        %v2608 = vunpack.c.l.s4 1983009808
        %v2609 = vunpack.c.0.s8 %v2608
        %v2610 = vlaneseq
        %v2611 = vshrl.u32 %v2610, 7
        %v2612 = vsub.s32 %v2609, %v2611
        %v2613 = vrot.slane %v2599, %v2612
        %v2614 = vcombine.low %v2558, %v2574
        %v2615 = vcombine.high %v2558, %v2574
        %v2617 = vunpack.c.l.s4 1934713408
        %v2618 = vunpack.c.0.s8 %v2617
        %v2619 = vlaneseq
        %v2620 = vshrl.u32 %v2619, 7
        %v2621 = vsub.s32 %v2618, %v2620
        %v2622 = vrot.slane %v2614, %v2621
        %v2624 = vunpack.c.l.s4 1934713408
        %v2625 = vunpack.c.0.s8 %v2624
        %v2626 = vlaneseq
        %v2627 = vshrl.u32 %v2626, 7
        %v2628 = vsub.s32 %v2625, %v2627
        %v2629 = vrot.slane %v2615, %v2628
        %v2630 = vcombine.low %v2565, %v2581
        %v2631 = vcombine.high %v2565, %v2581
        %v2633 = vunpack.c.l.s4 1934713408
        %v2634 = vunpack.c.0.s8 %v2633
        %v2635 = vlaneseq
        %v2636 = vshrl.u32 %v2635, 7
        %v2637 = vsub.s32 %v2634, %v2636
        %v2638 = vrot.slane %v2630, %v2637
        %v2640 = vunpack.c.l.s4 1934713408
        %v2641 = vunpack.c.0.s8 %v2640
        %v2642 = vlaneseq
        %v2643 = vshrl.u32 %v2642, 7
        %v2644 = vsub.s32 %v2641, %v2643
        %v2645 = vrot.slane %v2631, %v2644
        %v2646 = vcombine.low %v2590, %v2606
        %v2647 = vcombine.high %v2590, %v2606
        %v2649 = vunpack.c.l.s4 1934713408
        %v2650 = vunpack.c.0.s8 %v2649
        %v2651 = vlaneseq
        %v2652 = vshrl.u32 %v2651, 7
        %v2653 = vsub.s32 %v2650, %v2652
        %v2654 = vrot.slane %v2646, %v2653
        %v2656 = vunpack.c.l.s4 1934713408
        %v2657 = vunpack.c.0.s8 %v2656
        %v2658 = vlaneseq
        %v2659 = vshrl.u32 %v2658, 7
        %v2660 = vsub.s32 %v2657, %v2659
        %v2661 = vrot.slane %v2647, %v2660
        %v2662 = vcombine.low %v2597, %v2613
        %v2663 = vcombine.high %v2597, %v2613
        %v2665 = vunpack.c.l.s4 1934713408
        %v2666 = vunpack.c.0.s8 %v2665
        %v2667 = vlaneseq
        %v2668 = vshrl.u32 %v2667, 7
        %v2669 = vsub.s32 %v2666, %v2668
        %v2670 = vrot.slane %v2662, %v2669
        %v2672 = vunpack.c.l.s4 1934713408
        %v2673 = vunpack.c.0.s8 %v2672
        %v2674 = vlaneseq
        %v2675 = vshrl.u32 %v2674, 7
        %v2676 = vsub.s32 %v2673, %v2675
        %v2677 = vrot.slane %v2663, %v2676
        %v2678 = vcombine.low %v2622, %v2654
        %v2679 = vcombine.high %v2622, %v2654
        %v2680 = vcombine.low %v2629, %v2661
        %v2681 = vcombine.high %v2629, %v2661
        %v2682 = vcombine.low %v2638, %v2670
        %v2683 = vcombine.high %v2638, %v2670
        %v2684 = vcombine.low %v2645, %v2677
        %v2685 = vcombine.high %v2645, %v2677
        %v2686 = vcombine.low %v1183, %v1189
        %v2687 = vcombine.high %v1183, %v1189
        %v2689 = vunpack.c.l.s4 1983009808
        %v2690 = vunpack.c.0.s8 %v2689
        %v2691 = vlaneseq
        %v2692 = vshrl.u32 %v2691, 7
        %v2693 = vsub.s32 %v2690, %v2692
        %v2694 = vrot.slane %v2686, %v2693
        %v2696 = vunpack.c.l.s4 1983009808
        %v2697 = vunpack.c.0.s8 %v2696
        %v2698 = vlaneseq
        %v2699 = vshrl.u32 %v2698, 7
        %v2700 = vsub.s32 %v2697, %v2699
        %v2701 = vrot.slane %v2687, %v2700
        %v2702 = vcombine.low %v1186, %v1192
        %v2703 = vcombine.high %v1186, %v1192
        %v2705 = vunpack.c.l.s4 1983009808
        %v2706 = vunpack.c.0.s8 %v2705
        %v2707 = vlaneseq
        %v2708 = vshrl.u32 %v2707, 7
        %v2709 = vsub.s32 %v2706, %v2708
        %v2710 = vrot.slane %v2702, %v2709
        %v2712 = vunpack.c.l.s4 1983009808
        %v2713 = vunpack.c.0.s8 %v2712
        %v2714 = vlaneseq
        %v2715 = vshrl.u32 %v2714, 7
        %v2716 = vsub.s32 %v2713, %v2715
        %v2717 = vrot.slane %v2703, %v2716
        %v2718 = vcombine.low %v1195, %v1201
        %v2719 = vcombine.high %v1195, %v1201
        %v2721 = vunpack.c.l.s4 1983009808
        %v2722 = vunpack.c.0.s8 %v2721
        %v2723 = vlaneseq
        %v2724 = vshrl.u32 %v2723, 7
        %v2725 = vsub.s32 %v2722, %v2724
        %v2726 = vrot.slane %v2718, %v2725
        %v2728 = vunpack.c.l.s4 1983009808
        %v2729 = vunpack.c.0.s8 %v2728
        %v2730 = vlaneseq
        %v2731 = vshrl.u32 %v2730, 7
        %v2732 = vsub.s32 %v2729, %v2731
        %v2733 = vrot.slane %v2719, %v2732
        %v2734 = vcombine.low %v1198, %v1204
        %v2735 = vcombine.high %v1198, %v1204
        %v2737 = vunpack.c.l.s4 1983009808
        %v2738 = vunpack.c.0.s8 %v2737
        %v2739 = vlaneseq
        %v2740 = vshrl.u32 %v2739, 7
        %v2741 = vsub.s32 %v2738, %v2740
        %v2742 = vrot.slane %v2734, %v2741
        %v2744 = vunpack.c.l.s4 1983009808
        %v2745 = vunpack.c.0.s8 %v2744
        %v2746 = vlaneseq
        %v2747 = vshrl.u32 %v2746, 7
        %v2748 = vsub.s32 %v2745, %v2747
        %v2749 = vrot.slane %v2735, %v2748
        %v2750 = vcombine.low %v2694, %v2710
        %v2751 = vcombine.high %v2694, %v2710
        %v2753 = vunpack.c.l.s4 1934713408
        %v2754 = vunpack.c.0.s8 %v2753
        %v2755 = vlaneseq
        %v2756 = vshrl.u32 %v2755, 7
        %v2757 = vsub.s32 %v2754, %v2756
        %v2758 = vrot.slane %v2750, %v2757
        %v2760 = vunpack.c.l.s4 1934713408
        %v2761 = vunpack.c.0.s8 %v2760
        %v2762 = vlaneseq
        %v2763 = vshrl.u32 %v2762, 7
        %v2764 = vsub.s32 %v2761, %v2763
        %v2765 = vrot.slane %v2751, %v2764
        %v2766 = vcombine.low %v2701, %v2717
        %v2767 = vcombine.high %v2701, %v2717
        %v2769 = vunpack.c.l.s4 1934713408
        %v2770 = vunpack.c.0.s8 %v2769
        %v2771 = vlaneseq
        %v2772 = vshrl.u32 %v2771, 7
        %v2773 = vsub.s32 %v2770, %v2772
        %v2774 = vrot.slane %v2766, %v2773
        %v2776 = vunpack.c.l.s4 1934713408
        %v2777 = vunpack.c.0.s8 %v2776
        %v2778 = vlaneseq
        %v2779 = vshrl.u32 %v2778, 7
        %v2780 = vsub.s32 %v2777, %v2779
        %v2781 = vrot.slane %v2767, %v2780
        %v2782 = vcombine.low %v2726, %v2742
        %v2783 = vcombine.high %v2726, %v2742
        %v2785 = vunpack.c.l.s4 1934713408
        %v2786 = vunpack.c.0.s8 %v2785
        %v2787 = vlaneseq
        %v2788 = vshrl.u32 %v2787, 7
        %v2789 = vsub.s32 %v2786, %v2788
        %v2790 = vrot.slane %v2782, %v2789
        %v2792 = vunpack.c.l.s4 1934713408
        %v2793 = vunpack.c.0.s8 %v2792
        %v2794 = vlaneseq
        %v2795 = vshrl.u32 %v2794, 7
        %v2796 = vsub.s32 %v2793, %v2795
        %v2797 = vrot.slane %v2783, %v2796
        %v2798 = vcombine.low %v2733, %v2749
        %v2799 = vcombine.high %v2733, %v2749
        %v2801 = vunpack.c.l.s4 1934713408
        %v2802 = vunpack.c.0.s8 %v2801
        %v2803 = vlaneseq
        %v2804 = vshrl.u32 %v2803, 7
        %v2805 = vsub.s32 %v2802, %v2804
        %v2806 = vrot.slane %v2798, %v2805
        %v2808 = vunpack.c.l.s4 1934713408
        %v2809 = vunpack.c.0.s8 %v2808
        %v2810 = vlaneseq
        %v2811 = vshrl.u32 %v2810, 7
        %v2812 = vsub.s32 %v2809, %v2811
        %v2813 = vrot.slane %v2799, %v2812
        %v2814 = vcombine.low %v2758, %v2790
        %v2815 = vcombine.high %v2758, %v2790
        %v2816 = vcombine.low %v2765, %v2797
        %v2817 = vcombine.high %v2765, %v2797
        %v2818 = vcombine.low %v2774, %v2806
        %v2819 = vcombine.high %v2774, %v2806
        %v2820 = vcombine.low %v2781, %v2813
        %v2821 = vcombine.high %v2781, %v2813
        %v2822 = vcombine.low %v1207, %v1213
        %v2823 = vcombine.high %v1207, %v1213
        %v2825 = vunpack.c.l.s4 1983009808
        %v2826 = vunpack.c.0.s8 %v2825
        %v2827 = vlaneseq
        %v2828 = vshrl.u32 %v2827, 7
        %v2829 = vsub.s32 %v2826, %v2828
        %v2830 = vrot.slane %v2822, %v2829
        %v2832 = vunpack.c.l.s4 1983009808
        %v2833 = vunpack.c.0.s8 %v2832
        %v2834 = vlaneseq
        %v2835 = vshrl.u32 %v2834, 7
        %v2836 = vsub.s32 %v2833, %v2835
        %v2837 = vrot.slane %v2823, %v2836
        %v2838 = vcombine.low %v1210, %v1216
        %v2839 = vcombine.high %v1210, %v1216
        %v2841 = vunpack.c.l.s4 1983009808
        %v2842 = vunpack.c.0.s8 %v2841
        %v2843 = vlaneseq
        %v2844 = vshrl.u32 %v2843, 7
        %v2845 = vsub.s32 %v2842, %v2844
        %v2846 = vrot.slane %v2838, %v2845
        %v2848 = vunpack.c.l.s4 1983009808
        %v2849 = vunpack.c.0.s8 %v2848
        %v2850 = vlaneseq
        %v2851 = vshrl.u32 %v2850, 7
        %v2852 = vsub.s32 %v2849, %v2851
        %v2853 = vrot.slane %v2839, %v2852
        %v2854 = vcombine.low %v1219, %v1225
        %v2855 = vcombine.high %v1219, %v1225
        %v2857 = vunpack.c.l.s4 1983009808
        %v2858 = vunpack.c.0.s8 %v2857
        %v2859 = vlaneseq
        %v2860 = vshrl.u32 %v2859, 7
        %v2861 = vsub.s32 %v2858, %v2860
        %v2862 = vrot.slane %v2854, %v2861
        %v2864 = vunpack.c.l.s4 1983009808
        %v2865 = vunpack.c.0.s8 %v2864
        %v2866 = vlaneseq
        %v2867 = vshrl.u32 %v2866, 7
        %v2868 = vsub.s32 %v2865, %v2867
        %v2869 = vrot.slane %v2855, %v2868
        %v2870 = vcombine.low %v1222, %v1228
        %v2871 = vcombine.high %v1222, %v1228
        %v2873 = vunpack.c.l.s4 1983009808
        %v2874 = vunpack.c.0.s8 %v2873
        %v2875 = vlaneseq
        %v2876 = vshrl.u32 %v2875, 7
        %v2877 = vsub.s32 %v2874, %v2876
        %v2878 = vrot.slane %v2870, %v2877
        %v2880 = vunpack.c.l.s4 1983009808
        %v2881 = vunpack.c.0.s8 %v2880
        %v2882 = vlaneseq
        %v2883 = vshrl.u32 %v2882, 7
        %v2884 = vsub.s32 %v2881, %v2883
        %v2885 = vrot.slane %v2871, %v2884
        %v2886 = vcombine.low %v2830, %v2846
        %v2887 = vcombine.high %v2830, %v2846
        %v2889 = vunpack.c.l.s4 1934713408
        %v2890 = vunpack.c.0.s8 %v2889
        %v2891 = vlaneseq
        %v2892 = vshrl.u32 %v2891, 7
        %v2893 = vsub.s32 %v2890, %v2892
        %v2894 = vrot.slane %v2886, %v2893
        %v2896 = vunpack.c.l.s4 1934713408
        %v2897 = vunpack.c.0.s8 %v2896
        %v2898 = vlaneseq
        %v2899 = vshrl.u32 %v2898, 7
        %v2900 = vsub.s32 %v2897, %v2899
        %v2901 = vrot.slane %v2887, %v2900
        %v2902 = vcombine.low %v2837, %v2853
        %v2903 = vcombine.high %v2837, %v2853
        %v2905 = vunpack.c.l.s4 1934713408
        %v2906 = vunpack.c.0.s8 %v2905
        %v2907 = vlaneseq
        %v2908 = vshrl.u32 %v2907, 7
        %v2909 = vsub.s32 %v2906, %v2908
        %v2910 = vrot.slane %v2902, %v2909
        %v2912 = vunpack.c.l.s4 1934713408
        %v2913 = vunpack.c.0.s8 %v2912
        %v2914 = vlaneseq
        %v2915 = vshrl.u32 %v2914, 7
        %v2916 = vsub.s32 %v2913, %v2915
        %v2917 = vrot.slane %v2903, %v2916
        %v2918 = vcombine.low %v2862, %v2878
        %v2919 = vcombine.high %v2862, %v2878
        %v2921 = vunpack.c.l.s4 1934713408
        %v2922 = vunpack.c.0.s8 %v2921
        %v2923 = vlaneseq
        %v2924 = vshrl.u32 %v2923, 7
        %v2925 = vsub.s32 %v2922, %v2924
        %v2926 = vrot.slane %v2918, %v2925
        %v2928 = vunpack.c.l.s4 1934713408
        %v2929 = vunpack.c.0.s8 %v2928
        %v2930 = vlaneseq
        %v2931 = vshrl.u32 %v2930, 7
        %v2932 = vsub.s32 %v2929, %v2931
        %v2933 = vrot.slane %v2919, %v2932
        %v2934 = vcombine.low %v2869, %v2885
        %v2935 = vcombine.high %v2869, %v2885
        %v2937 = vunpack.c.l.s4 1934713408
        %v2938 = vunpack.c.0.s8 %v2937
        %v2939 = vlaneseq
        %v2940 = vshrl.u32 %v2939, 7
        %v2941 = vsub.s32 %v2938, %v2940
        %v2942 = vrot.slane %v2934, %v2941
        %v2944 = vunpack.c.l.s4 1934713408
        %v2945 = vunpack.c.0.s8 %v2944
        %v2946 = vlaneseq
        %v2947 = vshrl.u32 %v2946, 7
        %v2948 = vsub.s32 %v2945, %v2947
        %v2949 = vrot.slane %v2935, %v2948
        %v2950 = vcombine.low %v2894, %v2926
        %v2951 = vcombine.high %v2894, %v2926
        %v2952 = vcombine.low %v2901, %v2933
        %v2953 = vcombine.high %v2901, %v2933
        %v2954 = vcombine.low %v2910, %v2942
        %v2955 = vcombine.high %v2910, %v2942
        %v2956 = vcombine.low %v2917, %v2949
        %v2957 = vcombine.high %v2917, %v2949
        %v2958 = vcombine.low %v1231, %v1237
        %v2959 = vcombine.high %v1231, %v1237
        %v2961 = vunpack.c.l.s4 1983009808
        %v2962 = vunpack.c.0.s8 %v2961
        %v2963 = vlaneseq
        %v2964 = vshrl.u32 %v2963, 7
        %v2965 = vsub.s32 %v2962, %v2964
        %v2966 = vrot.slane %v2958, %v2965
        %v2968 = vunpack.c.l.s4 1983009808
        %v2969 = vunpack.c.0.s8 %v2968
        %v2970 = vlaneseq
        %v2971 = vshrl.u32 %v2970, 7
        %v2972 = vsub.s32 %v2969, %v2971
        %v2973 = vrot.slane %v2959, %v2972
        %v2974 = vcombine.low %v1234, %v1240
        %v2975 = vcombine.high %v1234, %v1240
        %v2977 = vunpack.c.l.s4 1983009808
        %v2978 = vunpack.c.0.s8 %v2977
        %v2979 = vlaneseq
        %v2980 = vshrl.u32 %v2979, 7
        %v2981 = vsub.s32 %v2978, %v2980
        %v2982 = vrot.slane %v2974, %v2981
        %v2984 = vunpack.c.l.s4 1983009808
        %v2985 = vunpack.c.0.s8 %v2984
        %v2986 = vlaneseq
        %v2987 = vshrl.u32 %v2986, 7
        %v2988 = vsub.s32 %v2985, %v2987
        %v2989 = vrot.slane %v2975, %v2988
        %v2990 = vcombine.low %v1243, %v1249
        %v2991 = vcombine.high %v1243, %v1249
        %v2993 = vunpack.c.l.s4 1983009808
        %v2994 = vunpack.c.0.s8 %v2993
        %v2995 = vlaneseq
        %v2996 = vshrl.u32 %v2995, 7
        %v2997 = vsub.s32 %v2994, %v2996
        %v2998 = vrot.slane %v2990, %v2997
        %v3000 = vunpack.c.l.s4 1983009808
        %v3001 = vunpack.c.0.s8 %v3000
        %v3002 = vlaneseq
        %v3003 = vshrl.u32 %v3002, 7
        %v3004 = vsub.s32 %v3001, %v3003
        %v3005 = vrot.slane %v2991, %v3004
        %v3006 = vcombine.low %v1246, %v1252
        %v3007 = vcombine.high %v1246, %v1252
        %v3009 = vunpack.c.l.s4 1983009808
        %v3010 = vunpack.c.0.s8 %v3009
        %v3011 = vlaneseq
        %v3012 = vshrl.u32 %v3011, 7
        %v3013 = vsub.s32 %v3010, %v3012
        %v3014 = vrot.slane %v3006, %v3013
        %v3016 = vunpack.c.l.s4 1983009808
        %v3017 = vunpack.c.0.s8 %v3016
        %v3018 = vlaneseq
        %v3019 = vshrl.u32 %v3018, 7
        %v3020 = vsub.s32 %v3017, %v3019
        %v3021 = vrot.slane %v3007, %v3020
        %v3022 = vcombine.low %v2966, %v2982
        %v3023 = vcombine.high %v2966, %v2982
        %v3025 = vunpack.c.l.s4 1934713408
        %v3026 = vunpack.c.0.s8 %v3025
        %v3027 = vlaneseq
        %v3028 = vshrl.u32 %v3027, 7
        %v3029 = vsub.s32 %v3026, %v3028
        %v3030 = vrot.slane %v3022, %v3029
        %v3032 = vunpack.c.l.s4 1934713408
        %v3033 = vunpack.c.0.s8 %v3032
        %v3034 = vlaneseq
        %v3035 = vshrl.u32 %v3034, 7
        %v3036 = vsub.s32 %v3033, %v3035
        %v3037 = vrot.slane %v3023, %v3036
        %v3038 = vcombine.low %v2973, %v2989
        %v3039 = vcombine.high %v2973, %v2989
        %v3041 = vunpack.c.l.s4 1934713408
        %v3042 = vunpack.c.0.s8 %v3041
        %v3043 = vlaneseq
        %v3044 = vshrl.u32 %v3043, 7
        %v3045 = vsub.s32 %v3042, %v3044
        %v3046 = vrot.slane %v3038, %v3045
        %v3048 = vunpack.c.l.s4 1934713408
        %v3049 = vunpack.c.0.s8 %v3048
        %v3050 = vlaneseq
        %v3051 = vshrl.u32 %v3050, 7
        %v3052 = vsub.s32 %v3049, %v3051
        %v3053 = vrot.slane %v3039, %v3052
        %v3054 = vcombine.low %v2998, %v3014
        %v3055 = vcombine.high %v2998, %v3014
        %v3057 = vunpack.c.l.s4 1934713408
        %v3058 = vunpack.c.0.s8 %v3057
        %v3059 = vlaneseq
        %v3060 = vshrl.u32 %v3059, 7
        %v3061 = vsub.s32 %v3058, %v3060
        %v3062 = vrot.slane %v3054, %v3061
        %v3064 = vunpack.c.l.s4 1934713408
        %v3065 = vunpack.c.0.s8 %v3064
        %v3066 = vlaneseq
        %v3067 = vshrl.u32 %v3066, 7
        %v3068 = vsub.s32 %v3065, %v3067
        %v3069 = vrot.slane %v3055, %v3068
        %v3070 = vcombine.low %v3005, %v3021
        %v3071 = vcombine.high %v3005, %v3021
        %v3073 = vunpack.c.l.s4 1934713408
        %v3074 = vunpack.c.0.s8 %v3073
        %v3075 = vlaneseq
        %v3076 = vshrl.u32 %v3075, 7
        %v3077 = vsub.s32 %v3074, %v3076
        %v3078 = vrot.slane %v3070, %v3077
        %v3080 = vunpack.c.l.s4 1934713408
        %v3081 = vunpack.c.0.s8 %v3080
        %v3082 = vlaneseq
        %v3083 = vshrl.u32 %v3082, 7
        %v3084 = vsub.s32 %v3081, %v3083
        %v3085 = vrot.slane %v3071, %v3084
        %v3086 = vcombine.low %v3030, %v3062
        %v3087 = vcombine.high %v3030, %v3062
        %v3088 = vcombine.low %v3037, %v3069
        %v3089 = vcombine.high %v3037, %v3069
        %v3090 = vcombine.low %v3046, %v3078
        %v3091 = vcombine.high %v3046, %v3078
        %v3092 = vcombine.low %v3053, %v3085
        %v3093 = vcombine.high %v3053, %v3085
        %v3094 = vcombine.low %v1255, %v1261
        %v3095 = vcombine.high %v1255, %v1261
        %v3097 = vunpack.c.l.s4 1983009808
        %v3098 = vunpack.c.0.s8 %v3097
        %v3099 = vlaneseq
        %v3100 = vshrl.u32 %v3099, 7
        %v3101 = vsub.s32 %v3098, %v3100
        %v3102 = vrot.slane %v3094, %v3101
        %v3104 = vunpack.c.l.s4 1983009808
        %v3105 = vunpack.c.0.s8 %v3104
        %v3106 = vlaneseq
        %v3107 = vshrl.u32 %v3106, 7
        %v3108 = vsub.s32 %v3105, %v3107
        %v3109 = vrot.slane %v3095, %v3108
        %v3110 = vcombine.low %v1258, %v1264
        %v3111 = vcombine.high %v1258, %v1264
        %v3113 = vunpack.c.l.s4 1983009808
        %v3114 = vunpack.c.0.s8 %v3113
        %v3115 = vlaneseq
        %v3116 = vshrl.u32 %v3115, 7
        %v3117 = vsub.s32 %v3114, %v3116
        %v3118 = vrot.slane %v3110, %v3117
        %v3120 = vunpack.c.l.s4 1983009808
        %v3121 = vunpack.c.0.s8 %v3120
        %v3122 = vlaneseq
        %v3123 = vshrl.u32 %v3122, 7
        %v3124 = vsub.s32 %v3121, %v3123
        %v3125 = vrot.slane %v3111, %v3124
        %v3126 = vcombine.low %v1267, %v1273
        %v3127 = vcombine.high %v1267, %v1273
        %v3129 = vunpack.c.l.s4 1983009808
        %v3130 = vunpack.c.0.s8 %v3129
        %v3131 = vlaneseq
        %v3132 = vshrl.u32 %v3131, 7
        %v3133 = vsub.s32 %v3130, %v3132
        %v3134 = vrot.slane %v3126, %v3133
        %v3136 = vunpack.c.l.s4 1983009808
        %v3137 = vunpack.c.0.s8 %v3136
        %v3138 = vlaneseq
        %v3139 = vshrl.u32 %v3138, 7
        %v3140 = vsub.s32 %v3137, %v3139
        %v3141 = vrot.slane %v3127, %v3140
        %v3142 = vcombine.low %v1270, %v1276
        %v3143 = vcombine.high %v1270, %v1276
        %v3145 = vunpack.c.l.s4 1983009808
        %v3146 = vunpack.c.0.s8 %v3145
        %v3147 = vlaneseq
        %v3148 = vshrl.u32 %v3147, 7
        %v3149 = vsub.s32 %v3146, %v3148
        %v3150 = vrot.slane %v3142, %v3149
        %v3152 = vunpack.c.l.s4 1983009808
        %v3153 = vunpack.c.0.s8 %v3152
        %v3154 = vlaneseq
        %v3155 = vshrl.u32 %v3154, 7
        %v3156 = vsub.s32 %v3153, %v3155
        %v3157 = vrot.slane %v3143, %v3156
        %v3158 = vcombine.low %v3102, %v3118
        %v3159 = vcombine.high %v3102, %v3118
        %v3161 = vunpack.c.l.s4 1934713408
        %v3162 = vunpack.c.0.s8 %v3161
        %v3163 = vlaneseq
        %v3164 = vshrl.u32 %v3163, 7
        %v3165 = vsub.s32 %v3162, %v3164
        %v3166 = vrot.slane %v3158, %v3165
        %v3168 = vunpack.c.l.s4 1934713408
        %v3169 = vunpack.c.0.s8 %v3168
        %v3170 = vlaneseq
        %v3171 = vshrl.u32 %v3170, 7
        %v3172 = vsub.s32 %v3169, %v3171
        %v3173 = vrot.slane %v3159, %v3172
        %v3174 = vcombine.low %v3109, %v3125
        %v3175 = vcombine.high %v3109, %v3125
        %v3177 = vunpack.c.l.s4 1934713408
        %v3178 = vunpack.c.0.s8 %v3177
        %v3179 = vlaneseq
        %v3180 = vshrl.u32 %v3179, 7
        %v3181 = vsub.s32 %v3178, %v3180
        %v3182 = vrot.slane %v3174, %v3181
        %v3184 = vunpack.c.l.s4 1934713408
        %v3185 = vunpack.c.0.s8 %v3184
        %v3186 = vlaneseq
        %v3187 = vshrl.u32 %v3186, 7
        %v3188 = vsub.s32 %v3185, %v3187
        %v3189 = vrot.slane %v3175, %v3188
        %v3190 = vcombine.low %v3134, %v3150
        %v3191 = vcombine.high %v3134, %v3150
        %v3193 = vunpack.c.l.s4 1934713408
        %v3194 = vunpack.c.0.s8 %v3193
        %v3195 = vlaneseq
        %v3196 = vshrl.u32 %v3195, 7
        %v3197 = vsub.s32 %v3194, %v3196
        %v3198 = vrot.slane %v3190, %v3197
        %v3200 = vunpack.c.l.s4 1934713408
        %v3201 = vunpack.c.0.s8 %v3200
        %v3202 = vlaneseq
        %v3203 = vshrl.u32 %v3202, 7
        %v3204 = vsub.s32 %v3201, %v3203
        %v3205 = vrot.slane %v3191, %v3204
        %v3206 = vcombine.low %v3141, %v3157
        %v3207 = vcombine.high %v3141, %v3157
        %v3209 = vunpack.c.l.s4 1934713408
        %v3210 = vunpack.c.0.s8 %v3209
        %v3211 = vlaneseq
        %v3212 = vshrl.u32 %v3211, 7
        %v3213 = vsub.s32 %v3210, %v3212
        %v3214 = vrot.slane %v3206, %v3213
        %v3216 = vunpack.c.l.s4 1934713408
        %v3217 = vunpack.c.0.s8 %v3216
        %v3218 = vlaneseq
        %v3219 = vshrl.u32 %v3218, 7
        %v3220 = vsub.s32 %v3217, %v3219
        %v3221 = vrot.slane %v3207, %v3220
        %v3222 = vcombine.low %v3166, %v3198
        %v3223 = vcombine.high %v3166, %v3198
        %v3224 = vcombine.low %v3173, %v3205
        %v3225 = vcombine.high %v3173, %v3205
        %v3226 = vcombine.low %v3182, %v3214
        %v3227 = vcombine.high %v3182, %v3214
        %v3228 = vcombine.low %v3189, %v3221
        %v3229 = vcombine.high %v3189, %v3221
        %v3230 = vcombine.low %v1279, %v1285
        %v3231 = vcombine.high %v1279, %v1285
        %v3233 = vunpack.c.l.s4 1983009808
        %v3234 = vunpack.c.0.s8 %v3233
        %v3235 = vlaneseq
        %v3236 = vshrl.u32 %v3235, 7
        %v3237 = vsub.s32 %v3234, %v3236
        %v3238 = vrot.slane %v3230, %v3237
        %v3240 = vunpack.c.l.s4 1983009808
        %v3241 = vunpack.c.0.s8 %v3240
        %v3242 = vlaneseq
        %v3243 = vshrl.u32 %v3242, 7
        %v3244 = vsub.s32 %v3241, %v3243
        %v3245 = vrot.slane %v3231, %v3244
        %v3246 = vcombine.low %v1282, %v1288
        %v3247 = vcombine.high %v1282, %v1288
        %v3249 = vunpack.c.l.s4 1983009808
        %v3250 = vunpack.c.0.s8 %v3249
        %v3251 = vlaneseq
        %v3252 = vshrl.u32 %v3251, 7
        %v3253 = vsub.s32 %v3250, %v3252
        %v3254 = vrot.slane %v3246, %v3253
        %v3256 = vunpack.c.l.s4 1983009808
        %v3257 = vunpack.c.0.s8 %v3256
        %v3258 = vlaneseq
        %v3259 = vshrl.u32 %v3258, 7
        %v3260 = vsub.s32 %v3257, %v3259
        %v3261 = vrot.slane %v3247, %v3260
        %v3262 = vcombine.low %v1291, %v1297
        %v3263 = vcombine.high %v1291, %v1297
        %v3265 = vunpack.c.l.s4 1983009808
        %v3266 = vunpack.c.0.s8 %v3265
        %v3267 = vlaneseq
        %v3268 = vshrl.u32 %v3267, 7
        %v3269 = vsub.s32 %v3266, %v3268
        %v3270 = vrot.slane %v3262, %v3269
        %v3272 = vunpack.c.l.s4 1983009808
        %v3273 = vunpack.c.0.s8 %v3272
        %v3274 = vlaneseq
        %v3275 = vshrl.u32 %v3274, 7
        %v3276 = vsub.s32 %v3273, %v3275
        %v3277 = vrot.slane %v3263, %v3276
        %v3278 = vcombine.low %v1294, %v1300
        %v3279 = vcombine.high %v1294, %v1300
        %v3281 = vunpack.c.l.s4 1983009808
        %v3282 = vunpack.c.0.s8 %v3281
        %v3283 = vlaneseq
        %v3284 = vshrl.u32 %v3283, 7
        %v3285 = vsub.s32 %v3282, %v3284
        %v3286 = vrot.slane %v3278, %v3285
        %v3288 = vunpack.c.l.s4 1983009808
        %v3289 = vunpack.c.0.s8 %v3288
        %v3290 = vlaneseq
        %v3291 = vshrl.u32 %v3290, 7
        %v3292 = vsub.s32 %v3289, %v3291
        %v3293 = vrot.slane %v3279, %v3292
        %v3294 = vcombine.low %v3238, %v3254
        %v3295 = vcombine.high %v3238, %v3254
        %v3297 = vunpack.c.l.s4 1934713408
        %v3298 = vunpack.c.0.s8 %v3297
        %v3299 = vlaneseq
        %v3300 = vshrl.u32 %v3299, 7
        %v3301 = vsub.s32 %v3298, %v3300
        %v3302 = vrot.slane %v3294, %v3301
        %v3304 = vunpack.c.l.s4 1934713408
        %v3305 = vunpack.c.0.s8 %v3304
        %v3306 = vlaneseq
        %v3307 = vshrl.u32 %v3306, 7
        %v3308 = vsub.s32 %v3305, %v3307
        %v3309 = vrot.slane %v3295, %v3308
        %v3310 = vcombine.low %v3245, %v3261
        %v3311 = vcombine.high %v3245, %v3261
        %v3313 = vunpack.c.l.s4 1934713408
        %v3314 = vunpack.c.0.s8 %v3313
        %v3315 = vlaneseq
        %v3316 = vshrl.u32 %v3315, 7
        %v3317 = vsub.s32 %v3314, %v3316
        %v3318 = vrot.slane %v3310, %v3317
        %v3320 = vunpack.c.l.s4 1934713408
        %v3321 = vunpack.c.0.s8 %v3320
        %v3322 = vlaneseq
        %v3323 = vshrl.u32 %v3322, 7
        %v3324 = vsub.s32 %v3321, %v3323
        %v3325 = vrot.slane %v3311, %v3324
        %v3326 = vcombine.low %v3270, %v3286
        %v3327 = vcombine.high %v3270, %v3286
        %v3329 = vunpack.c.l.s4 1934713408
        %v3330 = vunpack.c.0.s8 %v3329
        %v3331 = vlaneseq
        %v3332 = vshrl.u32 %v3331, 7
        %v3333 = vsub.s32 %v3330, %v3332
        %v3334 = vrot.slane %v3326, %v3333
        %v3336 = vunpack.c.l.s4 1934713408
        %v3337 = vunpack.c.0.s8 %v3336
        %v3338 = vlaneseq
        %v3339 = vshrl.u32 %v3338, 7
        %v3340 = vsub.s32 %v3337, %v3339
        %v3341 = vrot.slane %v3327, %v3340
        %v3342 = vcombine.low %v3277, %v3293
        %v3343 = vcombine.high %v3277, %v3293
        %v3345 = vunpack.c.l.s4 1934713408
        %v3346 = vunpack.c.0.s8 %v3345
        %v3347 = vlaneseq
        %v3348 = vshrl.u32 %v3347, 7
        %v3349 = vsub.s32 %v3346, %v3348
        %v3350 = vrot.slane %v3342, %v3349
        %v3352 = vunpack.c.l.s4 1934713408
        %v3353 = vunpack.c.0.s8 %v3352
        %v3354 = vlaneseq
        %v3355 = vshrl.u32 %v3354, 7
        %v3356 = vsub.s32 %v3353, %v3355
        %v3357 = vrot.slane %v3343, %v3356
        %v3358 = vcombine.low %v3302, %v3334
        %v3359 = vcombine.high %v3302, %v3334
        %v3360 = vcombine.low %v3309, %v3341
        %v3361 = vcombine.high %v3309, %v3341
        %v3362 = vcombine.low %v3318, %v3350
        %v3363 = vcombine.high %v3318, %v3350
        %v3364 = vcombine.low %v3325, %v3357
        %v3365 = vcombine.high %v3325, %v3357
        %v3366 = vcombine.low %v1303, %v1309
        %v3367 = vcombine.high %v1303, %v1309
        %v3369 = vunpack.c.l.s4 1983009808
        %v3370 = vunpack.c.0.s8 %v3369
        %v3371 = vlaneseq
        %v3372 = vshrl.u32 %v3371, 7
        %v3373 = vsub.s32 %v3370, %v3372
        %v3374 = vrot.slane %v3366, %v3373
        %v3376 = vunpack.c.l.s4 1983009808
        %v3377 = vunpack.c.0.s8 %v3376
        %v3378 = vlaneseq
        %v3379 = vshrl.u32 %v3378, 7
        %v3380 = vsub.s32 %v3377, %v3379
        %v3381 = vrot.slane %v3367, %v3380
        %v3382 = vcombine.low %v1306, %v1312
        %v3383 = vcombine.high %v1306, %v1312
        %v3385 = vunpack.c.l.s4 1983009808
        %v3386 = vunpack.c.0.s8 %v3385
        %v3387 = vlaneseq
        %v3388 = vshrl.u32 %v3387, 7
        %v3389 = vsub.s32 %v3386, %v3388
        %v3390 = vrot.slane %v3382, %v3389
        %v3392 = vunpack.c.l.s4 1983009808
        %v3393 = vunpack.c.0.s8 %v3392
        %v3394 = vlaneseq
        %v3395 = vshrl.u32 %v3394, 7
        %v3396 = vsub.s32 %v3393, %v3395
        %v3397 = vrot.slane %v3383, %v3396
        %v3398 = vcombine.low %v1315, %v1321
        %v3399 = vcombine.high %v1315, %v1321
        %v3401 = vunpack.c.l.s4 1983009808
        %v3402 = vunpack.c.0.s8 %v3401
        %v3403 = vlaneseq
        %v3404 = vshrl.u32 %v3403, 7
        %v3405 = vsub.s32 %v3402, %v3404
        %v3406 = vrot.slane %v3398, %v3405
        %v3408 = vunpack.c.l.s4 1983009808
        %v3409 = vunpack.c.0.s8 %v3408
        %v3410 = vlaneseq
        %v3411 = vshrl.u32 %v3410, 7
        %v3412 = vsub.s32 %v3409, %v3411
        %v3413 = vrot.slane %v3399, %v3412
        %v3414 = vcombine.low %v1318, %v1324
        %v3415 = vcombine.high %v1318, %v1324
        %v3417 = vunpack.c.l.s4 1983009808
        %v3418 = vunpack.c.0.s8 %v3417
        %v3419 = vlaneseq
        %v3420 = vshrl.u32 %v3419, 7
        %v3421 = vsub.s32 %v3418, %v3420
        %v3422 = vrot.slane %v3414, %v3421
        %v3424 = vunpack.c.l.s4 1983009808
        %v3425 = vunpack.c.0.s8 %v3424
        %v3426 = vlaneseq
        %v3427 = vshrl.u32 %v3426, 7
        %v3428 = vsub.s32 %v3425, %v3427
        %v3429 = vrot.slane %v3415, %v3428
        %v3430 = vcombine.low %v3374, %v3390
        %v3431 = vcombine.high %v3374, %v3390
        %v3433 = vunpack.c.l.s4 1934713408
        %v3434 = vunpack.c.0.s8 %v3433
        %v3435 = vlaneseq
        %v3436 = vshrl.u32 %v3435, 7
        %v3437 = vsub.s32 %v3434, %v3436
        %v3438 = vrot.slane %v3430, %v3437
        %v3440 = vunpack.c.l.s4 1934713408
        %v3441 = vunpack.c.0.s8 %v3440
        %v3442 = vlaneseq
        %v3443 = vshrl.u32 %v3442, 7
        %v3444 = vsub.s32 %v3441, %v3443
        %v3445 = vrot.slane %v3431, %v3444
        %v3446 = vcombine.low %v3381, %v3397
        %v3447 = vcombine.high %v3381, %v3397
        %v3449 = vunpack.c.l.s4 1934713408
        %v3450 = vunpack.c.0.s8 %v3449
        %v3451 = vlaneseq
        %v3452 = vshrl.u32 %v3451, 7
        %v3453 = vsub.s32 %v3450, %v3452
        %v3454 = vrot.slane %v3446, %v3453
        %v3456 = vunpack.c.l.s4 1934713408
        %v3457 = vunpack.c.0.s8 %v3456
        %v3458 = vlaneseq
        %v3459 = vshrl.u32 %v3458, 7
        %v3460 = vsub.s32 %v3457, %v3459
        %v3461 = vrot.slane %v3447, %v3460
        %v3462 = vcombine.low %v3406, %v3422
        %v3463 = vcombine.high %v3406, %v3422
        %v3465 = vunpack.c.l.s4 1934713408
        %v3466 = vunpack.c.0.s8 %v3465
        %v3467 = vlaneseq
        %v3468 = vshrl.u32 %v3467, 7
        %v3469 = vsub.s32 %v3466, %v3468
        %v3470 = vrot.slane %v3462, %v3469
        %v3472 = vunpack.c.l.s4 1934713408
        %v3473 = vunpack.c.0.s8 %v3472
        %v3474 = vlaneseq
        %v3475 = vshrl.u32 %v3474, 7
        %v3476 = vsub.s32 %v3473, %v3475
        %v3477 = vrot.slane %v3463, %v3476
        %v3478 = vcombine.low %v3413, %v3429
        %v3479 = vcombine.high %v3413, %v3429
        %v3481 = vunpack.c.l.s4 1934713408
        %v3482 = vunpack.c.0.s8 %v3481
        %v3483 = vlaneseq
        %v3484 = vshrl.u32 %v3483, 7
        %v3485 = vsub.s32 %v3482, %v3484
        %v3486 = vrot.slane %v3478, %v3485
        %v3488 = vunpack.c.l.s4 1934713408
        %v3489 = vunpack.c.0.s8 %v3488
        %v3490 = vlaneseq
        %v3491 = vshrl.u32 %v3490, 7
        %v3492 = vsub.s32 %v3489, %v3491
        %v3493 = vrot.slane %v3479, %v3492
        %v3494 = vcombine.low %v3438, %v3470
        %v3495 = vcombine.high %v3438, %v3470
        %v3496 = vcombine.low %v3445, %v3477
        %v3497 = vcombine.high %v3445, %v3477
        %v3498 = vcombine.low %v3454, %v3486
        %v3499 = vcombine.high %v3454, %v3486
        %v3500 = vcombine.low %v3461, %v3493
        %v3501 = vcombine.high %v3461, %v3493
        %vm3502 = vcmask 15360
        %v3503 = vsel %vm3502, %v1454, -inf
        %3504 = vmax.xlane.f32.xlu0 %v3503
        %v3505 = vpop.xlane.xlu0 %3504
        %v3506 = vsel %vm3502, %v1590, -inf
        %3507 = vmax.xlane.f32.xlu0 %v3506
        %v3508 = vpop.xlane.xlu0 %3507
        %v3509 = vsel %vm3502, %v1726, -inf
        %3510 = vmax.xlane.f32.xlu0 %v3509
        %v3511 = vpop.xlane.xlu0 %3510
        %v3512 = vsel %vm3502, %v1862, -inf
        %3513 = vmax.xlane.f32.xlu0 %v3512
        %v3514 = vpop.xlane.xlu0 %3513
        %v3515 = vsel %vm3502, %v1998, -inf
        %3516 = vmax.xlane.f32.xlu0 %v3515
        %v3517 = vpop.xlane.xlu0 %3516
        %v3518 = vsel %vm3502, %v2134, -inf
        %3519 = vmax.xlane.f32.xlu0 %v3518
        %v3520 = vpop.xlane.xlu0 %3519
        %v3521 = vsel %vm3502, %v2270, -inf
        %3522 = vmax.xlane.f32.xlu0 %v3521
        %v3523 = vpop.xlane.xlu0 %3522
        %v3524 = vsel %vm3502, %v2406, -inf
        %3525 = vmax.xlane.f32.xlu0 %v3524
        %v3526 = vpop.xlane.xlu0 %3525
        %v3527 = vsel %vm3502, %v2542, -inf
        %3528 = vmax.xlane.f32.xlu0 %v3527
        %v3529 = vpop.xlane.xlu0 %3528
        %v3530 = vsel %vm3502, %v2678, -inf
        %3531 = vmax.xlane.f32.xlu0 %v3530
        %v3532 = vpop.xlane.xlu0 %3531
        %v3533 = vsel %vm3502, %v2814, -inf
        %3534 = vmax.xlane.f32.xlu0 %v3533
        %v3535 = vpop.xlane.xlu0 %3534
        %v3536 = vsel %vm3502, %v2950, -inf
        %3537 = vmax.xlane.f32.xlu0 %v3536
        %v3538 = vpop.xlane.xlu0 %3537
        %v3539 = vsel %vm3502, %v3086, -inf
        %3540 = vmax.xlane.f32.xlu0 %v3539
        %v3541 = vpop.xlane.xlu0 %3540
        %v3542 = vsel %vm3502, %v3222, -inf
        %3543 = vmax.xlane.f32.xlu0 %v3542
        %v3544 = vpop.xlane.xlu0 %3543
        %v3545 = vsel %vm3502, %v3358, -inf
        %3546 = vmax.xlane.f32.xlu0 %v3545
        %v3547 = vpop.xlane.xlu0 %3546
        %v3548 = vsel %vm3502, %v3494, -inf
        %3549 = vmax.xlane.f32.xlu0 %v3548
        %v3550 = vpop.xlane.xlu0 %3549
        %v3551 = vsel %vm3502, %v1455, -inf
        %3552 = vmax.xlane.f32.xlu0 %v3551
        %v3553 = vpop.xlane.xlu0 %3552
        %v3554 = vsel %vm3502, %v1591, -inf
        %3555 = vmax.xlane.f32.xlu0 %v3554
        %v3556 = vpop.xlane.xlu0 %3555
        %v3557 = vsel %vm3502, %v1727, -inf
        %3558 = vmax.xlane.f32.xlu0 %v3557
        %v3559 = vpop.xlane.xlu0 %3558
        %v3560 = vsel %vm3502, %v1863, -inf
        %3561 = vmax.xlane.f32.xlu0 %v3560
        %v3562 = vpop.xlane.xlu0 %3561
        %v3563 = vsel %vm3502, %v1999, -inf
        %3564 = vmax.xlane.f32.xlu0 %v3563
        %v3565 = vpop.xlane.xlu0 %3564
        %v3566 = vsel %vm3502, %v2135, -inf
        %3567 = vmax.xlane.f32.xlu0 %v3566
        %v3568 = vpop.xlane.xlu0 %3567
        %v3569 = vsel %vm3502, %v2271, -inf
        %3570 = vmax.xlane.f32.xlu0 %v3569
        %v3571 = vpop.xlane.xlu0 %3570
        %v3572 = vsel %vm3502, %v2407, -inf
        %3573 = vmax.xlane.f32.xlu0 %v3572
        %v3574 = vpop.xlane.xlu0 %3573
        %v3575 = vsel %vm3502, %v2543, -inf
        %3576 = vmax.xlane.f32.xlu0 %v3575
        %v3577 = vpop.xlane.xlu0 %3576
        %v3578 = vsel %vm3502, %v2679, -inf
        %3579 = vmax.xlane.f32.xlu0 %v3578
        %v3580 = vpop.xlane.xlu0 %3579
        %v3581 = vsel %vm3502, %v2815, -inf
        %3582 = vmax.xlane.f32.xlu0 %v3581
        %v3583 = vpop.xlane.xlu0 %3582
        %v3584 = vsel %vm3502, %v2951, -inf
        %3585 = vmax.xlane.f32.xlu0 %v3584
        %v3586 = vpop.xlane.xlu0 %3585
        %v3587 = vsel %vm3502, %v3087, -inf
        %3588 = vmax.xlane.f32.xlu0 %v3587
        %v3589 = vpop.xlane.xlu0 %3588
        %v3590 = vsel %vm3502, %v3223, -inf
        %3591 = vmax.xlane.f32.xlu0 %v3590
        %v3592 = vpop.xlane.xlu0 %3591
        %v3593 = vsel %vm3502, %v3359, -inf
        %3594 = vmax.xlane.f32.xlu0 %v3593
        %v3595 = vpop.xlane.xlu0 %3594
        %v3596 = vsel %vm3502, %v3495, -inf
        %3597 = vmax.xlane.f32.xlu0 %v3596
        %v3598 = vpop.xlane.xlu0 %3597
        %v3599 = vsel %vm3502, %v1456, -inf
        %3600 = vmax.xlane.f32.xlu0 %v3599
        %v3601 = vpop.xlane.xlu0 %3600
        %v3602 = vsel %vm3502, %v1592, -inf
        %3603 = vmax.xlane.f32.xlu0 %v3602
        %v3604 = vpop.xlane.xlu0 %3603
        %v3605 = vsel %vm3502, %v1728, -inf
        %3606 = vmax.xlane.f32.xlu0 %v3605
        %v3607 = vpop.xlane.xlu0 %3606
        %v3608 = vsel %vm3502, %v1864, -inf
        %3609 = vmax.xlane.f32.xlu0 %v3608
        %v3610 = vpop.xlane.xlu0 %3609
        %v3611 = vsel %vm3502, %v2000, -inf
        %3612 = vmax.xlane.f32.xlu0 %v3611
        %v3613 = vpop.xlane.xlu0 %3612
        %v3614 = vsel %vm3502, %v2136, -inf
        %3615 = vmax.xlane.f32.xlu0 %v3614
        %v3616 = vpop.xlane.xlu0 %3615
        %v3617 = vsel %vm3502, %v2272, -inf
        %3618 = vmax.xlane.f32.xlu0 %v3617
        %v3619 = vpop.xlane.xlu0 %3618
        %v3620 = vsel %vm3502, %v2408, -inf
        %3621 = vmax.xlane.f32.xlu0 %v3620
        %v3622 = vpop.xlane.xlu0 %3621
        %v3623 = vsel %vm3502, %v2544, -inf
        %3624 = vmax.xlane.f32.xlu0 %v3623
        %v3625 = vpop.xlane.xlu0 %3624
        %v3626 = vsel %vm3502, %v2680, -inf
        %3627 = vmax.xlane.f32.xlu0 %v3626
        %v3628 = vpop.xlane.xlu0 %3627
        %v3629 = vsel %vm3502, %v2816, -inf
        %3630 = vmax.xlane.f32.xlu0 %v3629
        %v3631 = vpop.xlane.xlu0 %3630
        %v3632 = vsel %vm3502, %v2952, -inf
        %3633 = vmax.xlane.f32.xlu0 %v3632
        %v3634 = vpop.xlane.xlu0 %3633
        %v3635 = vsel %vm3502, %v3088, -inf
        %3636 = vmax.xlane.f32.xlu0 %v3635
        %v3637 = vpop.xlane.xlu0 %3636
        %v3638 = vsel %vm3502, %v3224, -inf
        %3639 = vmax.xlane.f32.xlu0 %v3638
        %v3640 = vpop.xlane.xlu0 %3639
        %v3641 = vsel %vm3502, %v3360, -inf
        %3642 = vmax.xlane.f32.xlu0 %v3641
        %v3643 = vpop.xlane.xlu0 %3642
        %v3644 = vsel %vm3502, %v3496, -inf
        %3645 = vmax.xlane.f32.xlu0 %v3644
        %v3646 = vpop.xlane.xlu0 %3645
        %v3647 = vsel %vm3502, %v1457, -inf
        %3648 = vmax.xlane.f32.xlu0 %v3647
        %v3649 = vpop.xlane.xlu0 %3648
        %v3650 = vsel %vm3502, %v1593, -inf
        %3651 = vmax.xlane.f32.xlu0 %v3650
        %v3652 = vpop.xlane.xlu0 %3651
        %v3653 = vsel %vm3502, %v1729, -inf
        %3654 = vmax.xlane.f32.xlu0 %v3653
        %v3655 = vpop.xlane.xlu0 %3654
        %v3656 = vsel %vm3502, %v1865, -inf
        %3657 = vmax.xlane.f32.xlu0 %v3656
        %v3658 = vpop.xlane.xlu0 %3657
        %v3659 = vsel %vm3502, %v2001, -inf
        %3660 = vmax.xlane.f32.xlu0 %v3659
        %v3661 = vpop.xlane.xlu0 %3660
        %v3662 = vsel %vm3502, %v2137, -inf
        %3663 = vmax.xlane.f32.xlu0 %v3662
        %v3664 = vpop.xlane.xlu0 %3663
        %v3665 = vsel %vm3502, %v2273, -inf
        %3666 = vmax.xlane.f32.xlu0 %v3665
        %v3667 = vpop.xlane.xlu0 %3666
        %v3668 = vsel %vm3502, %v2409, -inf
        %3669 = vmax.xlane.f32.xlu0 %v3668
        %v3670 = vpop.xlane.xlu0 %3669
        %v3671 = vsel %vm3502, %v2545, -inf
        %3672 = vmax.xlane.f32.xlu0 %v3671
        %v3673 = vpop.xlane.xlu0 %3672
        %v3674 = vsel %vm3502, %v2681, -inf
        %3675 = vmax.xlane.f32.xlu0 %v3674
        %v3676 = vpop.xlane.xlu0 %3675
        %v3677 = vsel %vm3502, %v2817, -inf
        %3678 = vmax.xlane.f32.xlu0 %v3677
        %v3679 = vpop.xlane.xlu0 %3678
        %v3680 = vsel %vm3502, %v2953, -inf
        %3681 = vmax.xlane.f32.xlu0 %v3680
        %v3682 = vpop.xlane.xlu0 %3681
        %v3683 = vsel %vm3502, %v3089, -inf
        %3684 = vmax.xlane.f32.xlu0 %v3683
        %v3685 = vpop.xlane.xlu0 %3684
        %v3686 = vsel %vm3502, %v3225, -inf
        %3687 = vmax.xlane.f32.xlu0 %v3686
        %v3688 = vpop.xlane.xlu0 %3687
        %v3689 = vsel %vm3502, %v3361, -inf
        %3690 = vmax.xlane.f32.xlu0 %v3689
        %v3691 = vpop.xlane.xlu0 %3690
        %v3692 = vsel %vm3502, %v3497, -inf
        %3693 = vmax.xlane.f32.xlu0 %v3692
        %v3694 = vpop.xlane.xlu0 %3693
        %v3695 = vsel %vm3502, %v1458, -inf
        %3696 = vmax.xlane.f32.xlu0 %v3695
        %v3697 = vpop.xlane.xlu0 %3696
        %v3698 = vsel %vm3502, %v1594, -inf
        %3699 = vmax.xlane.f32.xlu0 %v3698
        %v3700 = vpop.xlane.xlu0 %3699
        %v3701 = vsel %vm3502, %v1730, -inf
        %3702 = vmax.xlane.f32.xlu0 %v3701
        %v3703 = vpop.xlane.xlu0 %3702
        %v3704 = vsel %vm3502, %v1866, -inf
        %3705 = vmax.xlane.f32.xlu0 %v3704
        %v3706 = vpop.xlane.xlu0 %3705
        %v3707 = vsel %vm3502, %v2002, -inf
        %3708 = vmax.xlane.f32.xlu0 %v3707
        %v3709 = vpop.xlane.xlu0 %3708
        %v3710 = vsel %vm3502, %v2138, -inf
        %3711 = vmax.xlane.f32.xlu0 %v3710
        %v3712 = vpop.xlane.xlu0 %3711
        %v3713 = vsel %vm3502, %v2274, -inf
        %3714 = vmax.xlane.f32.xlu0 %v3713
        %v3715 = vpop.xlane.xlu0 %3714
        %v3716 = vsel %vm3502, %v2410, -inf
        %3717 = vmax.xlane.f32.xlu0 %v3716
        %v3718 = vpop.xlane.xlu0 %3717
        %v3719 = vsel %vm3502, %v2546, -inf
        %3720 = vmax.xlane.f32.xlu0 %v3719
        %v3721 = vpop.xlane.xlu0 %3720
        %v3722 = vsel %vm3502, %v2682, -inf
        %3723 = vmax.xlane.f32.xlu0 %v3722
        %v3724 = vpop.xlane.xlu0 %3723
        %v3725 = vsel %vm3502, %v2818, -inf
        %3726 = vmax.xlane.f32.xlu0 %v3725
        %v3727 = vpop.xlane.xlu0 %3726
        %v3728 = vsel %vm3502, %v2954, -inf
        %3729 = vmax.xlane.f32.xlu0 %v3728
        %v3730 = vpop.xlane.xlu0 %3729
        %v3731 = vsel %vm3502, %v3090, -inf
        %3732 = vmax.xlane.f32.xlu0 %v3731
        %v3733 = vpop.xlane.xlu0 %3732
        %v3734 = vsel %vm3502, %v3226, -inf
        %3735 = vmax.xlane.f32.xlu0 %v3734
        %v3736 = vpop.xlane.xlu0 %3735
        %v3737 = vsel %vm3502, %v3362, -inf
        %3738 = vmax.xlane.f32.xlu0 %v3737
        %v3739 = vpop.xlane.xlu0 %3738
        %v3740 = vsel %vm3502, %v3498, -inf
        %3741 = vmax.xlane.f32.xlu0 %v3740
        %v3742 = vpop.xlane.xlu0 %3741
        %v3743 = vsel %vm3502, %v1459, -inf
        %3744 = vmax.xlane.f32.xlu0 %v3743
        %v3745 = vpop.xlane.xlu0 %3744
        %v3746 = vsel %vm3502, %v1595, -inf
        %3747 = vmax.xlane.f32.xlu0 %v3746
        %v3748 = vpop.xlane.xlu0 %3747
        %v3749 = vsel %vm3502, %v1731, -inf
        %3750 = vmax.xlane.f32.xlu0 %v3749
        %v3751 = vpop.xlane.xlu0 %3750
        %v3752 = vsel %vm3502, %v1867, -inf
        %3753 = vmax.xlane.f32.xlu0 %v3752
        %v3754 = vpop.xlane.xlu0 %3753
        %v3755 = vsel %vm3502, %v2003, -inf
        %3756 = vmax.xlane.f32.xlu0 %v3755
        %v3757 = vpop.xlane.xlu0 %3756
        %v3758 = vsel %vm3502, %v2139, -inf
        %3759 = vmax.xlane.f32.xlu0 %v3758
        %v3760 = vpop.xlane.xlu0 %3759
        %v3761 = vsel %vm3502, %v2275, -inf
        %3762 = vmax.xlane.f32.xlu0 %v3761
        %v3763 = vpop.xlane.xlu0 %3762
        %v3764 = vsel %vm3502, %v2411, -inf
        %3765 = vmax.xlane.f32.xlu0 %v3764
        %v3766 = vpop.xlane.xlu0 %3765
        %v3767 = vsel %vm3502, %v2547, -inf
        %3768 = vmax.xlane.f32.xlu0 %v3767
        %v3769 = vpop.xlane.xlu0 %3768
        %v3770 = vsel %vm3502, %v2683, -inf
        %3771 = vmax.xlane.f32.xlu0 %v3770
        %v3772 = vpop.xlane.xlu0 %3771
        %v3773 = vsel %vm3502, %v2819, -inf
        %3774 = vmax.xlane.f32.xlu0 %v3773
        %v3775 = vpop.xlane.xlu0 %3774
        %v3776 = vsel %vm3502, %v2955, -inf
        %3777 = vmax.xlane.f32.xlu0 %v3776
        %v3778 = vpop.xlane.xlu0 %3777
        %v3779 = vsel %vm3502, %v3091, -inf
        %3780 = vmax.xlane.f32.xlu0 %v3779
        %v3781 = vpop.xlane.xlu0 %3780
        %v3782 = vsel %vm3502, %v3227, -inf
        %3783 = vmax.xlane.f32.xlu0 %v3782
        %v3784 = vpop.xlane.xlu0 %3783
        %v3785 = vsel %vm3502, %v3363, -inf
        %3786 = vmax.xlane.f32.xlu0 %v3785
        %v3787 = vpop.xlane.xlu0 %3786
        %v3788 = vsel %vm3502, %v3499, -inf
        %3789 = vmax.xlane.f32.xlu0 %v3788
        %v3790 = vpop.xlane.xlu0 %3789
        %v3791 = vsel %vm3502, %v1460, -inf
        %3792 = vmax.xlane.f32.xlu0 %v3791
        %v3793 = vpop.xlane.xlu0 %3792
        %v3794 = vsel %vm3502, %v1596, -inf
        %3795 = vmax.xlane.f32.xlu0 %v3794
        %v3796 = vpop.xlane.xlu0 %3795
        %v3797 = vsel %vm3502, %v1732, -inf
        %3798 = vmax.xlane.f32.xlu0 %v3797
        %v3799 = vpop.xlane.xlu0 %3798
        %v3800 = vsel %vm3502, %v1868, -inf
        %3801 = vmax.xlane.f32.xlu0 %v3800
        %v3802 = vpop.xlane.xlu0 %3801
        %v3803 = vsel %vm3502, %v2004, -inf
        %3804 = vmax.xlane.f32.xlu0 %v3803
        %v3805 = vpop.xlane.xlu0 %3804
        %v3806 = vsel %vm3502, %v2140, -inf
        %3807 = vmax.xlane.f32.xlu0 %v3806
        %v3808 = vpop.xlane.xlu0 %3807
        %v3809 = vsel %vm3502, %v2276, -inf
        %3810 = vmax.xlane.f32.xlu0 %v3809
        %v3811 = vpop.xlane.xlu0 %3810
        %v3812 = vsel %vm3502, %v2412, -inf
        %3813 = vmax.xlane.f32.xlu0 %v3812
        %v3814 = vpop.xlane.xlu0 %3813
        %v3815 = vsel %vm3502, %v2548, -inf
        %3816 = vmax.xlane.f32.xlu0 %v3815
        %v3817 = vpop.xlane.xlu0 %3816
        %v3818 = vsel %vm3502, %v2684, -inf
        %3819 = vmax.xlane.f32.xlu0 %v3818
        %v3820 = vpop.xlane.xlu0 %3819
        %v3821 = vsel %vm3502, %v2820, -inf
        %3822 = vmax.xlane.f32.xlu0 %v3821
        %v3823 = vpop.xlane.xlu0 %3822
        %v3824 = vsel %vm3502, %v2956, -inf
        %3825 = vmax.xlane.f32.xlu0 %v3824
        %v3826 = vpop.xlane.xlu0 %3825
        %v3827 = vsel %vm3502, %v3092, -inf
        %3828 = vmax.xlane.f32.xlu0 %v3827
        %v3829 = vpop.xlane.xlu0 %3828
        %v3830 = vsel %vm3502, %v3228, -inf
        %3831 = vmax.xlane.f32.xlu0 %v3830
        %v3832 = vpop.xlane.xlu0 %3831
        %v3833 = vsel %vm3502, %v3364, -inf
        %3834 = vmax.xlane.f32.xlu0 %v3833
        %v3835 = vpop.xlane.xlu0 %3834
        %v3836 = vsel %vm3502, %v3500, -inf
        %3837 = vmax.xlane.f32.xlu0 %v3836
        %v3838 = vpop.xlane.xlu0 %3837
        %v3839 = vsel %vm3502, %v1461, -inf
        %3840 = vmax.xlane.f32.xlu0 %v3839
        %v3841 = vpop.xlane.xlu0 %3840
        %v3842 = vsel %vm3502, %v1597, -inf
        %3843 = vmax.xlane.f32.xlu0 %v3842
        %v3844 = vpop.xlane.xlu0 %3843
        %v3845 = vsel %vm3502, %v1733, -inf
        %3846 = vmax.xlane.f32.xlu0 %v3845
        %v3847 = vpop.xlane.xlu0 %3846
        %v3848 = vsel %vm3502, %v1869, -inf
        %3849 = vmax.xlane.f32.xlu0 %v3848
        %v3850 = vpop.xlane.xlu0 %3849
        %v3851 = vsel %vm3502, %v2005, -inf
        %3852 = vmax.xlane.f32.xlu0 %v3851
        %v3853 = vpop.xlane.xlu0 %3852
        %v3854 = vsel %vm3502, %v2141, -inf
        %3855 = vmax.xlane.f32.xlu0 %v3854
        %v3856 = vpop.xlane.xlu0 %3855
        %v3857 = vsel %vm3502, %v2277, -inf
        %3858 = vmax.xlane.f32.xlu0 %v3857
        %v3859 = vpop.xlane.xlu0 %3858
        %v3860 = vsel %vm3502, %v2413, -inf
        %3861 = vmax.xlane.f32.xlu0 %v3860
        %v3862 = vpop.xlane.xlu0 %3861
        %v3863 = vsel %vm3502, %v2549, -inf
        %3864 = vmax.xlane.f32.xlu0 %v3863
        %v3865 = vpop.xlane.xlu0 %3864
        %v3866 = vsel %vm3502, %v2685, -inf
        %3867 = vmax.xlane.f32.xlu0 %v3866
        %v3868 = vpop.xlane.xlu0 %3867
        %v3869 = vsel %vm3502, %v2821, -inf
        %3870 = vmax.xlane.f32.xlu0 %v3869
        %v3871 = vpop.xlane.xlu0 %3870
        %v3872 = vsel %vm3502, %v2957, -inf
        %3873 = vmax.xlane.f32.xlu0 %v3872
        %v3874 = vpop.xlane.xlu0 %3873
        %v3875 = vsel %vm3502, %v3093, -inf
        %3876 = vmax.xlane.f32.xlu0 %v3875
        %v3877 = vpop.xlane.xlu0 %3876
        %v3878 = vsel %vm3502, %v3229, -inf
        %3879 = vmax.xlane.f32.xlu0 %v3878
        %v3880 = vpop.xlane.xlu0 %3879
        %v3881 = vsel %vm3502, %v3365, -inf
        %3882 = vmax.xlane.f32.xlu0 %v3881
        %v3883 = vpop.xlane.xlu0 %3882
        %v3884 = vsel %vm3502, %v3501, -inf
        %3885 = vmax.xlane.f32.xlu0 %v3884
        %v3886 = vpop.xlane.xlu0 %3885
        %4015 = vset.pattern.permute.xlu0 0
        %4016 = vperm.xlu0 %4015, %v3505
        %v4017 = vpop.permute.xlu0 %4016
        %4018 = vset.pattern.permute.xlu0 0
        %4019 = vperm.xlu0 %4018, %v3508
        %v4020 = vpop.permute.xlu0 %4019
        %4021 = vset.pattern.permute.xlu0 0
        %4022 = vperm.xlu0 %4021, %v3553
        %v4023 = vpop.permute.xlu0 %4022
        %4024 = vset.pattern.permute.xlu0 0
        %4025 = vperm.xlu0 %4024, %v3556
        %v4026 = vpop.permute.xlu0 %4025
        %4027 = vset.pattern.permute.xlu0 0
        %4028 = vperm.xlu0 %4027, %v3601
        %v4029 = vpop.permute.xlu0 %4028
        %4030 = vset.pattern.permute.xlu0 0
        %4031 = vperm.xlu0 %4030, %v3604
        %v4032 = vpop.permute.xlu0 %4031
        %4033 = vset.pattern.permute.xlu0 0
        %4034 = vperm.xlu0 %4033, %v3649
        %v4035 = vpop.permute.xlu0 %4034
        %4036 = vset.pattern.permute.xlu0 0
        %4037 = vperm.xlu0 %4036, %v3652
        %v4038 = vpop.permute.xlu0 %4037
        %4039 = vset.pattern.permute.xlu0 0
        %4040 = vperm.xlu0 %4039, %v3697
        %v4041 = vpop.permute.xlu0 %4040
        %4042 = vset.pattern.permute.xlu0 0
        %4043 = vperm.xlu0 %4042, %v3700
        %v4044 = vpop.permute.xlu0 %4043
        %4045 = vset.pattern.permute.xlu0 0
        %4046 = vperm.xlu0 %4045, %v3745
        %v4047 = vpop.permute.xlu0 %4046
        %4048 = vset.pattern.permute.xlu0 0
        %4049 = vperm.xlu0 %4048, %v3748
        %v4050 = vpop.permute.xlu0 %4049
        %4051 = vset.pattern.permute.xlu0 0
        %4052 = vperm.xlu0 %4051, %v3793
        %v4053 = vpop.permute.xlu0 %4052
        %4054 = vset.pattern.permute.xlu0 0
        %4055 = vperm.xlu0 %4054, %v3796
        %v4056 = vpop.permute.xlu0 %4055
        %4057 = vset.pattern.permute.xlu0 0
        %4058 = vperm.xlu0 %4057, %v3841
        %v4059 = vpop.permute.xlu0 %4058
        %4060 = vset.pattern.permute.xlu0 0
        %4061 = vperm.xlu0 %4060, %v3844
        %v4062 = vpop.permute.xlu0 %4061
        %4063 = vset.pattern.permute.xlu0 0
        %4064 = vperm.xlu0 %4063, %v3511
        %v4065 = vpop.permute.xlu0 %4064
        %4066 = vset.pattern.permute.xlu0 0
        %4067 = vperm.xlu0 %4066, %v3514
        %v4068 = vpop.permute.xlu0 %4067
        %4069 = vset.pattern.permute.xlu0 0
        %4070 = vperm.xlu0 %4069, %v3559
        %v4071 = vpop.permute.xlu0 %4070
        %4072 = vset.pattern.permute.xlu0 0
        %4073 = vperm.xlu0 %4072, %v3562
        %v4074 = vpop.permute.xlu0 %4073
        %4075 = vset.pattern.permute.xlu0 0
        %4076 = vperm.xlu0 %4075, %v3607
        %v4077 = vpop.permute.xlu0 %4076
        %4078 = vset.pattern.permute.xlu0 0
        %4079 = vperm.xlu0 %4078, %v3610
        %v4080 = vpop.permute.xlu0 %4079
        %4081 = vset.pattern.permute.xlu0 0
        %4082 = vperm.xlu0 %4081, %v3655
        %v4083 = vpop.permute.xlu0 %4082
        %4084 = vset.pattern.permute.xlu0 0
        %4085 = vperm.xlu0 %4084, %v3658
        %v4086 = vpop.permute.xlu0 %4085
        %4087 = vset.pattern.permute.xlu0 0
        %4088 = vperm.xlu0 %4087, %v3703
        %v4089 = vpop.permute.xlu0 %4088
        %4090 = vset.pattern.permute.xlu0 0
        %4091 = vperm.xlu0 %4090, %v3706
        %v4092 = vpop.permute.xlu0 %4091
        %4093 = vset.pattern.permute.xlu0 0
        %4094 = vperm.xlu0 %4093, %v3751
        %v4095 = vpop.permute.xlu0 %4094
        %4096 = vset.pattern.permute.xlu0 0
        %4097 = vperm.xlu0 %4096, %v3754
        %v4098 = vpop.permute.xlu0 %4097
        %4099 = vset.pattern.permute.xlu0 0
        %4100 = vperm.xlu0 %4099, %v3799
        %v4101 = vpop.permute.xlu0 %4100
        %4102 = vset.pattern.permute.xlu0 0
        %4103 = vperm.xlu0 %4102, %v3802
        %v4104 = vpop.permute.xlu0 %4103
        %4105 = vset.pattern.permute.xlu0 0
        %4106 = vperm.xlu0 %4105, %v3847
        %v4107 = vpop.permute.xlu0 %4106
        %4108 = vset.pattern.permute.xlu0 0
        %4109 = vperm.xlu0 %4108, %v3850
        %v4110 = vpop.permute.xlu0 %4109
        %4111 = vset.pattern.permute.xlu0 0
        %4112 = vperm.xlu0 %4111, %v3517
        %v4113 = vpop.permute.xlu0 %4112
        %4114 = vset.pattern.permute.xlu0 0
        %4115 = vperm.xlu0 %4114, %v3520
        %v4116 = vpop.permute.xlu0 %4115
        %4117 = vset.pattern.permute.xlu0 0
        %4118 = vperm.xlu0 %4117, %v3565
        %v4119 = vpop.permute.xlu0 %4118
        %4120 = vset.pattern.permute.xlu0 0
        %4121 = vperm.xlu0 %4120, %v3568
        %v4122 = vpop.permute.xlu0 %4121
        %4123 = vset.pattern.permute.xlu0 0
        %4124 = vperm.xlu0 %4123, %v3613
        %v4125 = vpop.permute.xlu0 %4124
        %4126 = vset.pattern.permute.xlu0 0
        %4127 = vperm.xlu0 %4126, %v3616
        %v4128 = vpop.permute.xlu0 %4127
        %4129 = vset.pattern.permute.xlu0 0
        %4130 = vperm.xlu0 %4129, %v3661
        %v4131 = vpop.permute.xlu0 %4130
        %4132 = vset.pattern.permute.xlu0 0
        %4133 = vperm.xlu0 %4132, %v3664
        %v4134 = vpop.permute.xlu0 %4133
        %4135 = vset.pattern.permute.xlu0 0
        %4136 = vperm.xlu0 %4135, %v3709
        %v4137 = vpop.permute.xlu0 %4136
        %4138 = vset.pattern.permute.xlu0 0
        %4139 = vperm.xlu0 %4138, %v3712
        %v4140 = vpop.permute.xlu0 %4139
        %4141 = vset.pattern.permute.xlu0 0
        %4142 = vperm.xlu0 %4141, %v3757
        %v4143 = vpop.permute.xlu0 %4142
        %4144 = vset.pattern.permute.xlu0 0
        %4145 = vperm.xlu0 %4144, %v3760
        %v4146 = vpop.permute.xlu0 %4145
        %4147 = vset.pattern.permute.xlu0 0
        %4148 = vperm.xlu0 %4147, %v3805
        %v4149 = vpop.permute.xlu0 %4148
        %4150 = vset.pattern.permute.xlu0 0
        %4151 = vperm.xlu0 %4150, %v3808
        %v4152 = vpop.permute.xlu0 %4151
        %4153 = vset.pattern.permute.xlu0 0
        %4154 = vperm.xlu0 %4153, %v3853
        %v4155 = vpop.permute.xlu0 %4154
        %4156 = vset.pattern.permute.xlu0 0
        %4157 = vperm.xlu0 %4156, %v3856
        %v4158 = vpop.permute.xlu0 %4157
        %4159 = vset.pattern.permute.xlu0 0
        %4160 = vperm.xlu0 %4159, %v3523
        %v4161 = vpop.permute.xlu0 %4160
        %4162 = vset.pattern.permute.xlu0 0
        %4163 = vperm.xlu0 %4162, %v3526
        %v4164 = vpop.permute.xlu0 %4163
        %4165 = vset.pattern.permute.xlu0 0
        %4166 = vperm.xlu0 %4165, %v3571
        %v4167 = vpop.permute.xlu0 %4166
        %4168 = vset.pattern.permute.xlu0 0
        %4169 = vperm.xlu0 %4168, %v3574
        %v4170 = vpop.permute.xlu0 %4169
        %4171 = vset.pattern.permute.xlu0 0
        %4172 = vperm.xlu0 %4171, %v3619
        %v4173 = vpop.permute.xlu0 %4172
        %4174 = vset.pattern.permute.xlu0 0
        %4175 = vperm.xlu0 %4174, %v3622
        %v4176 = vpop.permute.xlu0 %4175
        %4177 = vset.pattern.permute.xlu0 0
        %4178 = vperm.xlu0 %4177, %v3667
        %v4179 = vpop.permute.xlu0 %4178
        %4180 = vset.pattern.permute.xlu0 0
        %4181 = vperm.xlu0 %4180, %v3670
        %v4182 = vpop.permute.xlu0 %4181
        %4183 = vset.pattern.permute.xlu0 0
        %4184 = vperm.xlu0 %4183, %v3715
        %v4185 = vpop.permute.xlu0 %4184
        %4186 = vset.pattern.permute.xlu0 0
        %4187 = vperm.xlu0 %4186, %v3718
        %v4188 = vpop.permute.xlu0 %4187
        %4189 = vset.pattern.permute.xlu0 0
        %4190 = vperm.xlu0 %4189, %v3763
        %v4191 = vpop.permute.xlu0 %4190
        %4192 = vset.pattern.permute.xlu0 0
        %4193 = vperm.xlu0 %4192, %v3766
        %v4194 = vpop.permute.xlu0 %4193
        %4195 = vset.pattern.permute.xlu0 0
        %4196 = vperm.xlu0 %4195, %v3811
        %v4197 = vpop.permute.xlu0 %4196
        %4198 = vset.pattern.permute.xlu0 0
        %4199 = vperm.xlu0 %4198, %v3814
        %v4200 = vpop.permute.xlu0 %4199
        %4201 = vset.pattern.permute.xlu0 0
        %4202 = vperm.xlu0 %4201, %v3859
        %v4203 = vpop.permute.xlu0 %4202
        %4204 = vset.pattern.permute.xlu0 0
        %4205 = vperm.xlu0 %4204, %v3862
        %v4206 = vpop.permute.xlu0 %4205
        %4207 = vset.pattern.permute.xlu0 0
        %4208 = vperm.xlu0 %4207, %v3529
        %v4209 = vpop.permute.xlu0 %4208
        %4210 = vset.pattern.permute.xlu0 0
        %4211 = vperm.xlu0 %4210, %v3532
        %v4212 = vpop.permute.xlu0 %4211
        %4213 = vset.pattern.permute.xlu0 0
        %4214 = vperm.xlu0 %4213, %v3577
        %v4215 = vpop.permute.xlu0 %4214
        %4216 = vset.pattern.permute.xlu0 0
        %4217 = vperm.xlu0 %4216, %v3580
        %v4218 = vpop.permute.xlu0 %4217
        %4219 = vset.pattern.permute.xlu0 0
        %4220 = vperm.xlu0 %4219, %v3625
        %v4221 = vpop.permute.xlu0 %4220
        %4222 = vset.pattern.permute.xlu0 0
        %4223 = vperm.xlu0 %4222, %v3628
        %v4224 = vpop.permute.xlu0 %4223
        %4225 = vset.pattern.permute.xlu0 0
        %4226 = vperm.xlu0 %4225, %v3673
        %v4227 = vpop.permute.xlu0 %4226
        %4228 = vset.pattern.permute.xlu0 0
        %4229 = vperm.xlu0 %4228, %v3676
        %v4230 = vpop.permute.xlu0 %4229
        %4231 = vset.pattern.permute.xlu0 0
        %4232 = vperm.xlu0 %4231, %v3721
        %v4233 = vpop.permute.xlu0 %4232
        %4234 = vset.pattern.permute.xlu0 0
        %4235 = vperm.xlu0 %4234, %v3724
        %v4236 = vpop.permute.xlu0 %4235
        %4237 = vset.pattern.permute.xlu0 0
        %4238 = vperm.xlu0 %4237, %v3769
        %v4239 = vpop.permute.xlu0 %4238
        %4240 = vset.pattern.permute.xlu0 0
        %4241 = vperm.xlu0 %4240, %v3772
        %v4242 = vpop.permute.xlu0 %4241
        %4243 = vset.pattern.permute.xlu0 0
        %4244 = vperm.xlu0 %4243, %v3817
        %v4245 = vpop.permute.xlu0 %4244
        %4246 = vset.pattern.permute.xlu0 0
        %4247 = vperm.xlu0 %4246, %v3820
        %v4248 = vpop.permute.xlu0 %4247
        %4249 = vset.pattern.permute.xlu0 0
        %4250 = vperm.xlu0 %4249, %v3865
        %v4251 = vpop.permute.xlu0 %4250
        %4252 = vset.pattern.permute.xlu0 0
        %4253 = vperm.xlu0 %4252, %v3868
        %v4254 = vpop.permute.xlu0 %4253
        %4255 = vset.pattern.permute.xlu0 0
        %4256 = vperm.xlu0 %4255, %v3535
        %v4257 = vpop.permute.xlu0 %4256
        %4258 = vset.pattern.permute.xlu0 0
        %4259 = vperm.xlu0 %4258, %v3538
        %v4260 = vpop.permute.xlu0 %4259
        %4261 = vset.pattern.permute.xlu0 0
        %4262 = vperm.xlu0 %4261, %v3583
        %v4263 = vpop.permute.xlu0 %4262
        %4264 = vset.pattern.permute.xlu0 0
        %4265 = vperm.xlu0 %4264, %v3586
        %v4266 = vpop.permute.xlu0 %4265
        %4267 = vset.pattern.permute.xlu0 0
        %4268 = vperm.xlu0 %4267, %v3631
        %v4269 = vpop.permute.xlu0 %4268
        %4270 = vset.pattern.permute.xlu0 0
        %4271 = vperm.xlu0 %4270, %v3634
        %v4272 = vpop.permute.xlu0 %4271
        %4273 = vset.pattern.permute.xlu0 0
        %4274 = vperm.xlu0 %4273, %v3679
        %v4275 = vpop.permute.xlu0 %4274
        %4276 = vset.pattern.permute.xlu0 0
        %4277 = vperm.xlu0 %4276, %v3682
        %v4278 = vpop.permute.xlu0 %4277
        %4279 = vset.pattern.permute.xlu0 0
        %4280 = vperm.xlu0 %4279, %v3727
        %v4281 = vpop.permute.xlu0 %4280
        %4282 = vset.pattern.permute.xlu0 0
        %4283 = vperm.xlu0 %4282, %v3730
        %v4284 = vpop.permute.xlu0 %4283
        %4285 = vset.pattern.permute.xlu0 0
        %4286 = vperm.xlu0 %4285, %v3775
        %v4287 = vpop.permute.xlu0 %4286
        %4288 = vset.pattern.permute.xlu0 0
        %4289 = vperm.xlu0 %4288, %v3778
        %v4290 = vpop.permute.xlu0 %4289
        %4291 = vset.pattern.permute.xlu0 0
        %4292 = vperm.xlu0 %4291, %v3823
        %v4293 = vpop.permute.xlu0 %4292
        %4294 = vset.pattern.permute.xlu0 0
        %4295 = vperm.xlu0 %4294, %v3826
        %v4296 = vpop.permute.xlu0 %4295
        %4297 = vset.pattern.permute.xlu0 0
        %4298 = vperm.xlu0 %4297, %v3871
        %v4299 = vpop.permute.xlu0 %4298
        %4300 = vset.pattern.permute.xlu0 0
        %4301 = vperm.xlu0 %4300, %v3874
        %v4302 = vpop.permute.xlu0 %4301
        %4303 = vset.pattern.permute.xlu0 0
        %4304 = vperm.xlu0 %4303, %v3541
        %v4305 = vpop.permute.xlu0 %4304
        %4306 = vset.pattern.permute.xlu0 0
        %4307 = vperm.xlu0 %4306, %v3544
        %v4308 = vpop.permute.xlu0 %4307
        %4309 = vset.pattern.permute.xlu0 0
        %4310 = vperm.xlu0 %4309, %v3589
        %v4311 = vpop.permute.xlu0 %4310
        %4312 = vset.pattern.permute.xlu0 0
        %4313 = vperm.xlu0 %4312, %v3592
        %v4314 = vpop.permute.xlu0 %4313
        %4315 = vset.pattern.permute.xlu0 0
        %4316 = vperm.xlu0 %4315, %v3637
        %v4317 = vpop.permute.xlu0 %4316
        %4318 = vset.pattern.permute.xlu0 0
        %4319 = vperm.xlu0 %4318, %v3640
        %v4320 = vpop.permute.xlu0 %4319
        %4321 = vset.pattern.permute.xlu0 0
        %4322 = vperm.xlu0 %4321, %v3685
        %v4323 = vpop.permute.xlu0 %4322
        %4324 = vset.pattern.permute.xlu0 0
        %4325 = vperm.xlu0 %4324, %v3688
        %v4326 = vpop.permute.xlu0 %4325
        %4327 = vset.pattern.permute.xlu0 0
        %4328 = vperm.xlu0 %4327, %v3733
        %v4329 = vpop.permute.xlu0 %4328
        %4330 = vset.pattern.permute.xlu0 0
        %4331 = vperm.xlu0 %4330, %v3736
        %v4332 = vpop.permute.xlu0 %4331
        %4333 = vset.pattern.permute.xlu0 0
        %4334 = vperm.xlu0 %4333, %v3781
        %v4335 = vpop.permute.xlu0 %4334
        %4336 = vset.pattern.permute.xlu0 0
        %4337 = vperm.xlu0 %4336, %v3784
        %v4338 = vpop.permute.xlu0 %4337
        %4339 = vset.pattern.permute.xlu0 0
        %4340 = vperm.xlu0 %4339, %v3829
        %v4341 = vpop.permute.xlu0 %4340
        %4342 = vset.pattern.permute.xlu0 0
        %4343 = vperm.xlu0 %4342, %v3832
        %v4344 = vpop.permute.xlu0 %4343
        %4345 = vset.pattern.permute.xlu0 0
        %4346 = vperm.xlu0 %4345, %v3877
        %v4347 = vpop.permute.xlu0 %4346
        %4348 = vset.pattern.permute.xlu0 0
        %4349 = vperm.xlu0 %4348, %v3880
        %v4350 = vpop.permute.xlu0 %4349
        %4351 = vset.pattern.permute.xlu0 0
        %4352 = vperm.xlu0 %4351, %v3547
        %v4353 = vpop.permute.xlu0 %4352
        %4354 = vset.pattern.permute.xlu0 0
        %4355 = vperm.xlu0 %4354, %v3550
        %v4356 = vpop.permute.xlu0 %4355
        %4357 = vset.pattern.permute.xlu0 0
        %4358 = vperm.xlu0 %4357, %v3595
        %v4359 = vpop.permute.xlu0 %4358
        %4360 = vset.pattern.permute.xlu0 0
        %4361 = vperm.xlu0 %4360, %v3598
        %v4362 = vpop.permute.xlu0 %4361
        %4363 = vset.pattern.permute.xlu0 0
        %4364 = vperm.xlu0 %4363, %v3643
        %v4365 = vpop.permute.xlu0 %4364
        %4366 = vset.pattern.permute.xlu0 0
        %4367 = vperm.xlu0 %4366, %v3646
        %v4368 = vpop.permute.xlu0 %4367
        %4369 = vset.pattern.permute.xlu0 0
        %4370 = vperm.xlu0 %4369, %v3691
        %v4371 = vpop.permute.xlu0 %4370
        %4372 = vset.pattern.permute.xlu0 0
        %4373 = vperm.xlu0 %4372, %v3694
        %v4374 = vpop.permute.xlu0 %4373
        %4375 = vset.pattern.permute.xlu0 0
        %4376 = vperm.xlu0 %4375, %v3739
        %v4377 = vpop.permute.xlu0 %4376
        %4378 = vset.pattern.permute.xlu0 0
        %4379 = vperm.xlu0 %4378, %v3742
        %v4380 = vpop.permute.xlu0 %4379
        %4381 = vset.pattern.permute.xlu0 0
        %4382 = vperm.xlu0 %4381, %v3787
        %v4383 = vpop.permute.xlu0 %4382
        %4384 = vset.pattern.permute.xlu0 0
        %4385 = vperm.xlu0 %4384, %v3790
        %v4386 = vpop.permute.xlu0 %4385
        %4387 = vset.pattern.permute.xlu0 0
        %4388 = vperm.xlu0 %4387, %v3835
        %v4389 = vpop.permute.xlu0 %4388
        %4390 = vset.pattern.permute.xlu0 0
        %4391 = vperm.xlu0 %4390, %v3838
        %v4392 = vpop.permute.xlu0 %4391
        %4393 = vset.pattern.permute.xlu0 0
        %4394 = vperm.xlu0 %4393, %v3883
        %v4395 = vpop.permute.xlu0 %4394
        %4396 = vset.pattern.permute.xlu0 0
        %4397 = vperm.xlu0 %4396, %v3886
        %v4398 = vpop.permute.xlu0 %4397
        %v4399 = vlaneseq
        %v4400 = vshrl.u32 %v4399, 7
        %v4401 = vsub.s32 %v261, %v4400
        %v4402 = vrot.slane %v4017, %v4401
        %v4403 = vadd.s32 %v261, 4294967288
        %v4404 = vlaneseq
        %v4405 = vshrl.u32 %v4404, 7
        %v4406 = vsub.s32 %v4403, %v4405
        %v4407 = vrot.slane %v4020, %v4406
        %vm4408 = vcmask 130112
        %v4409 = vsel %vm4408, %v4407, %v4402
        %v4410 = vlaneseq
        %v4411 = vshrl.u32 %v4410, 7
        %v4412 = vsub.s32 %v261, %v4411
        %v4413 = vrot.slane %v4023, %v4412
        %v4414 = vlaneseq
        %v4415 = vshrl.u32 %v4414, 7
        %v4416 = vsub.s32 %v4403, %v4415
        %v4417 = vrot.slane %v4026, %v4416
        %v4418 = vsel %vm4408, %v4417, %v4413
        %v4419 = vlaneseq
        %v4420 = vshrl.u32 %v4419, 7
        %v4421 = vsub.s32 %v261, %v4420
        %v4422 = vrot.slane %v4029, %v4421
        %v4423 = vlaneseq
        %v4424 = vshrl.u32 %v4423, 7
        %v4425 = vsub.s32 %v4403, %v4424
        %v4426 = vrot.slane %v4032, %v4425
        %v4427 = vsel %vm4408, %v4426, %v4422
        %v4428 = vlaneseq
        %v4429 = vshrl.u32 %v4428, 7
        %v4430 = vsub.s32 %v261, %v4429
        %v4431 = vrot.slane %v4035, %v4430
        %v4432 = vlaneseq
        %v4433 = vshrl.u32 %v4432, 7
        %v4434 = vsub.s32 %v4403, %v4433
        %v4435 = vrot.slane %v4038, %v4434
        %v4436 = vsel %vm4408, %v4435, %v4431
        %v4437 = vlaneseq
        %v4438 = vshrl.u32 %v4437, 7
        %v4439 = vsub.s32 %v261, %v4438
        %v4440 = vrot.slane %v4041, %v4439
        %v4441 = vlaneseq
        %v4442 = vshrl.u32 %v4441, 7
        %v4443 = vsub.s32 %v4403, %v4442
        %v4444 = vrot.slane %v4044, %v4443
        %v4445 = vsel %vm4408, %v4444, %v4440
        %v4446 = vlaneseq
        %v4447 = vshrl.u32 %v4446, 7
        %v4448 = vsub.s32 %v261, %v4447
        %v4449 = vrot.slane %v4047, %v4448
        %v4450 = vlaneseq
        %v4451 = vshrl.u32 %v4450, 7
        %v4452 = vsub.s32 %v4403, %v4451
        %v4453 = vrot.slane %v4050, %v4452
        %v4454 = vsel %vm4408, %v4453, %v4449
        %v4455 = vlaneseq
        %v4456 = vshrl.u32 %v4455, 7
        %v4457 = vsub.s32 %v261, %v4456
        %v4458 = vrot.slane %v4053, %v4457
        %v4459 = vlaneseq
        %v4460 = vshrl.u32 %v4459, 7
        %v4461 = vsub.s32 %v4403, %v4460
        %v4462 = vrot.slane %v4056, %v4461
        %v4463 = vsel %vm4408, %v4462, %v4458
        %v4464 = vlaneseq
        %v4465 = vshrl.u32 %v4464, 7
        %v4466 = vsub.s32 %v261, %v4465
        %v4467 = vrot.slane %v4059, %v4466
        %v4468 = vlaneseq
        %v4469 = vshrl.u32 %v4468, 7
        %v4470 = vsub.s32 %v4403, %v4469
        %v4471 = vrot.slane %v4062, %v4470
        %v4472 = vsel %vm4408, %v4471, %v4467
        %v4473 = vlaneseq
        %v4474 = vshrl.u32 %v4473, 7
        %v4475 = vsub.s32 %v261, %v4474
        %v4476 = vrot.slane %v4065, %v4475
        %v4477 = vlaneseq
        %v4478 = vshrl.u32 %v4477, 7
        %v4479 = vsub.s32 %v4403, %v4478
        %v4480 = vrot.slane %v4068, %v4479
        %v4481 = vsel %vm4408, %v4480, %v4476
        %v4482 = vlaneseq
        %v4483 = vshrl.u32 %v4482, 7
        %v4484 = vsub.s32 %v261, %v4483
        %v4485 = vrot.slane %v4071, %v4484
        %v4486 = vlaneseq
        %v4487 = vshrl.u32 %v4486, 7
        %v4488 = vsub.s32 %v4403, %v4487
        %v4489 = vrot.slane %v4074, %v4488
        %v4490 = vsel %vm4408, %v4489, %v4485
        %v4491 = vlaneseq
        %v4492 = vshrl.u32 %v4491, 7
        %v4493 = vsub.s32 %v261, %v4492
        %v4494 = vrot.slane %v4077, %v4493
        %v4495 = vlaneseq
        %v4496 = vshrl.u32 %v4495, 7
        %v4497 = vsub.s32 %v4403, %v4496
        %v4498 = vrot.slane %v4080, %v4497
        %v4499 = vsel %vm4408, %v4498, %v4494
        %v4500 = vlaneseq
        %v4501 = vshrl.u32 %v4500, 7
        %v4502 = vsub.s32 %v261, %v4501
        %v4503 = vrot.slane %v4083, %v4502
        %v4504 = vlaneseq
        %v4505 = vshrl.u32 %v4504, 7
        %v4506 = vsub.s32 %v4403, %v4505
        %v4507 = vrot.slane %v4086, %v4506
        %v4508 = vsel %vm4408, %v4507, %v4503
        %v4509 = vlaneseq
        %v4510 = vshrl.u32 %v4509, 7
        %v4511 = vsub.s32 %v261, %v4510
        %v4512 = vrot.slane %v4089, %v4511
        %v4513 = vlaneseq
        %v4514 = vshrl.u32 %v4513, 7
        %v4515 = vsub.s32 %v4403, %v4514
        %v4516 = vrot.slane %v4092, %v4515
        %v4517 = vsel %vm4408, %v4516, %v4512
        %v4518 = vlaneseq
        %v4519 = vshrl.u32 %v4518, 7
        %v4520 = vsub.s32 %v261, %v4519
        %v4521 = vrot.slane %v4095, %v4520
        %v4522 = vlaneseq
        %v4523 = vshrl.u32 %v4522, 7
        %v4524 = vsub.s32 %v4403, %v4523
        %v4525 = vrot.slane %v4098, %v4524
        %v4526 = vsel %vm4408, %v4525, %v4521
        %v4527 = vlaneseq
        %v4528 = vshrl.u32 %v4527, 7
        %v4529 = vsub.s32 %v261, %v4528
        %v4530 = vrot.slane %v4101, %v4529
        %v4531 = vlaneseq
        %v4532 = vshrl.u32 %v4531, 7
        %v4533 = vsub.s32 %v4403, %v4532
        %v4534 = vrot.slane %v4104, %v4533
        %v4535 = vsel %vm4408, %v4534, %v4530
        %v4536 = vlaneseq
        %v4537 = vshrl.u32 %v4536, 7
        %v4538 = vsub.s32 %v261, %v4537
        %v4539 = vrot.slane %v4107, %v4538
        %v4540 = vlaneseq
        %v4541 = vshrl.u32 %v4540, 7
        %v4542 = vsub.s32 %v4403, %v4541
        %v4543 = vrot.slane %v4110, %v4542
        %v4544 = vsel %vm4408, %v4543, %v4539
        %v4545 = vlaneseq
        %v4546 = vshrl.u32 %v4545, 7
        %v4547 = vsub.s32 %v261, %v4546
        %v4548 = vrot.slane %v4113, %v4547
        %v4549 = vlaneseq
        %v4550 = vshrl.u32 %v4549, 7
        %v4551 = vsub.s32 %v4403, %v4550
        %v4552 = vrot.slane %v4116, %v4551
        %v4553 = vsel %vm4408, %v4552, %v4548
        %v4554 = vlaneseq
        %v4555 = vshrl.u32 %v4554, 7
        %v4556 = vsub.s32 %v261, %v4555
        %v4557 = vrot.slane %v4119, %v4556
        %v4558 = vlaneseq
        %v4559 = vshrl.u32 %v4558, 7
        %v4560 = vsub.s32 %v4403, %v4559
        %v4561 = vrot.slane %v4122, %v4560
        %v4562 = vsel %vm4408, %v4561, %v4557
        %v4563 = vlaneseq
        %v4564 = vshrl.u32 %v4563, 7
        %v4565 = vsub.s32 %v261, %v4564
        %v4566 = vrot.slane %v4125, %v4565
        %v4567 = vlaneseq
        %v4568 = vshrl.u32 %v4567, 7
        %v4569 = vsub.s32 %v4403, %v4568
        %v4570 = vrot.slane %v4128, %v4569
        %v4571 = vsel %vm4408, %v4570, %v4566
        %v4572 = vlaneseq
        %v4573 = vshrl.u32 %v4572, 7
        %v4574 = vsub.s32 %v261, %v4573
        %v4575 = vrot.slane %v4131, %v4574
        %v4576 = vlaneseq
        %v4577 = vshrl.u32 %v4576, 7
        %v4578 = vsub.s32 %v4403, %v4577
        %v4579 = vrot.slane %v4134, %v4578
        %v4580 = vsel %vm4408, %v4579, %v4575
        %v4581 = vlaneseq
        %v4582 = vshrl.u32 %v4581, 7
        %v4583 = vsub.s32 %v261, %v4582
        %v4584 = vrot.slane %v4137, %v4583
        %v4585 = vlaneseq
        %v4586 = vshrl.u32 %v4585, 7
        %v4587 = vsub.s32 %v4403, %v4586
        %v4588 = vrot.slane %v4140, %v4587
        %v4589 = vsel %vm4408, %v4588, %v4584
        %v4590 = vlaneseq
        %v4591 = vshrl.u32 %v4590, 7
        %v4592 = vsub.s32 %v261, %v4591
        %v4593 = vrot.slane %v4143, %v4592
        %v4594 = vlaneseq
        %v4595 = vshrl.u32 %v4594, 7
        %v4596 = vsub.s32 %v4403, %v4595
        %v4597 = vrot.slane %v4146, %v4596
        %v4598 = vsel %vm4408, %v4597, %v4593
        %v4599 = vlaneseq
        %v4600 = vshrl.u32 %v4599, 7
        %v4601 = vsub.s32 %v261, %v4600
        %v4602 = vrot.slane %v4149, %v4601
        %v4603 = vlaneseq
        %v4604 = vshrl.u32 %v4603, 7
        %v4605 = vsub.s32 %v4403, %v4604
        %v4606 = vrot.slane %v4152, %v4605
        %v4607 = vsel %vm4408, %v4606, %v4602
        %v4608 = vlaneseq
        %v4609 = vshrl.u32 %v4608, 7
        %v4610 = vsub.s32 %v261, %v4609
        %v4611 = vrot.slane %v4155, %v4610
        %v4612 = vlaneseq
        %v4613 = vshrl.u32 %v4612, 7
        %v4614 = vsub.s32 %v4403, %v4613
        %v4615 = vrot.slane %v4158, %v4614
        %v4616 = vsel %vm4408, %v4615, %v4611
        %v4617 = vlaneseq
        %v4618 = vshrl.u32 %v4617, 7
        %v4619 = vsub.s32 %v261, %v4618
        %v4620 = vrot.slane %v4161, %v4619
        %v4621 = vlaneseq
        %v4622 = vshrl.u32 %v4621, 7
        %v4623 = vsub.s32 %v4403, %v4622
        %v4624 = vrot.slane %v4164, %v4623
        %v4625 = vsel %vm4408, %v4624, %v4620
        %v4626 = vlaneseq
        %v4627 = vshrl.u32 %v4626, 7
        %v4628 = vsub.s32 %v261, %v4627
        %v4629 = vrot.slane %v4167, %v4628
        %v4630 = vlaneseq
        %v4631 = vshrl.u32 %v4630, 7
        %v4632 = vsub.s32 %v4403, %v4631
        %v4633 = vrot.slane %v4170, %v4632
        %v4634 = vsel %vm4408, %v4633, %v4629
        %v4635 = vlaneseq
        %v4636 = vshrl.u32 %v4635, 7
        %v4637 = vsub.s32 %v261, %v4636
        %v4638 = vrot.slane %v4173, %v4637
        %v4639 = vlaneseq
        %v4640 = vshrl.u32 %v4639, 7
        %v4641 = vsub.s32 %v4403, %v4640
        %v4642 = vrot.slane %v4176, %v4641
        %v4643 = vsel %vm4408, %v4642, %v4638
        %v4644 = vlaneseq
        %v4645 = vshrl.u32 %v4644, 7
        %v4646 = vsub.s32 %v261, %v4645
        %v4647 = vrot.slane %v4179, %v4646
        %v4648 = vlaneseq
        %v4649 = vshrl.u32 %v4648, 7
        %v4650 = vsub.s32 %v4403, %v4649
        %v4651 = vrot.slane %v4182, %v4650
        %v4652 = vsel %vm4408, %v4651, %v4647
        %v4653 = vlaneseq
        %v4654 = vshrl.u32 %v4653, 7
        %v4655 = vsub.s32 %v261, %v4654
        %v4656 = vrot.slane %v4185, %v4655
        %v4657 = vlaneseq
        %v4658 = vshrl.u32 %v4657, 7
        %v4659 = vsub.s32 %v4403, %v4658
        %v4660 = vrot.slane %v4188, %v4659
        %v4661 = vsel %vm4408, %v4660, %v4656
        %v4662 = vlaneseq
        %v4663 = vshrl.u32 %v4662, 7
        %v4664 = vsub.s32 %v261, %v4663
        %v4665 = vrot.slane %v4191, %v4664
        %v4666 = vlaneseq
        %v4667 = vshrl.u32 %v4666, 7
        %v4668 = vsub.s32 %v4403, %v4667
        %v4669 = vrot.slane %v4194, %v4668
        %v4670 = vsel %vm4408, %v4669, %v4665
        %v4671 = vlaneseq
        %v4672 = vshrl.u32 %v4671, 7
        %v4673 = vsub.s32 %v261, %v4672
        %v4674 = vrot.slane %v4197, %v4673
        %v4675 = vlaneseq
        %v4676 = vshrl.u32 %v4675, 7
        %v4677 = vsub.s32 %v4403, %v4676
        %v4678 = vrot.slane %v4200, %v4677
        %v4679 = vsel %vm4408, %v4678, %v4674
        %v4680 = vlaneseq
        %v4681 = vshrl.u32 %v4680, 7
        %v4682 = vsub.s32 %v261, %v4681
        %v4683 = vrot.slane %v4203, %v4682
        %v4684 = vlaneseq
        %v4685 = vshrl.u32 %v4684, 7
        %v4686 = vsub.s32 %v4403, %v4685
        %v4687 = vrot.slane %v4206, %v4686
        %v4688 = vsel %vm4408, %v4687, %v4683
        %v4689 = vlaneseq
        %v4690 = vshrl.u32 %v4689, 7
        %v4691 = vsub.s32 %v261, %v4690
        %v4692 = vrot.slane %v4209, %v4691
        %v4693 = vlaneseq
        %v4694 = vshrl.u32 %v4693, 7
        %v4695 = vsub.s32 %v4403, %v4694
        %v4696 = vrot.slane %v4212, %v4695
        %v4697 = vsel %vm4408, %v4696, %v4692
        %v4698 = vlaneseq
        %v4699 = vshrl.u32 %v4698, 7
        %v4700 = vsub.s32 %v261, %v4699
        %v4701 = vrot.slane %v4215, %v4700
        %v4702 = vlaneseq
        %v4703 = vshrl.u32 %v4702, 7
        %v4704 = vsub.s32 %v4403, %v4703
        %v4705 = vrot.slane %v4218, %v4704
        %v4706 = vsel %vm4408, %v4705, %v4701
        %v4707 = vlaneseq
        %v4708 = vshrl.u32 %v4707, 7
        %v4709 = vsub.s32 %v261, %v4708
        %v4710 = vrot.slane %v4221, %v4709
        %v4711 = vlaneseq
        %v4712 = vshrl.u32 %v4711, 7
        %v4713 = vsub.s32 %v4403, %v4712
        %v4714 = vrot.slane %v4224, %v4713
        %v4715 = vsel %vm4408, %v4714, %v4710
        %v4716 = vlaneseq
        %v4717 = vshrl.u32 %v4716, 7
        %v4718 = vsub.s32 %v261, %v4717
        %v4719 = vrot.slane %v4227, %v4718
        %v4720 = vlaneseq
        %v4721 = vshrl.u32 %v4720, 7
        %v4722 = vsub.s32 %v4403, %v4721
        %v4723 = vrot.slane %v4230, %v4722
        %v4724 = vsel %vm4408, %v4723, %v4719
        %v4725 = vlaneseq
        %v4726 = vshrl.u32 %v4725, 7
        %v4727 = vsub.s32 %v261, %v4726
        %v4728 = vrot.slane %v4233, %v4727
        %v4729 = vlaneseq
        %v4730 = vshrl.u32 %v4729, 7
        %v4731 = vsub.s32 %v4403, %v4730
        %v4732 = vrot.slane %v4236, %v4731
        %v4733 = vsel %vm4408, %v4732, %v4728
        %v4734 = vlaneseq
        %v4735 = vshrl.u32 %v4734, 7
        %v4736 = vsub.s32 %v261, %v4735
        %v4737 = vrot.slane %v4239, %v4736
        %v4738 = vlaneseq
        %v4739 = vshrl.u32 %v4738, 7
        %v4740 = vsub.s32 %v4403, %v4739
        %v4741 = vrot.slane %v4242, %v4740
        %v4742 = vsel %vm4408, %v4741, %v4737
        %v4743 = vlaneseq
        %v4744 = vshrl.u32 %v4743, 7
        %v4745 = vsub.s32 %v261, %v4744
        %v4746 = vrot.slane %v4245, %v4745
        %v4747 = vlaneseq
        %v4748 = vshrl.u32 %v4747, 7
        %v4749 = vsub.s32 %v4403, %v4748
        %v4750 = vrot.slane %v4248, %v4749
        %v4751 = vsel %vm4408, %v4750, %v4746
        %v4752 = vlaneseq
        %v4753 = vshrl.u32 %v4752, 7
        %v4754 = vsub.s32 %v261, %v4753
        %v4755 = vrot.slane %v4251, %v4754
        %v4756 = vlaneseq
        %v4757 = vshrl.u32 %v4756, 7
        %v4758 = vsub.s32 %v4403, %v4757
        %v4759 = vrot.slane %v4254, %v4758
        %v4760 = vsel %vm4408, %v4759, %v4755
        %v4761 = vlaneseq
        %v4762 = vshrl.u32 %v4761, 7
        %v4763 = vsub.s32 %v261, %v4762
        %v4764 = vrot.slane %v4257, %v4763
        %v4765 = vlaneseq
        %v4766 = vshrl.u32 %v4765, 7
        %v4767 = vsub.s32 %v4403, %v4766
        %v4768 = vrot.slane %v4260, %v4767
        %v4769 = vsel %vm4408, %v4768, %v4764
        %v4770 = vlaneseq
        %v4771 = vshrl.u32 %v4770, 7
        %v4772 = vsub.s32 %v261, %v4771
        %v4773 = vrot.slane %v4263, %v4772
        %v4774 = vlaneseq
        %v4775 = vshrl.u32 %v4774, 7
        %v4776 = vsub.s32 %v4403, %v4775
        %v4777 = vrot.slane %v4266, %v4776
        %v4778 = vsel %vm4408, %v4777, %v4773
        %v4779 = vlaneseq
        %v4780 = vshrl.u32 %v4779, 7
        %v4781 = vsub.s32 %v261, %v4780
        %v4782 = vrot.slane %v4269, %v4781
        %v4783 = vlaneseq
        %v4784 = vshrl.u32 %v4783, 7
        %v4785 = vsub.s32 %v4403, %v4784
        %v4786 = vrot.slane %v4272, %v4785
        %v4787 = vsel %vm4408, %v4786, %v4782
        %v4788 = vlaneseq
        %v4789 = vshrl.u32 %v4788, 7
        %v4790 = vsub.s32 %v261, %v4789
        %v4791 = vrot.slane %v4275, %v4790
        %v4792 = vlaneseq
        %v4793 = vshrl.u32 %v4792, 7
        %v4794 = vsub.s32 %v4403, %v4793
        %v4795 = vrot.slane %v4278, %v4794
        %v4796 = vsel %vm4408, %v4795, %v4791
        %v4797 = vlaneseq
        %v4798 = vshrl.u32 %v4797, 7
        %v4799 = vsub.s32 %v261, %v4798
        %v4800 = vrot.slane %v4281, %v4799
        %v4801 = vlaneseq
        %v4802 = vshrl.u32 %v4801, 7
        %v4803 = vsub.s32 %v4403, %v4802
        %v4804 = vrot.slane %v4284, %v4803
        %v4805 = vsel %vm4408, %v4804, %v4800
        %v4806 = vlaneseq
        %v4807 = vshrl.u32 %v4806, 7
        %v4808 = vsub.s32 %v261, %v4807
        %v4809 = vrot.slane %v4287, %v4808
        %v4810 = vlaneseq
        %v4811 = vshrl.u32 %v4810, 7
        %v4812 = vsub.s32 %v4403, %v4811
        %v4813 = vrot.slane %v4290, %v4812
        %v4814 = vsel %vm4408, %v4813, %v4809
        %v4815 = vlaneseq
        %v4816 = vshrl.u32 %v4815, 7
        %v4817 = vsub.s32 %v261, %v4816
        %v4818 = vrot.slane %v4293, %v4817
        %v4819 = vlaneseq
        %v4820 = vshrl.u32 %v4819, 7
        %v4821 = vsub.s32 %v4403, %v4820
        %v4822 = vrot.slane %v4296, %v4821
        %v4823 = vsel %vm4408, %v4822, %v4818
        %v4824 = vlaneseq
        %v4825 = vshrl.u32 %v4824, 7
        %v4826 = vsub.s32 %v261, %v4825
        %v4827 = vrot.slane %v4299, %v4826
        %v4828 = vlaneseq
        %v4829 = vshrl.u32 %v4828, 7
        %v4830 = vsub.s32 %v4403, %v4829
        %v4831 = vrot.slane %v4302, %v4830
        %v4832 = vsel %vm4408, %v4831, %v4827
        %v4833 = vlaneseq
        %v4834 = vshrl.u32 %v4833, 7
        %v4835 = vsub.s32 %v261, %v4834
        %v4836 = vrot.slane %v4305, %v4835
        %v4837 = vlaneseq
        %v4838 = vshrl.u32 %v4837, 7
        %v4839 = vsub.s32 %v4403, %v4838
        %v4840 = vrot.slane %v4308, %v4839
        %v4841 = vsel %vm4408, %v4840, %v4836
        %v4842 = vlaneseq
        %v4843 = vshrl.u32 %v4842, 7
        %v4844 = vsub.s32 %v261, %v4843
        %v4845 = vrot.slane %v4311, %v4844
        %v4846 = vlaneseq
        %v4847 = vshrl.u32 %v4846, 7
        %v4848 = vsub.s32 %v4403, %v4847
        %v4849 = vrot.slane %v4314, %v4848
        %v4850 = vsel %vm4408, %v4849, %v4845
        %v4851 = vlaneseq
        %v4852 = vshrl.u32 %v4851, 7
        %v4853 = vsub.s32 %v261, %v4852
        %v4854 = vrot.slane %v4317, %v4853
        %v4855 = vlaneseq
        %v4856 = vshrl.u32 %v4855, 7
        %v4857 = vsub.s32 %v4403, %v4856
        %v4858 = vrot.slane %v4320, %v4857
        %v4859 = vsel %vm4408, %v4858, %v4854
        %v4860 = vlaneseq
        %v4861 = vshrl.u32 %v4860, 7
        %v4862 = vsub.s32 %v261, %v4861
        %v4863 = vrot.slane %v4323, %v4862
        %v4864 = vlaneseq
        %v4865 = vshrl.u32 %v4864, 7
        %v4866 = vsub.s32 %v4403, %v4865
        %v4867 = vrot.slane %v4326, %v4866
        %v4868 = vsel %vm4408, %v4867, %v4863
        %v4869 = vlaneseq
        %v4870 = vshrl.u32 %v4869, 7
        %v4871 = vsub.s32 %v261, %v4870
        %v4872 = vrot.slane %v4329, %v4871
        %v4873 = vlaneseq
        %v4874 = vshrl.u32 %v4873, 7
        %v4875 = vsub.s32 %v4403, %v4874
        %v4876 = vrot.slane %v4332, %v4875
        %v4877 = vsel %vm4408, %v4876, %v4872
        %v4878 = vlaneseq
        %v4879 = vshrl.u32 %v4878, 7
        %v4880 = vsub.s32 %v261, %v4879
        %v4881 = vrot.slane %v4335, %v4880
        %v4882 = vlaneseq
        %v4883 = vshrl.u32 %v4882, 7
        %v4884 = vsub.s32 %v4403, %v4883
        %v4885 = vrot.slane %v4338, %v4884
        %v4886 = vsel %vm4408, %v4885, %v4881
        %v4887 = vlaneseq
        %v4888 = vshrl.u32 %v4887, 7
        %v4889 = vsub.s32 %v261, %v4888
        %v4890 = vrot.slane %v4341, %v4889
        %v4891 = vlaneseq
        %v4892 = vshrl.u32 %v4891, 7
        %v4893 = vsub.s32 %v4403, %v4892
        %v4894 = vrot.slane %v4344, %v4893
        %v4895 = vsel %vm4408, %v4894, %v4890
        %v4896 = vlaneseq
        %v4897 = vshrl.u32 %v4896, 7
        %v4898 = vsub.s32 %v261, %v4897
        %v4899 = vrot.slane %v4347, %v4898
        %v4900 = vlaneseq
        %v4901 = vshrl.u32 %v4900, 7
        %v4902 = vsub.s32 %v4403, %v4901
        %v4903 = vrot.slane %v4350, %v4902
        %v4904 = vsel %vm4408, %v4903, %v4899
        %v4905 = vlaneseq
        %v4906 = vshrl.u32 %v4905, 7
        %v4907 = vsub.s32 %v261, %v4906
        %v4908 = vrot.slane %v4353, %v4907
        %v4909 = vlaneseq
        %v4910 = vshrl.u32 %v4909, 7
        %v4911 = vsub.s32 %v4403, %v4910
        %v4912 = vrot.slane %v4356, %v4911
        %v4913 = vsel %vm4408, %v4912, %v4908
        %v4914 = vlaneseq
        %v4915 = vshrl.u32 %v4914, 7
        %v4916 = vsub.s32 %v261, %v4915
        %v4917 = vrot.slane %v4359, %v4916
        %v4918 = vlaneseq
        %v4919 = vshrl.u32 %v4918, 7
        %v4920 = vsub.s32 %v4403, %v4919
        %v4921 = vrot.slane %v4362, %v4920
        %v4922 = vsel %vm4408, %v4921, %v4917
        %v4923 = vlaneseq
        %v4924 = vshrl.u32 %v4923, 7
        %v4925 = vsub.s32 %v261, %v4924
        %v4926 = vrot.slane %v4365, %v4925
        %v4927 = vlaneseq
        %v4928 = vshrl.u32 %v4927, 7
        %v4929 = vsub.s32 %v4403, %v4928
        %v4930 = vrot.slane %v4368, %v4929
        %v4931 = vsel %vm4408, %v4930, %v4926
        %v4932 = vlaneseq
        %v4933 = vshrl.u32 %v4932, 7
        %v4934 = vsub.s32 %v261, %v4933
        %v4935 = vrot.slane %v4371, %v4934
        %v4936 = vlaneseq
        %v4937 = vshrl.u32 %v4936, 7
        %v4938 = vsub.s32 %v4403, %v4937
        %v4939 = vrot.slane %v4374, %v4938
        %v4940 = vsel %vm4408, %v4939, %v4935
        %v4941 = vlaneseq
        %v4942 = vshrl.u32 %v4941, 7
        %v4943 = vsub.s32 %v261, %v4942
        %v4944 = vrot.slane %v4377, %v4943
        %v4945 = vlaneseq
        %v4946 = vshrl.u32 %v4945, 7
        %v4947 = vsub.s32 %v4403, %v4946
        %v4948 = vrot.slane %v4380, %v4947
        %v4949 = vsel %vm4408, %v4948, %v4944
        %v4950 = vlaneseq
        %v4951 = vshrl.u32 %v4950, 7
        %v4952 = vsub.s32 %v261, %v4951
        %v4953 = vrot.slane %v4383, %v4952
        %v4954 = vlaneseq
        %v4955 = vshrl.u32 %v4954, 7
        %v4956 = vsub.s32 %v4403, %v4955
        %v4957 = vrot.slane %v4386, %v4956
        %v4958 = vsel %vm4408, %v4957, %v4953
        %v4959 = vlaneseq
        %v4960 = vshrl.u32 %v4959, 7
        %v4961 = vsub.s32 %v261, %v4960
        %v4962 = vrot.slane %v4389, %v4961
        %v4963 = vlaneseq
        %v4964 = vshrl.u32 %v4963, 7
        %v4965 = vsub.s32 %v4403, %v4964
        %v4966 = vrot.slane %v4392, %v4965
        %v4967 = vsel %vm4408, %v4966, %v4962
        %v4968 = vlaneseq
        %v4969 = vshrl.u32 %v4968, 7
        %v4970 = vsub.s32 %v261, %v4969
        %v4971 = vrot.slane %v4395, %v4970
        %v4972 = vlaneseq
        %v4973 = vshrl.u32 %v4972, 7
        %v4974 = vsub.s32 %v4403, %v4973
        %v4975 = vrot.slane %v4398, %v4974
        %v4976 = vsel %vm4408, %v4975, %v4971
        %vm4977 = vcmask 1041409
        %v4978 = vsel %vm4977, %v4418, %v4409
        %vm4979 = vcmask 1042434
        %v4980 = vsel %vm4979, %v4427, %v4978
        %vm4981 = vcmask 1043459
        %v4982 = vsel %vm4981, %v4436, %v4980
        %vm4983 = vcmask 1044484
        %v4984 = vsel %vm4983, %v4445, %v4982
        %vm4985 = vcmask 1045509
        %v4986 = vsel %vm4985, %v4454, %v4984
        %vm4987 = vcmask 1046534
        %v4988 = vsel %vm4987, %v4463, %v4986
        %vm4989 = vcmask 1047559
        %v4990 = vsel %vm4989, %v4472, %v4988
        %v4991 = vsel %vm4977, %v4490, %v4481
        %v4992 = vsel %vm4979, %v4499, %v4991
        %v4993 = vsel %vm4981, %v4508, %v4992
        %v4994 = vsel %vm4983, %v4517, %v4993
        %v4995 = vsel %vm4985, %v4526, %v4994
        %v4996 = vsel %vm4987, %v4535, %v4995
        %v4997 = vsel %vm4989, %v4544, %v4996
        %v4998 = vsel %vm4977, %v4562, %v4553
        %v4999 = vsel %vm4979, %v4571, %v4998
        %v5000 = vsel %vm4981, %v4580, %v4999
        %v5001 = vsel %vm4983, %v4589, %v5000
        %v5002 = vsel %vm4985, %v4598, %v5001
        %v5003 = vsel %vm4987, %v4607, %v5002
        %v5004 = vsel %vm4989, %v4616, %v5003
        %v5005 = vsel %vm4977, %v4634, %v4625
        %v5006 = vsel %vm4979, %v4643, %v5005
        %v5007 = vsel %vm4981, %v4652, %v5006
        %v5008 = vsel %vm4983, %v4661, %v5007
        %v5009 = vsel %vm4985, %v4670, %v5008
        %v5010 = vsel %vm4987, %v4679, %v5009
        %v5011 = vsel %vm4989, %v4688, %v5010
        %v5012 = vsel %vm4977, %v4706, %v4697
        %v5013 = vsel %vm4979, %v4715, %v5012
        %v5014 = vsel %vm4981, %v4724, %v5013
        %v5015 = vsel %vm4983, %v4733, %v5014
        %v5016 = vsel %vm4985, %v4742, %v5015
        %v5017 = vsel %vm4987, %v4751, %v5016
        %v5018 = vsel %vm4989, %v4760, %v5017
        %v5019 = vsel %vm4977, %v4778, %v4769
        %v5020 = vsel %vm4979, %v4787, %v5019
        %v5021 = vsel %vm4981, %v4796, %v5020
        %v5022 = vsel %vm4983, %v4805, %v5021
        %v5023 = vsel %vm4985, %v4814, %v5022
        %v5024 = vsel %vm4987, %v4823, %v5023
        %v5025 = vsel %vm4989, %v4832, %v5024
        %v5026 = vsel %vm4977, %v4850, %v4841
        %v5027 = vsel %vm4979, %v4859, %v5026
        %v5028 = vsel %vm4981, %v4868, %v5027
        %v5029 = vsel %vm4983, %v4877, %v5028
        %v5030 = vsel %vm4985, %v4886, %v5029
        %v5031 = vsel %vm4987, %v4895, %v5030
        %v5032 = vsel %vm4989, %v4904, %v5031
        %v5033 = vsel %vm4977, %v4922, %v4913
        %v5034 = vsel %vm4979, %v4931, %v5033
        %v5035 = vsel %vm4981, %v4940, %v5034
        %v5036 = vsel %vm4983, %v4949, %v5035
        %v5037 = vsel %vm4985, %v4958, %v5036
        %v5038 = vsel %vm4987, %v4967, %v5037
        %v5039 = vsel %vm4989, %v4976, %v5038
        %v5048 = vcombine.low %v4990, %v5004
        %v5049 = vcombine.high %v4990, %v5004
        %v5051 = vunpack.c.l.s4 1983009808
        %v5052 = vunpack.c.0.s8 %v5051
        %v5053 = vlaneseq
        %v5054 = vshrl.u32 %v5053, 7
        %v5055 = vsub.s32 %v5052, %v5054
        %v5056 = vrot.slane %v5048, %v5055
        %v5058 = vunpack.c.l.s4 1983009808
        %v5059 = vunpack.c.0.s8 %v5058
        %v5060 = vlaneseq
        %v5061 = vshrl.u32 %v5060, 7
        %v5062 = vsub.s32 %v5059, %v5061
        %v5063 = vrot.slane %v5049, %v5062
        %v5064 = vcombine.low %v4997, %v5011
        %v5065 = vcombine.high %v4997, %v5011
        %v5067 = vunpack.c.l.s4 1983009808
        %v5068 = vunpack.c.0.s8 %v5067
        %v5069 = vlaneseq
        %v5070 = vshrl.u32 %v5069, 7
        %v5071 = vsub.s32 %v5068, %v5070
        %v5072 = vrot.slane %v5064, %v5071
        %v5074 = vunpack.c.l.s4 1983009808
        %v5075 = vunpack.c.0.s8 %v5074
        %v5076 = vlaneseq
        %v5077 = vshrl.u32 %v5076, 7
        %v5078 = vsub.s32 %v5075, %v5077
        %v5079 = vrot.slane %v5065, %v5078
        %v5080 = vcombine.low %v5018, %v5032
        %v5081 = vcombine.high %v5018, %v5032
        %v5083 = vunpack.c.l.s4 1983009808
        %v5084 = vunpack.c.0.s8 %v5083
        %v5085 = vlaneseq
        %v5086 = vshrl.u32 %v5085, 7
        %v5087 = vsub.s32 %v5084, %v5086
        %v5088 = vrot.slane %v5080, %v5087
        %v5090 = vunpack.c.l.s4 1983009808
        %v5091 = vunpack.c.0.s8 %v5090
        %v5092 = vlaneseq
        %v5093 = vshrl.u32 %v5092, 7
        %v5094 = vsub.s32 %v5091, %v5093
        %v5095 = vrot.slane %v5081, %v5094
        %v5096 = vcombine.low %v5025, %v5039
        %v5097 = vcombine.high %v5025, %v5039
        %v5099 = vunpack.c.l.s4 1983009808
        %v5100 = vunpack.c.0.s8 %v5099
        %v5101 = vlaneseq
        %v5102 = vshrl.u32 %v5101, 7
        %v5103 = vsub.s32 %v5100, %v5102
        %v5104 = vrot.slane %v5096, %v5103
        %v5106 = vunpack.c.l.s4 1983009808
        %v5107 = vunpack.c.0.s8 %v5106
        %v5108 = vlaneseq
        %v5109 = vshrl.u32 %v5108, 7
        %v5110 = vsub.s32 %v5107, %v5109
        %v5111 = vrot.slane %v5097, %v5110
        %v5112 = vcombine.low %v5056, %v5072
        %v5113 = vcombine.high %v5056, %v5072
        %v5115 = vunpack.c.l.s4 1934713408
        %v5116 = vunpack.c.0.s8 %v5115
        %v5117 = vlaneseq
        %v5118 = vshrl.u32 %v5117, 7
        %v5119 = vsub.s32 %v5116, %v5118
        %v5120 = vrot.slane %v5112, %v5119
        %v5122 = vunpack.c.l.s4 1934713408
        %v5123 = vunpack.c.0.s8 %v5122
        %v5124 = vlaneseq
        %v5125 = vshrl.u32 %v5124, 7
        %v5126 = vsub.s32 %v5123, %v5125
        %v5127 = vrot.slane %v5113, %v5126
        %v5128 = vcombine.low %v5063, %v5079
        %v5129 = vcombine.high %v5063, %v5079
        %v5131 = vunpack.c.l.s4 1934713408
        %v5132 = vunpack.c.0.s8 %v5131
        %v5133 = vlaneseq
        %v5134 = vshrl.u32 %v5133, 7
        %v5135 = vsub.s32 %v5132, %v5134
        %v5136 = vrot.slane %v5128, %v5135
        %v5138 = vunpack.c.l.s4 1934713408
        %v5139 = vunpack.c.0.s8 %v5138
        %v5140 = vlaneseq
        %v5141 = vshrl.u32 %v5140, 7
        %v5142 = vsub.s32 %v5139, %v5141
        %v5143 = vrot.slane %v5129, %v5142
        %v5144 = vcombine.low %v5088, %v5104
        %v5145 = vcombine.high %v5088, %v5104
        %v5147 = vunpack.c.l.s4 1934713408
        %v5148 = vunpack.c.0.s8 %v5147
        %v5149 = vlaneseq
        %v5150 = vshrl.u32 %v5149, 7
        %v5151 = vsub.s32 %v5148, %v5150
        %v5152 = vrot.slane %v5144, %v5151
        %v5154 = vunpack.c.l.s4 1934713408
        %v5155 = vunpack.c.0.s8 %v5154
        %v5156 = vlaneseq
        %v5157 = vshrl.u32 %v5156, 7
        %v5158 = vsub.s32 %v5155, %v5157
        %v5159 = vrot.slane %v5145, %v5158
        %v5160 = vcombine.low %v5095, %v5111
        %v5161 = vcombine.high %v5095, %v5111
        %v5163 = vunpack.c.l.s4 1934713408
        %v5164 = vunpack.c.0.s8 %v5163
        %v5165 = vlaneseq
        %v5166 = vshrl.u32 %v5165, 7
        %v5167 = vsub.s32 %v5164, %v5166
        %v5168 = vrot.slane %v5160, %v5167
        %v5170 = vunpack.c.l.s4 1934713408
        %v5171 = vunpack.c.0.s8 %v5170
        %v5172 = vlaneseq
        %v5173 = vshrl.u32 %v5172, 7
        %v5174 = vsub.s32 %v5171, %v5173
        %v5175 = vrot.slane %v5161, %v5174
        %v5176 = vcombine.low %v5120, %v5152
        %v5177 = vcombine.high %v5120, %v5152
        %v5178 = vcombine.low %v5127, %v5159
        %v5179 = vcombine.high %v5127, %v5159
        %v5180 = vcombine.low %v5136, %v5168
        %v5181 = vcombine.high %v5136, %v5168
        %v5182 = vcombine.low %v5143, %v5175
        %v5183 = vcombine.high %v5143, %v5175
        %5192 = vrot.lane.b32.xlu0 %v5176, 120
        %v5193 = vpop.permute.xlu0 %5192
        %5194 = vrot.lane.b32.xlu0 %v5177, 120
        %v5195 = vpop.permute.xlu0 %5194
        %5196 = vrot.lane.b32.xlu0 %v5178, 120
        %v5197 = vpop.permute.xlu0 %5196
        %5198 = vrot.lane.b32.xlu0 %v5179, 120
        %v5199 = vpop.permute.xlu0 %5198
        %5200 = vrot.lane.b32.xlu0 %v5180, 120
        %v5201 = vpop.permute.xlu0 %5200
        %5202 = vrot.lane.b32.xlu0 %v5181, 120
        %v5203 = vpop.permute.xlu0 %5202
        %5204 = vrot.lane.b32.xlu0 %v5182, 120
        %v5205 = vpop.permute.xlu0 %5204
        %5206 = vrot.lane.b32.xlu0 %v5183, 120
        %v5207 = vpop.permute.xlu0 %5206
        %v5216 = vmax.f32 %v5176, %v5193
        %v5217 = vmax.f32 %v5177, %v5195
        %v5218 = vmax.f32 %v5178, %v5197
        %v5219 = vmax.f32 %v5179, %v5199
        %v5220 = vmax.f32 %v5180, %v5201
        %v5221 = vmax.f32 %v5181, %v5203
        %v5222 = vmax.f32 %v5182, %v5205
        %v5223 = vmax.f32 %v5183, %v5207
        %v5224 = vcombine.low %v5216, %v5218
        %v5225 = vcombine.high %v5216, %v5218
        %v5227 = vunpack.c.l.s4 1983009808
        %v5228 = vunpack.c.0.s8 %v5227
        %v5229 = vlaneseq
        %v5230 = vshrl.u32 %v5229, 7
        %v5231 = vsub.s32 %v5228, %v5230
        %v5232 = vrot.slane %v5224, %v5231
        %v5234 = vunpack.c.l.s4 1983009808
        %v5235 = vunpack.c.0.s8 %v5234
        %v5236 = vlaneseq
        %v5237 = vshrl.u32 %v5236, 7
        %v5238 = vsub.s32 %v5235, %v5237
        %v5239 = vrot.slane %v5225, %v5238
        %v5240 = vcombine.low %v5217, %v5219
        %v5241 = vcombine.high %v5217, %v5219
        %v5243 = vunpack.c.l.s4 1983009808
        %v5244 = vunpack.c.0.s8 %v5243
        %v5245 = vlaneseq
        %v5246 = vshrl.u32 %v5245, 7
        %v5247 = vsub.s32 %v5244, %v5246
        %v5248 = vrot.slane %v5240, %v5247
        %v5250 = vunpack.c.l.s4 1983009808
        %v5251 = vunpack.c.0.s8 %v5250
        %v5252 = vlaneseq
        %v5253 = vshrl.u32 %v5252, 7
        %v5254 = vsub.s32 %v5251, %v5253
        %v5255 = vrot.slane %v5241, %v5254
        %v5256 = vcombine.low %v5220, %v5222
        %v5257 = vcombine.high %v5220, %v5222
        %v5259 = vunpack.c.l.s4 1983009808
        %v5260 = vunpack.c.0.s8 %v5259
        %v5261 = vlaneseq
        %v5262 = vshrl.u32 %v5261, 7
        %v5263 = vsub.s32 %v5260, %v5262
        %v5264 = vrot.slane %v5256, %v5263
        %v5266 = vunpack.c.l.s4 1983009808
        %v5267 = vunpack.c.0.s8 %v5266
        %v5268 = vlaneseq
        %v5269 = vshrl.u32 %v5268, 7
        %v5270 = vsub.s32 %v5267, %v5269
        %v5271 = vrot.slane %v5257, %v5270
        %v5272 = vcombine.low %v5221, %v5223
        %v5273 = vcombine.high %v5221, %v5223
        %v5275 = vunpack.c.l.s4 1983009808
        %v5276 = vunpack.c.0.s8 %v5275
        %v5277 = vlaneseq
        %v5278 = vshrl.u32 %v5277, 7
        %v5279 = vsub.s32 %v5276, %v5278
        %v5280 = vrot.slane %v5272, %v5279
        %v5282 = vunpack.c.l.s4 1983009808
        %v5283 = vunpack.c.0.s8 %v5282
        %v5284 = vlaneseq
        %v5285 = vshrl.u32 %v5284, 7
        %v5286 = vsub.s32 %v5283, %v5285
        %v5287 = vrot.slane %v5273, %v5286
        %v5288 = vcombine.low %v5232, %v5248
        %v5289 = vcombine.high %v5232, %v5248
        %v5291 = vunpack.c.l.s4 1934713408
        %v5292 = vunpack.c.0.s8 %v5291
        %v5293 = vlaneseq
        %v5294 = vshrl.u32 %v5293, 7
        %v5295 = vsub.s32 %v5292, %v5294
        %v5296 = vrot.slane %v5288, %v5295
        %v5298 = vunpack.c.l.s4 1934713408
        %v5299 = vunpack.c.0.s8 %v5298
        %v5300 = vlaneseq
        %v5301 = vshrl.u32 %v5300, 7
        %v5302 = vsub.s32 %v5299, %v5301
        %v5303 = vrot.slane %v5289, %v5302
        %v5304 = vcombine.low %v5239, %v5255
        %v5305 = vcombine.high %v5239, %v5255
        %v5307 = vunpack.c.l.s4 1934713408
        %v5308 = vunpack.c.0.s8 %v5307
        %v5309 = vlaneseq
        %v5310 = vshrl.u32 %v5309, 7
        %v5311 = vsub.s32 %v5308, %v5310
        %v5312 = vrot.slane %v5304, %v5311
        %v5314 = vunpack.c.l.s4 1934713408
        %v5315 = vunpack.c.0.s8 %v5314
        %v5316 = vlaneseq
        %v5317 = vshrl.u32 %v5316, 7
        %v5318 = vsub.s32 %v5315, %v5317
        %v5319 = vrot.slane %v5305, %v5318
        %v5320 = vcombine.low %v5264, %v5280
        %v5321 = vcombine.high %v5264, %v5280
        %v5323 = vunpack.c.l.s4 1934713408
        %v5324 = vunpack.c.0.s8 %v5323
        %v5325 = vlaneseq
        %v5326 = vshrl.u32 %v5325, 7
        %v5327 = vsub.s32 %v5324, %v5326
        %v5328 = vrot.slane %v5320, %v5327
        %v5330 = vunpack.c.l.s4 1934713408
        %v5331 = vunpack.c.0.s8 %v5330
        %v5332 = vlaneseq
        %v5333 = vshrl.u32 %v5332, 7
        %v5334 = vsub.s32 %v5331, %v5333
        %v5335 = vrot.slane %v5321, %v5334
        %v5336 = vcombine.low %v5271, %v5287
        %v5337 = vcombine.high %v5271, %v5287
        %v5339 = vunpack.c.l.s4 1934713408
        %v5340 = vunpack.c.0.s8 %v5339
        %v5341 = vlaneseq
        %v5342 = vshrl.u32 %v5341, 7
        %v5343 = vsub.s32 %v5340, %v5342
        %v5344 = vrot.slane %v5336, %v5343
        %v5346 = vunpack.c.l.s4 1934713408
        %v5347 = vunpack.c.0.s8 %v5346
        %v5348 = vlaneseq
        %v5349 = vshrl.u32 %v5348, 7
        %v5350 = vsub.s32 %v5347, %v5349
        %v5351 = vrot.slane %v5337, %v5350
        %v5352 = vcombine.low %v5296, %v5328
        %v5353 = vcombine.high %v5296, %v5328
        %v5354 = vcombine.low %v5303, %v5335
        %v5355 = vcombine.high %v5303, %v5335
        %v5356 = vcombine.low %v5312, %v5344
        %v5357 = vcombine.high %v5312, %v5344
        %v5358 = vcombine.low %v5319, %v5351
        %v5359 = vcombine.high %v5319, %v5351
        %5361 = vrot.lane.b32.xlu0 %v5353, 8
        %v5362 = vpop.permute.xlu0 %5361
        %5365 = vrot.lane.b32.xlu0 %v5354, 16
        %v5366 = vpop.permute.xlu0 %5365
        %5369 = vrot.lane.b32.xlu0 %v5355, 24
        %v5370 = vpop.permute.xlu0 %5369
        %5373 = vrot.lane.b32.xlu0 %v5356, 32
        %v5374 = vpop.permute.xlu0 %5373
        %5377 = vrot.lane.b32.xlu0 %v5357, 40
        %v5378 = vpop.permute.xlu0 %5377
        %5381 = vrot.lane.b32.xlu0 %v5358, 48
        %v5382 = vpop.permute.xlu0 %5381
        %5385 = vrot.lane.b32.xlu0 %v5359, 56
        %v5386 = vpop.permute.xlu0 %5385
        %vm5388 = vcmask 64512
        %v5389 = vsel %vm5388, %v5352, %v5362
        %vm5390 = vcmask 130048
        %v5391 = vsel %vm5390, %v5389, %v5366
        %vm5392 = vcmask 195584
        %v5393 = vsel %vm5392, %v5391, %v5370
        %vm5394 = vcmask 261120
        %v5395 = vsel %vm5394, %v5393, %v5374
        %vm5396 = vcmask 326656
        %v5397 = vsel %vm5396, %v5395, %v5378
        %vm5398 = vcmask 392192
        %v5399 = vsel %vm5398, %v5397, %v5382
        %vm5400 = vcmask 457728
        %v5401 = vsel %vm5400, %v5399, %v5386
        %vm5402 = vcmask 523264
        %5403 = vst.msk [vmem:[%s247] sm:$0xff] %vm5402, %v5401
        %s5404 = sand.u32 %s122, 1
        %s5405 = scalar_lea.sflag [#allocation6], %s5404
        %s5406 = sand.u32 %s122, 1
        %s5407 = smul.addr %s5406, 8
        %s5408 = scalar_lea.vmem [#allocation9], %s5407
        %s5409 = sand.u32 %s148, 1
        %s5410 = scalar_lea.sflag [#allocation11], %s5409
        %s5411 = sand.u32 %s148, 1
        %s5412 = smul.addr %s5411, 16
        %s5413 = scalar_lea.vmem [#allocation10], %s5412
        // Predicated region
        $region45: #{tpu_custom_call.1} parent=35 // pred_check
          %p5414 = pneg %p132
        $region46: #{tpu_custom_call.1} parent=35 // pred_check_branch
          %5416 = sbr.rel (%p5414) target = $region48
        $region47: #{tpu_custom_call.1} parent=35 // pred_region
          %s5418 = ssub.s32 128, 128
          %5419 = vsyncadd %s5405, %s5418
          %s5420 = smul.addr %s25, 128
          %s5421 = scalar_lea.hbm %s4, %s5420
          %s5423 = sshll.u32 %s5408, 4
          %s5424 = int_to_ptr.vmem [resolvable:$true] %s5423
          %5426 = dma.vmem_to_hbm [thread:$0]  %s5424, 128, %s5421, %s5405
        $region48: #{tpu_custom_call.1} parent=35 // pred_fallthru
          _
        // Predicated region
        $region49: #{tpu_custom_call.1} parent=35 // pred_check
          %p5427 = pneg %p158
        $region50: #{tpu_custom_call.1} parent=35 // pred_check_branch
          %5429 = sbr.rel (%p5427) target = $region52
        $region51: #{tpu_custom_call.1} parent=35 // pred_region
          %s5431 = ssub.s32 256, 256
          %5432 = vsyncadd %s5410, %s5431
          %s5433 = smul.addr %s25, 2
          %s5434 = smul.addr %s5433, 128
          %s5435 = scalar_lea.hbm %s5, %s5434
          %s5437 = sshll.u32 %s5413, 4
          %s5438 = int_to_ptr.vmem [resolvable:$true] %s5437
          %5440 = dma.vmem_to_hbm [thread:$0]  %s5438, 256, %s5435, %s5410
        $region52: #{tpu_custom_call.1} parent=35 // pred_fallthru
          _
      $region36: #{tpu_custom_call.1} parent=5 // pred_fallthru
        _
      %p5441 = scmp.le.s32.totalorder 2, %s20
      // Predicated region
      $region53: #{tpu_custom_call.1} parent=5 // pred_check
        %p5442 = pneg %p5441
      $region54: #{tpu_custom_call.1} parent=5 // pred_check_branch
        %5444 = sbr.rel (%p5442) target = $region56
      $region55: #{tpu_custom_call.1} parent=5 // pred_region
        %s5445 = ssub.s32 %s20, 2
        // Predicated region
        $region57: #{tpu_custom_call.1} parent=55 // pred_check
          %p5446 = pneg %p138
        $region58: #{tpu_custom_call.1} parent=55 // pred_check_branch
          %5448 = sbr.rel (%p5446) target = $region60
        $region59: #{tpu_custom_call.1} parent=55 // pred_region
          %s5449 = sand.u32 %s123, 1
          %s5450 = scalar_lea.sflag [#allocation6], %s5449
          %s5451 = sand.u32 %s123, 1
          %s5452 = smul.addr %s5451, 8
          %s5453 = scalar_lea.vmem [#allocation9], %s5452
          %5454 = dma.done %s5450, 128
        $region60: #{tpu_custom_call.1} parent=55 // pred_fallthru
          _
        // Predicated region
        $region61: #{tpu_custom_call.1} parent=55 // pred_check
          %p5455 = pneg %p164
        $region62: #{tpu_custom_call.1} parent=55 // pred_check_branch
          %5457 = sbr.rel (%p5455) target = $region64
        $region63: #{tpu_custom_call.1} parent=55 // pred_region
          %s5458 = sand.u32 %s149, 1
          %s5459 = scalar_lea.sflag [#allocation11], %s5458
          %s5460 = sand.u32 %s149, 1
          %s5461 = smul.addr %s5460, 16
          %s5462 = scalar_lea.vmem [#allocation10], %s5461
          %5463 = dma.done %s5459, 256
        $region64: #{tpu_custom_call.1} parent=55 // pred_fallthru
          _
      $region56: #{tpu_custom_call.1} parent=5 // pred_fallthru
        _
    $region6: #{tpu_custom_call.1} parent=1 // loop_footer
      %s24 = sadd.s32 1, %s20
    $region7: #{tpu_custom_call.1} parent=1 // loop_footer_branch
      %19 = sbr.rel target = $region3
    $region8: #{tpu_custom_call.1} parent=1 // loop_exit
      _
    %5464 = vsyncpa [#allocation5], 1
    %s5465 = scalar_lea.sflag [#allocation5], 1
    %5466 = vsyncpa %s5465, 1
    %5467 = vsyncpa [#allocation8], 1
    %5468 = vsyncpa [#allocation6], 1
    %s5469 = scalar_lea.sflag [#allocation6], 1
    %5470 = vsyncpa %s5469, 1
    %5471 = vsyncpa [#allocation11], 1
    %s5472 = scalar_lea.sflag [#allocation11], 1
    %5473 = vsyncpa %s5472, 1

</llo_original>
